<compile_context>
chip_gen: v6e
topology: v6e:2x2x1
jax: 0.10.0
libtpu: 0.0.40
codegen_flags: <defaults>
</compile_context>

<pallas_src>
import jax
import jax.numpy as jnp
from jax.experimental import pallas as pl
from jax.experimental.pallas import tpu as pltpu

NEG_INF = -1e30     # causal-mask fill value (softmax weight -> 0)
LN_EPS = 1e-5
MAX_VOCAB_TILE = 512   # lane-dense logits tile (multiple of 128)
DFF_CHUNK = 512        # FFN hidden-dim chunk

# rows of the packed (NUM_DVEC, D) bias / LayerNorm parameter bundle
CA_BQ, SA_BO, CA_BO, LN1_G, LN1_B, LN2_G, LN2_B, LN3_G, LN3_B, FF_B2 = range(10)
NUM_DVEC = 10


def _round_up(x, m):
    return (x + m - 1) // m * m


def _pick_vmem_limit():
    # Generation-aware scoped-VMEM limit: ~75% of physical, capped at 100 MiB.
    # v5e/v6e (128 MiB) -> 96 MiB; v7x (64 MiB) -> 48 MiB.
    try:
        cap = pltpu.get_tpu_info().vmem_capacity_bytes
    except Exception:
        cap = 64 * 1024 * 1024
    return max(32 * 1024 * 1024, min(int(cap * 3 // 4), 100 * 1024 * 1024))


# ----------------------------------------------------------------------------
# Pallas kernel: decoder layer (vocab tile j == 0) + vocab-tiled fc_out (all j)
# ----------------------------------------------------------------------------
def decoder_kernel(x_ref, mem_ref,
                   sa_wqkv, sa_wo, ca_wq, ca_wkv, ca_wo,
                   sa_bqkv, ca_bkv, dvec_ref,
                   w1_ref, b1_ref, w2_ref,
                   fc_w_ref, fc_b_ref,
                   out_ref, h_ref):
    Bt, T, D = x_ref.shape          # Bt = batch elements in this batch tile
    S = mem_ref.shape[1]
    N = Bt * T
    scale = 1.0 / (float(D) ** 0.5)
    bf = jnp.bfloat16

    def dv(i):                       # packed (1, D) f32 vector, static row
        return dvec_ref[i:i + 1, :]

    def proj(a_flat, w_r, b_val):
        return (jnp.dot(a_flat.astype(bf), w_r[...],
                        preferred_element_type=jnp.float32) + b_val)

    def layernorm(v, g, b):
        mu = jnp.mean(v, axis=-1, keepdims=True)
        var = jnp.mean((v - mu) ** 2, axis=-1, keepdims=True)
        return (v - mu) * jax.lax.rsqrt(var + LN_EPS) * g + b

    def softmax_attention(q, k, v, n_kv, causal):
        # q: (N, D) f32; k, v: (Bt * n_kv, D) f32
        qb = (q * scale).reshape(Bt, T, D).astype(bf)   # fold 1/sqrt(d) into q
        kb = k.reshape(Bt, n_kv, D).astype(bf)
        vb = v.reshape(Bt, n_kv, D).astype(bf)
        s = jnp.einsum('bqd,bkd->bqk', qb, kb,
                       preferred_element_type=jnp.float32)        # (Bt, T, n_kv)
        if causal:
            row = jax.lax.broadcasted_iota(jnp.int32, (Bt, T, n_kv), 1)
            col = jax.lax.broadcasted_iota(jnp.int32, (Bt, T, n_kv), 2)
            s = jnp.where(col <= row, s, NEG_INF)
        s = s - jnp.max(s, axis=-1, keepdims=True)
        p = jnp.exp(s)
        l = jnp.sum(p, axis=-1, keepdims=True)
        o = jnp.einsum('bqk,bkd->bqd', p.astype(bf), vb,
                       preferred_element_type=jnp.float32)
        o = o * pl.reciprocal(l, approx=True)          # softmax denom on EUP
        return o.reshape(N, D)

    @pl.when(pl.program_id(1) == 0)
    def _decoder_layer():
        x = x_ref[...].reshape(N, D)                   # (N, D)  f32
        mem = mem_ref[...].reshape(Bt * S, D)          # (Bt*S, D) f32

        # ---- masked self-attention (fused QKV projection) + add & norm ----
        qkv = proj(x, sa_wqkv, sa_bqkv[...])           # (N, 3D)
        sa = softmax_attention(qkv[:, :D], qkv[:, D:2 * D], qkv[:, 2 * D:],
                               T, causal=True)
        sa = proj(sa, sa_wo, dv(SA_BO))
        h = layernorm(x + sa, dv(LN1_G), dv(LN1_B))

        # ---- cross-attention over encoder memory (fused KV) + add & norm --
        q = proj(h, ca_wq, dv(CA_BQ))
        kv = proj(mem, ca_wkv, ca_bkv[...])            # (Bt*S, 2D)
        ca = softmax_attention(q, kv[:, :D], kv[:, D:], S, causal=False)
        ca = proj(ca, ca_wo, dv(CA_BO))
        h = layernorm(h + ca, dv(LN2_G), dv(LN2_B))

        # ---- feed-forward (ReLU), chunked over DFF + add & norm -----------
        DFF = w1_ref.shape[1]
        chunk = min(DFF_CHUNK, DFF)
        h_bf = h.astype(bf)
        ff = jnp.zeros((N, D), jnp.float32)
        # static trip count; avoids materializing the (N, DFF) f32 intermediate
        for c0 in range(0, DFF, chunk):
            c1 = min(c0 + chunk, DFF)
            hid = (jnp.dot(h_bf, w1_ref[:, c0:c1],
                           preferred_element_type=jnp.float32)
                   + b1_ref[:, c0:c1])
            ff = ff + jnp.dot(jnp.maximum(hid, 0.0).astype(bf),
                              w2_ref[c0:c1, :],
                              preferred_element_type=jnp.float32)
        ff = ff + dv(FF_B2)
        h = layernorm(h + ff, dv(LN3_G), dv(LN3_B))
        h_ref[...] = h.astype(bf)

    # every grid step: one lane-dense (N, VOCAB_TILE) tile of the logits
    out_ref[...] = (jnp.dot(h_ref[...], fc_w_ref[...],
                            preferred_element_type=jnp.float32) + fc_b_ref[...])


# ----------------------------------------------------------------------------
# Wrapper / glue
# ----------------------------------------------------------------------------
def embed_and_pos_encode(params, tgt):
    """Glue: nn.Embedding + PositionalEncoding (x*sqrt(d_model) + pe[:T])."""
    D = params['emb'].shape[1]
    T = tgt.shape[1]
    x = params['emb'][tgt] * jnp.sqrt(jnp.float32(D))
    return (x + params['pe'][:T][None, :, :]).astype(jnp.float32)


def transformer_decoder_forward(params, encoder_output, tgt, *, batch_tiles=2):
    """Teacher-forcing forward: logits (B, T, V)."""
    B, T = tgt.shape
    S = encoder_output.shape[1]
    D = params['emb'].shape[1]
    V = params['fc_w'].shape[1]
    bf = jnp.bfloat16

    # Lane-dense vocab tiling (adaptive tile, multiple of 128, <= 512).
    VT = min(MAX_VOCAB_TILE, _round_up(V, 128))
    V_pad = _round_up(V, VT)
    n_vtiles = V_pad // VT

    # Batch-tile grid axis (parallel -> both v7x TensorCores).
    n_btiles = batch_tiles if (B >= batch_tiles and B % batch_tiles == 0) else 1
    B_blk = B // n_btiles

    x = embed_and_pos_encode(params, tgt)              # (B, T, D) f32
    mem = encoder_output.astype(jnp.float32)           # (B, S, D) f32

    # Fused QKV / KV weights (bf16 MXU operands); biases / LN params stay f32.
    sa_wqkv = jnp.concatenate(
        [params['sa_wq'], params['sa_wk'], params['sa_wv']], axis=1).astype(bf)
    sa_bqkv = jnp.concatenate(
        [params['sa_bq'], params['sa_bk'], params['sa_bv']], axis=1)
    ca_wkv = jnp.concatenate([params['ca_wk'], params['ca_wv']], axis=1).astype(bf)
    ca_bkv = jnp.concatenate([params['ca_bk'], params['ca_bv']], axis=1)
    sa_wo = params['sa_wo'].astype(bf)
    ca_wq = params['ca_wq'].astype(bf)
    ca_wo = params['ca_wo'].astype(bf)
    w1 = params['w1'].astype(bf)
    w2 = params['w2'].astype(bf)
    b1 = params['b1']
    # pack the ten tiny (1, D) vectors into one input (order = CA_BQ..FF_B2)
    dvec = jnp.concatenate(
        [params['ca_bq'], params['sa_bo'], params['ca_bo'],
         params['ln1_g'], params['ln1_b'],
         params['ln2_g'], params['ln2_b'],
         params['ln3_g'], params['ln3_b'],
         params['b2']], axis=0)

    # Pad vocab dim -> unmasked lane-dense vst on the logits.
    fc_w = jnp.pad(params['fc_w'], ((0, 0), (0, V_pad - V))).astype(bf)
    fc_b = jnp.pad(params['fc_b'], ((0, 0), (0, V_pad - V)))

    def resident(shape):
        # grid-resident (constant index) block, single-buffered to save VMEM
        n = len(shape)
        return pl.BlockSpec(shape, lambda bi, j, _n=n: (0,) * _n,
                            pipeline_mode=pl.Buffered(1))

    in_specs = [
        pl.BlockSpec((B_blk, T, D), lambda bi, j: (bi, 0, 0)),   # x
        pl.BlockSpec((B_blk, S, D), lambda bi, j: (bi, 0, 0)),   # mem
        resident(sa_wqkv.shape), resident(sa_wo.shape),
        resident(ca_wq.shape), resident(ca_wkv.shape), resident(ca_wo.shape),
        resident(sa_bqkv.shape), resident(ca_bkv.shape), resident(dvec.shape),
        resident(w1.shape), resident(b1.shape), resident(w2.shape),
        pl.BlockSpec((D, VT), lambda bi, j: (0, j)),             # fc_w tile
        pl.BlockSpec((1, VT), lambda bi, j: (0, j)),             # fc_b tile
    ]

    out = pl.pallas_call(
        decoder_kernel,
        out_shape=jax.ShapeDtypeStruct((B * T, V_pad), jnp.float32),
        grid=(n_btiles, n_vtiles),
        in_specs=in_specs,
        out_specs=pl.BlockSpec((B_blk * T, VT), lambda bi, j: (bi, j)),
        scratch_shapes=[pltpu.VMEM((B_blk * T, D), jnp.bfloat16)],
        compiler_params=pltpu.CompilerParams(
            # batch-tile axis parallel (megacore); vocab axis MUST remain
            # "arbitrary": vocab tiles j > 0 reuse the h scratch written at j==0.
            dimension_semantics=("parallel", "arbitrary"),
            vmem_limit_bytes=_pick_vmem_limit(),
        ),
    )(x, mem, sa_wqkv, sa_wo, ca_wq, ca_wkv, ca_wo,
      sa_bqkv, ca_bkv, dvec, w1, b1, w2, fc_w, fc_b)

    return out.reshape(B, T, V_pad)[:, :, :V]


# TODO(synk): greedy autoregressive decode branch (tgt=None) is a host-side
# loop over growing sequences; not implemented as a kernel here.
# TODO(synk): dropout omitted (eval-mode assumption).


# ----------------------------------------------------------------------------
# Pure-JAX reference mirroring the kernel math (bf16 MXU operands, f32 accum)
# ----------------------------------------------------------------------------
def reference_forward(params, encoder_output, tgt):
    D = params['emb'].shape[1]
    bf = jnp.bfloat16
    scale = 1.0 / (float(D) ** 0.5)
    x = embed_and_pos_encode(params, tgt)
    mem = encoder_output.astype(jnp.float32)

    def proj(a, w, b):
        return jnp.dot(a.astype(bf), w.astype(bf),
                       preferred_element_type=jnp.float32) + b

    def ln(v, g, b):
        mu = v.mean(-1, keepdims=True)
        var = ((v - mu) ** 2).mean(-1, keepdims=True)
        return (v - mu) * jax.lax.rsqrt(var + LN_EPS) * g + b

    def mha(qin, kvin, pfx, causal):
        q = proj(qin, params[pfx + '_wq'], params[pfx + '_bq']) * scale
        k = proj(kvin, params[pfx + '_wk'], params[pfx + '_bk'])
        v = proj(kvin, params[pfx + '_wv'], params[pfx + '_bv'])
        s = jnp.einsum('bqd,bkd->bqk', q.astype(bf), k.astype(bf),
                       preferred_element_type=jnp.float32)
        if causal:
            tq, tk = s.shape[1], s.shape[2]
            row = jax.lax.broadcasted_iota(jnp.int32, (s.shape[0], tq, tk), 1)
            col = jax.lax.broadcasted_iota(jnp.int32, (s.shape[0], tq, tk), 2)
            s = jnp.where(col <= row, s, NEG_INF)
        s = s - s.max(-1, keepdims=True)
        p = jnp.exp(s)
        o = jnp.einsum('bqk,bkd->bqd', p.astype(bf), v.astype(bf),
                       preferred_element_type=jnp.float32)
        o = o / p.sum(-1, keepdims=True)
        return proj(o, params[pfx + '_wo'], params[pfx + '_bo'])

    h = ln(x + mha(x, x, 'sa', True), params['ln1_g'], params['ln1_b'])
    h = ln(h + mha(h, mem, 'ca', False), params['ln2_g'], params['ln2_b'])
    ff = jnp.maximum(proj(h, params['w1'], params['b1']), 0.0)
    ff = proj(ff, params['w2'], params['b2'])
    h = ln(h + ff, params['ln3_g'], params['ln3_b'])
    return proj(h, params['fc_w'], params['fc_b'])


# ----------------------------------------------------------------------------
# Deterministic parameter init (shapes per the module's __init__)
# ----------------------------------------------------------------------------
def init_params(key, D, V, dff, pe_len=64):
    keys = list(jax.random.split(key, 32))
    it = iter(keys)

    def nrm(shape, scale=0.1):
        return jax.random.normal(next(it), shape, jnp.float32) * scale

    p = {'emb': nrm((V, D), 0.5)}

    # PositionalEncoding buffer (sin/cos interleaved)
    pos = jnp.arange(pe_len, dtype=jnp.float32)[:, None]
    div = jnp.exp(jnp.arange(0, D, 2, dtype=jnp.float32) * (-jnp.log(10000.0) / D))
    pe = jnp.zeros((pe_len, D), jnp.float32)
    pe = pe.at[:, 0::2].set(jnp.sin(pos * div)).at[:, 1::2].set(jnp.cos(pos * div))
    p['pe'] = pe

    for pfx in ('sa', 'ca'):          # self-attn / cross-attn MultiheadAttention
        for n in ('wq', 'wk', 'wv', 'wo'):
            p[f'{pfx}_{n}'] = nrm((D, D))
        for n in ('bq', 'bk', 'bv', 'bo'):
            p[f'{pfx}_{n}'] = nrm((1, D), 0.01)
    for i in (1, 2, 3):               # LayerNorms
        p[f'ln{i}_g'] = jnp.ones((1, D), jnp.float32)
        p[f'ln{i}_b'] = jnp.zeros((1, D), jnp.float32)
    p['w1'] = nrm((D, dff))           # linear1
    p['b1'] = nrm((1, dff), 0.01)
    p['w2'] = nrm((dff, D))           # linear2
    p['b2'] = nrm((1, D), 0.01)
    p['fc_w'] = nrm((D, V))           # fc_out
    p['fc_b'] = nrm((1, V), 0.01)
    return p


if __name__ == "__main__":
    B, T, S = 2, 8, 8
    D = 32            # hidden_size / d_model
    V = 16            # len(output_dict)
    DFF = 2048        # nn.TransformerDecoderLayer default dim_feedforward

    key = jax.random.PRNGKey(0)
    kp, ke, kt = jax.random.split(key, 3)
    params = init_params(kp, D, V, DFF)
    encoder_output = jax.random.normal(ke, (B, S, D), jnp.float32)
    tgt = jax.random.randint(kt, (B, T), 0, V, dtype=jnp.int32)

    out = transformer_decoder_forward(params, encoder_output, tgt)
    out = jax.block_until_ready(out)

    ref = jax.block_until_ready(reference_forward(params, encoder_output, tgt))
    assert out.shape == (B, T, V), out.shape
    assert jnp.allclose(out, ref, atol=5e-3, rtol=5e-3), \
        f"max abs err = {jnp.max(jnp.abs(out - ref))}"
    print("KERNEL_OK")
</pallas_src>

<mosaic_0001>
module attributes {stable_mosaic.version = 11 : i64} {
  func.func @decoder_kernel(%arg0: i32, %arg1: i32, %arg2: memref<1x8x32xf32, #tpu.memory_space<vmem>>, %arg3: memref<1x8x32xf32, #tpu.memory_space<vmem>>, %arg4: memref<32x96xbf16, #tpu.memory_space<vmem>>, %arg5: memref<32x32xbf16, #tpu.memory_space<vmem>>, %arg6: memref<32x32xbf16, #tpu.memory_space<vmem>>, %arg7: memref<32x64xbf16, #tpu.memory_space<vmem>>, %arg8: memref<32x32xbf16, #tpu.memory_space<vmem>>, %arg9: memref<1x96xf32, #tpu.memory_space<vmem>>, %arg10: memref<1x64xf32, #tpu.memory_space<vmem>>, %arg11: memref<10x32xf32, #tpu.memory_space<vmem>>, %arg12: memref<32x2048xbf16, #tpu.memory_space<vmem>>, %arg13: memref<1x2048xf32, #tpu.memory_space<vmem>>, %arg14: memref<2048x32xbf16, #tpu.memory_space<vmem>>, %arg15: memref<32x128xbf16, #tpu.memory_space<vmem>>, %arg16: memref<1x128xf32, #tpu.memory_space<vmem>>, %arg17: memref<8x128xf32, #tpu.memory_space<vmem>>, %arg18: memref<8x32xbf16, #tpu.memory_space<vmem>>) attributes {dimension_semantics = [#tpu.dimension_semantics<parallel>, #tpu.dimension_semantics<arbitrary>], iteration_bounds = array<i64: 2, 1>, scalar_prefetch = 0 : i64, scratch_operands = 1 : i64, tpu.core_type = #tpu.core_type<tc>, window_params = [{transform_indices = @transform_0, window_bounds = array<i64: 1, 8, 32>}, {transform_indices = @transform_1, window_bounds = array<i64: 1, 8, 32>}, {pipeline_mode = #tpu.pipeline_mode<synchronous>, transform_indices = @transform_2, window_bounds = array<i64: 32, 96>}, {pipeline_mode = #tpu.pipeline_mode<synchronous>, transform_indices = @transform_3, window_bounds = array<i64: 32, 32>}, {pipeline_mode = #tpu.pipeline_mode<synchronous>, transform_indices = @transform_4, window_bounds = array<i64: 32, 32>}, {pipeline_mode = #tpu.pipeline_mode<synchronous>, transform_indices = @transform_5, window_bounds = array<i64: 32, 64>}, {pipeline_mode = #tpu.pipeline_mode<synchronous>, transform_indices = @transform_6, window_bounds = array<i64: 32, 32>}, {pipeline_mode = #tpu.pipeline_mode<synchronous>, transform_indices = @transform_7, window_bounds = array<i64: 1, 96>}, {pipeline_mode = #tpu.pipeline_mode<synchronous>, transform_indices = @transform_8, window_bounds = array<i64: 1, 64>}, {pipeline_mode = #tpu.pipeline_mode<synchronous>, transform_indices = @transform_9, window_bounds = array<i64: 10, 32>}, {pipeline_mode = #tpu.pipeline_mode<synchronous>, transform_indices = @transform_10, window_bounds = array<i64: 32, 2048>}, {pipeline_mode = #tpu.pipeline_mode<synchronous>, transform_indices = @transform_11, window_bounds = array<i64: 1, 2048>}, {pipeline_mode = #tpu.pipeline_mode<synchronous>, transform_indices = @transform_12, window_bounds = array<i64: 2048, 32>}, {transform_indices = @transform_13, window_bounds = array<i64: 32, 128>}, {transform_indices = @transform_14, window_bounds = array<i64: 1, 128>}, {transform_indices = @transform_15, window_bounds = array<i64: 8, 128>}]} {
    %c0_i32 = arith.constant 0 : i32
    %0 = arith.cmpi eq, %arg1, %c0_i32 : i32
    %1 = arith.extui %0 : i1 to i32
    %c0_i32_0 = arith.constant 0 : i32
    %2 = arith.cmpi ne, %1, %c0_i32_0 : i32
    scf.if %2 {
      %c0_8 = arith.constant 0 : index
      %c0_9 = arith.constant 0 : index
      %c0_10 = arith.constant 0 : index
      %10 = vector.load %arg2[%c0_8, %c0_9, %c0_10] : memref<1x8x32xf32, #tpu.memory_space<vmem>>, vector<1x8x32xf32>
      %11 = vector.shape_cast %10 : vector<1x8x32xf32> to vector<8x32xf32>
      %c0_11 = arith.constant 0 : index
      %c0_12 = arith.constant 0 : index
      %c0_13 = arith.constant 0 : index
      %12 = vector.load %arg3[%c0_11, %c0_12, %c0_13] : memref<1x8x32xf32, #tpu.memory_space<vmem>>, vector<1x8x32xf32>
      %13 = vector.shape_cast %12 : vector<1x8x32xf32> to vector<8x32xf32>
      %c0_14 = arith.constant 0 : index
      %c0_15 = arith.constant 0 : index
      %14 = vector.load %arg9[%c0_14, %c0_15] : memref<1x96xf32, #tpu.memory_space<vmem>>, vector<1x96xf32>
      %15 = arith.truncf %11 : vector<8x32xf32> to vector<8x32xbf16>
      %c0_16 = arith.constant 0 : index
      %c0_17 = arith.constant 0 : index
      %16 = vector.load %arg4[%c0_16, %c0_17] : memref<32x96xbf16, #tpu.memory_space<vmem>>, vector<32x96xbf16>
      %cst_18 = arith.constant dense<0.000000e+00> : vector<8x96xf32>
      %17 = tpu.matmul %15, %16, %cst_18 {dimension_numbers = #tpu.dot_dimension_numbers<[1], [0], [0], [1], [0, 0, 1, 1], [], []>} : vector<8x32xbf16>, vector<32x96xbf16>, vector<8x96xf32> -> vector<8x96xf32>
      %18 = vector.broadcast %14 : vector<1x96xf32> to vector<8x96xf32>
      %19 = arith.addf %17, %18 : vector<8x96xf32>
      %20 = vector.extract_strided_slice %19 {offsets = [0, 0], sizes = [8, 32], strides = [1, 1]} : vector<8x96xf32> to vector<8x32xf32>
      %21 = vector.extract_strided_slice %19 {offsets = [0, 32], sizes = [8, 32], strides = [1, 1]} : vector<8x96xf32> to vector<8x32xf32>
      %22 = vector.extract_strided_slice %19 {offsets = [0, 64], sizes = [8, 32], strides = [1, 1]} : vector<8x96xf32> to vector<8x32xf32>
      %cst_19 = arith.constant 0.176776692 : f32
      %23 = vector.broadcast %cst_19 : f32 to vector<8x32xf32>
      %24 = arith.mulf %20, %23 : vector<8x32xf32>
      %25 = vector.shape_cast %24 : vector<8x32xf32> to vector<1x8x32xf32>
      %26 = arith.truncf %25 : vector<1x8x32xf32> to vector<1x8x32xbf16>
      %27 = vector.shape_cast %21 : vector<8x32xf32> to vector<1x8x32xf32>
      %28 = arith.truncf %27 : vector<1x8x32xf32> to vector<1x8x32xbf16>
      %29 = vector.shape_cast %22 : vector<8x32xf32> to vector<1x8x32xf32>
      %30 = arith.truncf %29 : vector<1x8x32xf32> to vector<1x8x32xbf16>
      "tpu.trace_start"() <{level = 10 : i32, message = "bqd,bkd->bqk"}> : () -> ()
      %cst_20 = arith.constant dense<0.000000e+00> : vector<1x8x8xf32>
      %31 = tpu.matmul %26, %28, %cst_20 {dimension_numbers = #tpu.dot_dimension_numbers<[2], [2], [1], [1], [0, 0, 0, 1, 1, 1], [0], [0]>} : vector<1x8x32xbf16>, vector<1x8x32xbf16>, vector<1x8x8xf32> -> vector<1x8x8xf32>
      "tpu.trace_stop"() : () -> ()
      %32 = tpu.iota {dimensions = array<i32: 1>} : vector<1x8x8xi32>
      %33 = tpu.iota {dimensions = array<i32: 2>} : vector<1x8x8xi32>
      %34 = arith.cmpi sle, %33, %32 : vector<1x8x8xi32>
      %cst_21 = arith.constant -1.000000e+30 : f32
      %35 = vector.broadcast %cst_21 : f32 to vector<1x8x8xf32>
      %36 = arith.select %34, %31, %35 : vector<1x8x8xi1>, vector<1x8x8xf32>
      %cst_22 = arith.constant dense<0xFF800000> : vector<1x8xf32>
      %37 = vector.multi_reduction <maximumf>, %36, %cst_22 [2] : vector<1x8x8xf32> to vector<1x8xf32>
      %38 = vector.shape_cast %37 : vector<1x8xf32> to vector<1x8x1xf32>
      %39 = vector.broadcast %38 : vector<1x8x1xf32> to vector<1x8x8xf32>
      %40 = arith.subf %36, %39 : vector<1x8x8xf32>
      %41 = math.exp %40 : vector<1x8x8xf32>
      %cst_23 = arith.constant dense<0.000000e+00> : vector<1x8xf32>
      %42 = vector.multi_reduction <add>, %41, %cst_23 [2] : vector<1x8x8xf32> to vector<1x8xf32>
      %43 = vector.shape_cast %42 : vector<1x8xf32> to vector<1x8x1xf32>
      %44 = arith.truncf %41 : vector<1x8x8xf32> to vector<1x8x8xbf16>
      "tpu.trace_start"() <{level = 10 : i32, message = "bqk,bkd->bqd"}> : () -> ()
      %cst_24 = arith.constant dense<0.000000e+00> : vector<1x8x32xf32>
      %45 = tpu.matmul %44, %30, %cst_24 {dimension_numbers = #tpu.dot_dimension_numbers<[2], [1], [1], [2], [0, 0, 0, 1, 1, 2], [0], [0]>} : vector<1x8x8xbf16>, vector<1x8x32xbf16>, vector<1x8x32xf32> -> vector<1x8x32xf32>
      "tpu.trace_stop"() : () -> ()
      %46 = tpu.reciprocal %43 {approx = true} : vector<1x8x1xf32> -> vector<1x8x1xf32>
      %47 = vector.broadcast %46 : vector<1x8x1xf32> to vector<1x8x32xf32>
      %48 = arith.mulf %45, %47 : vector<1x8x32xf32>
      %49 = vector.shape_cast %48 : vector<1x8x32xf32> to vector<8x32xf32>
      %c1 = arith.constant 1 : index
      %c0_25 = arith.constant 0 : index
      %50 = vector.load %arg11[%c1, %c0_25] : memref<10x32xf32, #tpu.memory_space<vmem>>, vector<1x32xf32>
      %51 = arith.truncf %49 : vector<8x32xf32> to vector<8x32xbf16>
      %c0_26 = arith.constant 0 : index
      %c0_27 = arith.constant 0 : index
      %52 = vector.load %arg5[%c0_26, %c0_27] : memref<32x32xbf16, #tpu.memory_space<vmem>>, vector<32x32xbf16>
      %cst_28 = arith.constant dense<0.000000e+00> : vector<8x32xf32>
      %53 = tpu.matmul %51, %52, %cst_28 {dimension_numbers = #tpu.dot_dimension_numbers<[1], [0], [0], [1], [0, 0, 1, 1], [], []>} : vector<8x32xbf16>, vector<32x32xbf16>, vector<8x32xf32> -> vector<8x32xf32>
      %54 = vector.broadcast %50 : vector<1x32xf32> to vector<8x32xf32>
      %55 = arith.addf %53, %54 : vector<8x32xf32>
      %56 = arith.addf %11, %55 : vector<8x32xf32>
      %c3 = arith.constant 3 : index
      %c0_29 = arith.constant 0 : index
      %57 = vector.load %arg11[%c3, %c0_29] : memref<10x32xf32, #tpu.memory_space<vmem>>, vector<1x32xf32>
      %c4 = arith.constant 4 : index
      %c0_30 = arith.constant 0 : index
      %58 = vector.load %arg11[%c4, %c0_30] : memref<10x32xf32, #tpu.memory_space<vmem>>, vector<1x32xf32>
      %cst_31 = arith.constant dense<0.000000e+00> : vector<8xf32>
      %59 = vector.multi_reduction <add>, %56, %cst_31 [1] : vector<8x32xf32> to vector<8xf32>
      %60 = vector.shape_cast %59 : vector<8xf32> to vector<8x1xf32>
      %cst_32 = arith.constant 3.200000e+01 : f32
      %61 = vector.broadcast %cst_32 : f32 to vector<8x1xf32>
      %62 = arith.divf %60, %61 : vector<8x1xf32>
      %63 = vector.broadcast %62 : vector<8x1xf32> to vector<8x32xf32>
      %64 = arith.subf %56, %63 : vector<8x32xf32>
      %65 = arith.mulf %64, %64 : vector<8x32xf32>
      %cst_33 = arith.constant dense<0.000000e+00> : vector<8xf32>
      %66 = vector.multi_reduction <add>, %65, %cst_33 [1] : vector<8x32xf32> to vector<8xf32>
      %67 = vector.shape_cast %66 : vector<8xf32> to vector<8x1xf32>
      %cst_34 = arith.constant 3.200000e+01 : f32
      %68 = vector.broadcast %cst_34 : f32 to vector<8x1xf32>
      %69 = arith.divf %67, %68 : vector<8x1xf32>
      %70 = vector.broadcast %62 : vector<8x1xf32> to vector<8x32xf32>
      %71 = arith.subf %56, %70 : vector<8x32xf32>
      %cst_35 = arith.constant 9.99999974E-6 : f32
      %72 = vector.broadcast %cst_35 : f32 to vector<8x1xf32>
      %73 = arith.addf %69, %72 : vector<8x1xf32>
      %74 = math.rsqrt %73 : vector<8x1xf32>
      %75 = vector.broadcast %74 : vector<8x1xf32> to vector<8x32xf32>
      %76 = arith.mulf %71, %75 : vector<8x32xf32>
      %77 = vector.broadcast %57 : vector<1x32xf32> to vector<8x32xf32>
      %78 = arith.mulf %76, %77 : vector<8x32xf32>
      %79 = vector.broadcast %58 : vector<1x32xf32> to vector<8x32xf32>
      %80 = arith.addf %78, %79 : vector<8x32xf32>
      %c0_36 = arith.constant 0 : index
      %c0_37 = arith.constant 0 : index
      %81 = vector.load %arg11[%c0_36, %c0_37] : memref<10x32xf32, #tpu.memory_space<vmem>>, vector<1x32xf32>
      %82 = arith.truncf %80 : vector<8x32xf32> to vector<8x32xbf16>
      %c0_38 = arith.constant 0 : index
      %c0_39 = arith.constant 0 : index
      %83 = vector.load %arg6[%c0_38, %c0_39] : memref<32x32xbf16, #tpu.memory_space<vmem>>, vector<32x32xbf16>
      %cst_40 = arith.constant dense<0.000000e+00> : vector<8x32xf32>
      %84 = tpu.matmul %82, %83, %cst_40 {dimension_numbers = #tpu.dot_dimension_numbers<[1], [0], [0], [1], [0, 0, 1, 1], [], []>} : vector<8x32xbf16>, vector<32x32xbf16>, vector<8x32xf32> -> vector<8x32xf32>
      %85 = vector.broadcast %81 : vector<1x32xf32> to vector<8x32xf32>
      %86 = arith.addf %84, %85 : vector<8x32xf32>
      %c0_41 = arith.constant 0 : index
      %c0_42 = arith.constant 0 : index
      %87 = vector.load %arg10[%c0_41, %c0_42] : memref<1x64xf32, #tpu.memory_space<vmem>>, vector<1x64xf32>
      %88 = arith.truncf %13 : vector<8x32xf32> to vector<8x32xbf16>
      %c0_43 = arith.constant 0 : index
      %c0_44 = arith.constant 0 : index
      %89 = vector.load %arg7[%c0_43, %c0_44] : memref<32x64xbf16, #tpu.memory_space<vmem>>, vector<32x64xbf16>
      %cst_45 = arith.constant dense<0.000000e+00> : vector<8x64xf32>
      %90 = tpu.matmul %88, %89, %cst_45 {dimension_numbers = #tpu.dot_dimension_numbers<[1], [0], [0], [1], [0, 0, 1, 1], [], []>} : vector<8x32xbf16>, vector<32x64xbf16>, vector<8x64xf32> -> vector<8x64xf32>
      %91 = vector.broadcast %87 : vector<1x64xf32> to vector<8x64xf32>
      %92 = arith.addf %90, %91 : vector<8x64xf32>
      %93 = vector.extract_strided_slice %92 {offsets = [0, 0], sizes = [8, 32], strides = [1, 1]} : vector<8x64xf32> to vector<8x32xf32>
      %94 = vector.extract_strided_slice %92 {offsets = [0, 32], sizes = [8, 32], strides = [1, 1]} : vector<8x64xf32> to vector<8x32xf32>
      %cst_46 = arith.constant 0.176776692 : f32
      %95 = vector.broadcast %cst_46 : f32 to vector<8x32xf32>
      %96 = arith.mulf %86, %95 : vector<8x32xf32>
      %97 = vector.shape_cast %96 : vector<8x32xf32> to vector<1x8x32xf32>
      %98 = arith.truncf %97 : vector<1x8x32xf32> to vector<1x8x32xbf16>
      %99 = vector.shape_cast %93 : vector<8x32xf32> to vector<1x8x32xf32>
      %100 = arith.truncf %99 : vector<1x8x32xf32> to vector<1x8x32xbf16>
      %101 = vector.shape_cast %94 : vector<8x32xf32> to vector<1x8x32xf32>
      %102 = arith.truncf %101 : vector<1x8x32xf32> to vector<1x8x32xbf16>
      "tpu.trace_start"() <{level = 10 : i32, message = "bqd,bkd->bqk"}> : () -> ()
      %cst_47 = arith.constant dense<0.000000e+00> : vector<1x8x8xf32>
      %103 = tpu.matmul %98, %100, %cst_47 {dimension_numbers = #tpu.dot_dimension_numbers<[2], [2], [1], [1], [0, 0, 0, 1, 1, 1], [0], [0]>} : vector<1x8x32xbf16>, vector<1x8x32xbf16>, vector<1x8x8xf32> -> vector<1x8x8xf32>
      "tpu.trace_stop"() : () -> ()
      %cst_48 = arith.constant dense<0xFF800000> : vector<1x8xf32>
      %104 = vector.multi_reduction <maximumf>, %103, %cst_48 [2] : vector<1x8x8xf32> to vector<1x8xf32>
      %105 = vector.shape_cast %104 : vector<1x8xf32> to vector<1x8x1xf32>
      %106 = vector.broadcast %105 : vector<1x8x1xf32> to vector<1x8x8xf32>
      %107 = arith.subf %103, %106 : vector<1x8x8xf32>
      %108 = math.exp %107 : vector<1x8x8xf32>
      %cst_49 = arith.constant dense<0.000000e+00> : vector<1x8xf32>
      %109 = vector.multi_reduction <add>, %108, %cst_49 [2] : vector<1x8x8xf32> to vector<1x8xf32>
      %110 = vector.shape_cast %109 : vector<1x8xf32> to vector<1x8x1xf32>
      %111 = arith.truncf %108 : vector<1x8x8xf32> to vector<1x8x8xbf16>
      "tpu.trace_start"() <{level = 10 : i32, message = "bqk,bkd->bqd"}> : () -> ()
      %cst_50 = arith.constant dense<0.000000e+00> : vector<1x8x32xf32>
      %112 = tpu.matmul %111, %102, %cst_50 {dimension_numbers = #tpu.dot_dimension_numbers<[2], [1], [1], [2], [0, 0, 0, 1, 1, 2], [0], [0]>} : vector<1x8x8xbf16>, vector<1x8x32xbf16>, vector<1x8x32xf32> -> vector<1x8x32xf32>
      "tpu.trace_stop"() : () -> ()
      %113 = tpu.reciprocal %110 {approx = true} : vector<1x8x1xf32> -> vector<1x8x1xf32>
      %114 = vector.broadcast %113 : vector<1x8x1xf32> to vector<1x8x32xf32>
      %115 = arith.mulf %112, %114 : vector<1x8x32xf32>
      %116 = vector.shape_cast %115 : vector<1x8x32xf32> to vector<8x32xf32>
      %c2 = arith.constant 2 : index
      %c0_51 = arith.constant 0 : index
      %117 = vector.load %arg11[%c2, %c0_51] : memref<10x32xf32, #tpu.memory_space<vmem>>, vector<1x32xf32>
      %118 = arith.truncf %116 : vector<8x32xf32> to vector<8x32xbf16>
      %c0_52 = arith.constant 0 : index
      %c0_53 = arith.constant 0 : index
      %119 = vector.load %arg8[%c0_52, %c0_53] : memref<32x32xbf16, #tpu.memory_space<vmem>>, vector<32x32xbf16>
      %cst_54 = arith.constant dense<0.000000e+00> : vector<8x32xf32>
      %120 = tpu.matmul %118, %119, %cst_54 {dimension_numbers = #tpu.dot_dimension_numbers<[1], [0], [0], [1], [0, 0, 1, 1], [], []>} : vector<8x32xbf16>, vector<32x32xbf16>, vector<8x32xf32> -> vector<8x32xf32>
      %121 = vector.broadcast %117 : vector<1x32xf32> to vector<8x32xf32>
      %122 = arith.addf %120, %121 : vector<8x32xf32>
      %123 = arith.addf %80, %122 : vector<8x32xf32>
      %c5 = arith.constant 5 : index
      %c0_55 = arith.constant 0 : index
      %124 = vector.load %arg11[%c5, %c0_55] : memref<10x32xf32, #tpu.memory_space<vmem>>, vector<1x32xf32>
      %c6 = arith.constant 6 : index
      %c0_56 = arith.constant 0 : index
      %125 = vector.load %arg11[%c6, %c0_56] : memref<10x32xf32, #tpu.memory_space<vmem>>, vector<1x32xf32>
      %cst_57 = arith.constant dense<0.000000e+00> : vector<8xf32>
      %126 = vector.multi_reduction <add>, %123, %cst_57 [1] : vector<8x32xf32> to vector<8xf32>
      %127 = vector.shape_cast %126 : vector<8xf32> to vector<8x1xf32>
      %cst_58 = arith.constant 3.200000e+01 : f32
      %128 = vector.broadcast %cst_58 : f32 to vector<8x1xf32>
      %129 = arith.divf %127, %128 : vector<8x1xf32>
      %130 = vector.broadcast %129 : vector<8x1xf32> to vector<8x32xf32>
      %131 = arith.subf %123, %130 : vector<8x32xf32>
      %132 = arith.mulf %131, %131 : vector<8x32xf32>
      %cst_59 = arith.constant dense<0.000000e+00> : vector<8xf32>
      %133 = vector.multi_reduction <add>, %132, %cst_59 [1] : vector<8x32xf32> to vector<8xf32>
      %134 = vector.shape_cast %133 : vector<8xf32> to vector<8x1xf32>
      %cst_60 = arith.constant 3.200000e+01 : f32
      %135 = vector.broadcast %cst_60 : f32 to vector<8x1xf32>
      %136 = arith.divf %134, %135 : vector<8x1xf32>
      %137 = vector.broadcast %129 : vector<8x1xf32> to vector<8x32xf32>
      %138 = arith.subf %123, %137 : vector<8x32xf32>
      %cst_61 = arith.constant 9.99999974E-6 : f32
      %139 = vector.broadcast %cst_61 : f32 to vector<8x1xf32>
      %140 = arith.addf %136, %139 : vector<8x1xf32>
      %141 = math.rsqrt %140 : vector<8x1xf32>
      %142 = vector.broadcast %141 : vector<8x1xf32> to vector<8x32xf32>
      %143 = arith.mulf %138, %142 : vector<8x32xf32>
      %144 = vector.broadcast %124 : vector<1x32xf32> to vector<8x32xf32>
      %145 = arith.mulf %143, %144 : vector<8x32xf32>
      %146 = vector.broadcast %125 : vector<1x32xf32> to vector<8x32xf32>
      %147 = arith.addf %145, %146 : vector<8x32xf32>
      %148 = arith.truncf %147 : vector<8x32xf32> to vector<8x32xbf16>
      %cst_62 = arith.constant 0.000000e+00 : f32
      %149 = vector.broadcast %cst_62 : f32 to vector<8x32xf32>
      %c0_63 = arith.constant 0 : index
      %c0_64 = arith.constant 0 : index
      %150 = vector.load %arg12[%c0_63, %c0_64] : memref<32x2048xbf16, #tpu.memory_space<vmem>>, vector<32x512xbf16>
      %cst_65 = arith.constant dense<0.000000e+00> : vector<8x512xf32>
      %151 = tpu.matmul %148, %150, %cst_65 {dimension_numbers = #tpu.dot_dimension_numbers<[1], [0], [0], [1], [0, 0, 1, 1], [], []>} : vector<8x32xbf16>, vector<32x512xbf16>, vector<8x512xf32> -> vector<8x512xf32>
      %c0_66 = arith.constant 0 : index
      %c0_67 = arith.constant 0 : index
      %152 = vector.load %arg13[%c0_66, %c0_67] : memref<1x2048xf32, #tpu.memory_space<vmem>>, vector<1x512xf32>
      %153 = vector.broadcast %152 : vector<1x512xf32> to vector<8x512xf32>
      %154 = arith.addf %151, %153 : vector<8x512xf32>
      %cst_68 = arith.constant 0.000000e+00 : f32
      %155 = vector.broadcast %cst_68 : f32 to vector<8x512xf32>
      %156 = arith.maximumf %154, %155 : vector<8x512xf32>
      %157 = arith.truncf %156 : vector<8x512xf32> to vector<8x512xbf16>
      %c0_69 = arith.constant 0 : index
      %c0_70 = arith.constant 0 : index
      %158 = vector.load %arg14[%c0_69, %c0_70] : memref<2048x32xbf16, #tpu.memory_space<vmem>>, vector<512x32xbf16>
      %cst_71 = arith.constant dense<0.000000e+00> : vector<8x32xf32>
      %159 = tpu.matmul %157, %158, %cst_71 {dimension_numbers = #tpu.dot_dimension_numbers<[1], [0], [0], [1], [0, 0, 1, 1], [], []>} : vector<8x512xbf16>, vector<512x32xbf16>, vector<8x32xf32> -> vector<8x32xf32>
      %160 = arith.addf %149, %159 : vector<8x32xf32>
      %c0_72 = arith.constant 0 : index
      %c512 = arith.constant 512 : index
      %161 = vector.load %arg12[%c0_72, %c512] : memref<32x2048xbf16, #tpu.memory_space<vmem>>, vector<32x512xbf16>
      %cst_73 = arith.constant dense<0.000000e+00> : vector<8x512xf32>
      %162 = tpu.matmul %148, %161, %cst_73 {dimension_numbers = #tpu.dot_dimension_numbers<[1], [0], [0], [1], [0, 0, 1, 1], [], []>} : vector<8x32xbf16>, vector<32x512xbf16>, vector<8x512xf32> -> vector<8x512xf32>
      %c0_74 = arith.constant 0 : index
      %c512_75 = arith.constant 512 : index
      %163 = vector.load %arg13[%c0_74, %c512_75] : memref<1x2048xf32, #tpu.memory_space<vmem>>, vector<1x512xf32>
      %164 = vector.broadcast %163 : vector<1x512xf32> to vector<8x512xf32>
      %165 = arith.addf %162, %164 : vector<8x512xf32>
      %cst_76 = arith.constant 0.000000e+00 : f32
      %166 = vector.broadcast %cst_76 : f32 to vector<8x512xf32>
      %167 = arith.maximumf %165, %166 : vector<8x512xf32>
      %168 = arith.truncf %167 : vector<8x512xf32> to vector<8x512xbf16>
      %c512_77 = arith.constant 512 : index
      %c0_78 = arith.constant 0 : index
      %169 = vector.load %arg14[%c512_77, %c0_78] : memref<2048x32xbf16, #tpu.memory_space<vmem>>, vector<512x32xbf16>
      %cst_79 = arith.constant dense<0.000000e+00> : vector<8x32xf32>
      %170 = tpu.matmul %168, %169, %cst_79 {dimension_numbers = #tpu.dot_dimension_numbers<[1], [0], [0], [1], [0, 0, 1, 1], [], []>} : vector<8x512xbf16>, vector<512x32xbf16>, vector<8x32xf32> -> vector<8x32xf32>
      %171 = arith.addf %160, %170 : vector<8x32xf32>
      %c0_80 = arith.constant 0 : index
      %c1024 = arith.constant 1024 : index
      %172 = vector.load %arg12[%c0_80, %c1024] : memref<32x2048xbf16, #tpu.memory_space<vmem>>, vector<32x512xbf16>
      %cst_81 = arith.constant dense<0.000000e+00> : vector<8x512xf32>
      %173 = tpu.matmul %148, %172, %cst_81 {dimension_numbers = #tpu.dot_dimension_numbers<[1], [0], [0], [1], [0, 0, 1, 1], [], []>} : vector<8x32xbf16>, vector<32x512xbf16>, vector<8x512xf32> -> vector<8x512xf32>
      %c0_82 = arith.constant 0 : index
      %c1024_83 = arith.constant 1024 : index
      %174 = vector.load %arg13[%c0_82, %c1024_83] : memref<1x2048xf32, #tpu.memory_space<vmem>>, vector<1x512xf32>
      %175 = vector.broadcast %174 : vector<1x512xf32> to vector<8x512xf32>
      %176 = arith.addf %173, %175 : vector<8x512xf32>
      %cst_84 = arith.constant 0.000000e+00 : f32
      %177 = vector.broadcast %cst_84 : f32 to vector<8x512xf32>
      %178 = arith.maximumf %176, %177 : vector<8x512xf32>
      %179 = arith.truncf %178 : vector<8x512xf32> to vector<8x512xbf16>
      %c1024_85 = arith.constant 1024 : index
      %c0_86 = arith.constant 0 : index
      %180 = vector.load %arg14[%c1024_85, %c0_86] : memref<2048x32xbf16, #tpu.memory_space<vmem>>, vector<512x32xbf16>
      %cst_87 = arith.constant dense<0.000000e+00> : vector<8x32xf32>
      %181 = tpu.matmul %179, %180, %cst_87 {dimension_numbers = #tpu.dot_dimension_numbers<[1], [0], [0], [1], [0, 0, 1, 1], [], []>} : vector<8x512xbf16>, vector<512x32xbf16>, vector<8x32xf32> -> vector<8x32xf32>
      %182 = arith.addf %171, %181 : vector<8x32xf32>
      %c0_88 = arith.constant 0 : index
      %c1536 = arith.constant 1536 : index
      %183 = vector.load %arg12[%c0_88, %c1536] : memref<32x2048xbf16, #tpu.memory_space<vmem>>, vector<32x512xbf16>
      %cst_89 = arith.constant dense<0.000000e+00> : vector<8x512xf32>
      %184 = tpu.matmul %148, %183, %cst_89 {dimension_numbers = #tpu.dot_dimension_numbers<[1], [0], [0], [1], [0, 0, 1, 1], [], []>} : vector<8x32xbf16>, vector<32x512xbf16>, vector<8x512xf32> -> vector<8x512xf32>
      %c0_90 = arith.constant 0 : index
      %c1536_91 = arith.constant 1536 : index
      %185 = vector.load %arg13[%c0_90, %c1536_91] : memref<1x2048xf32, #tpu.memory_space<vmem>>, vector<1x512xf32>
      %186 = vector.broadcast %185 : vector<1x512xf32> to vector<8x512xf32>
      %187 = arith.addf %184, %186 : vector<8x512xf32>
      %cst_92 = arith.constant 0.000000e+00 : f32
      %188 = vector.broadcast %cst_92 : f32 to vector<8x512xf32>
      %189 = arith.maximumf %187, %188 : vector<8x512xf32>
      %190 = arith.truncf %189 : vector<8x512xf32> to vector<8x512xbf16>
      %c1536_93 = arith.constant 1536 : index
      %c0_94 = arith.constant 0 : index
      %191 = vector.load %arg14[%c1536_93, %c0_94] : memref<2048x32xbf16, #tpu.memory_space<vmem>>, vector<512x32xbf16>
      %cst_95 = arith.constant dense<0.000000e+00> : vector<8x32xf32>
      %192 = tpu.matmul %190, %191, %cst_95 {dimension_numbers = #tpu.dot_dimension_numbers<[1], [0], [0], [1], [0, 0, 1, 1], [], []>} : vector<8x512xbf16>, vector<512x32xbf16>, vector<8x32xf32> -> vector<8x32xf32>
      %193 = arith.addf %182, %192 : vector<8x32xf32>
      %c9 = arith.constant 9 : index
      %c0_96 = arith.constant 0 : index
      %194 = vector.load %arg11[%c9, %c0_96] : memref<10x32xf32, #tpu.memory_space<vmem>>, vector<1x32xf32>
      %195 = vector.broadcast %194 : vector<1x32xf32> to vector<8x32xf32>
      %196 = arith.addf %193, %195 : vector<8x32xf32>
      %197 = arith.addf %147, %196 : vector<8x32xf32>
      %c7 = arith.constant 7 : index
      %c0_97 = arith.constant 0 : index
      %198 = vector.load %arg11[%c7, %c0_97] : memref<10x32xf32, #tpu.memory_space<vmem>>, vector<1x32xf32>
      %c8 = arith.constant 8 : index
      %c0_98 = arith.constant 0 : index
      %199 = vector.load %arg11[%c8, %c0_98] : memref<10x32xf32, #tpu.memory_space<vmem>>, vector<1x32xf32>
      %cst_99 = arith.constant dense<0.000000e+00> : vector<8xf32>
      %200 = vector.multi_reduction <add>, %197, %cst_99 [1] : vector<8x32xf32> to vector<8xf32>
      %201 = vector.shape_cast %200 : vector<8xf32> to vector<8x1xf32>
      %cst_100 = arith.constant 3.200000e+01 : f32
      %202 = vector.broadcast %cst_100 : f32 to vector<8x1xf32>
      %203 = arith.divf %201, %202 : vector<8x1xf32>
      %204 = vector.broadcast %203 : vector<8x1xf32> to vector<8x32xf32>
      %205 = arith.subf %197, %204 : vector<8x32xf32>
      %206 = arith.mulf %205, %205 : vector<8x32xf32>
      %cst_101 = arith.constant dense<0.000000e+00> : vector<8xf32>
      %207 = vector.multi_reduction <add>, %206, %cst_101 [1] : vector<8x32xf32> to vector<8xf32>
      %208 = vector.shape_cast %207 : vector<8xf32> to vector<8x1xf32>
      %cst_102 = arith.constant 3.200000e+01 : f32
      %209 = vector.broadcast %cst_102 : f32 to vector<8x1xf32>
      %210 = arith.divf %208, %209 : vector<8x1xf32>
      %211 = vector.broadcast %203 : vector<8x1xf32> to vector<8x32xf32>
      %212 = arith.subf %197, %211 : vector<8x32xf32>
      %cst_103 = arith.constant 9.99999974E-6 : f32
      %213 = vector.broadcast %cst_103 : f32 to vector<8x1xf32>
      %214 = arith.addf %210, %213 : vector<8x1xf32>
      %215 = math.rsqrt %214 : vector<8x1xf32>
      %216 = vector.broadcast %215 : vector<8x1xf32> to vector<8x32xf32>
      %217 = arith.mulf %212, %216 : vector<8x32xf32>
      %218 = vector.broadcast %198 : vector<1x32xf32> to vector<8x32xf32>
      %219 = arith.mulf %217, %218 : vector<8x32xf32>
      %220 = vector.broadcast %199 : vector<1x32xf32> to vector<8x32xf32>
      %221 = arith.addf %219, %220 : vector<8x32xf32>
      %222 = arith.truncf %221 : vector<8x32xf32> to vector<8x32xbf16>
      %c0_104 = arith.constant 0 : index
      %c0_105 = arith.constant 0 : index
      %223 = vector.load %arg18[%c0_104, %c0_105] : memref<8x32xbf16, #tpu.memory_space<vmem>>, vector<8x32xbf16>
      tpu.vector_store %arg18[%c0_104, %c0_105], %222 {strides = array<i32>} : memref<8x32xbf16, #tpu.memory_space<vmem>>, vector<8x32xbf16>,
    } else {
    }
    %c0 = arith.constant 0 : index
    %c0_1 = arith.constant 0 : index
    %3 = vector.load %arg18[%c0, %c0_1] : memref<8x32xbf16, #tpu.memory_space<vmem>>, vector<8x32xbf16>
    %c0_2 = arith.constant 0 : index
    %c0_3 = arith.constant 0 : index
    %4 = vector.load %arg15[%c0_2, %c0_3] : memref<32x128xbf16, #tpu.memory_space<vmem>>, vector<32x128xbf16>
    %cst = arith.constant dense<0.000000e+00> : vector<8x128xf32>
    %5 = tpu.matmul %3, %4, %cst {dimension_numbers = #tpu.dot_dimension_numbers<[1], [0], [0], [1], [0, 0, 1, 1], [], []>} : vector<8x32xbf16>, vector<32x128xbf16>, vector<8x128xf32> -> vector<8x128xf32>
    %c0_4 = arith.constant 0 : index
    %c0_5 = arith.constant 0 : index
    %6 = vector.load %arg16[%c0_4, %c0_5] : memref<1x128xf32, #tpu.memory_space<vmem>>, vector<1x128xf32>
    %7 = vector.broadcast %6 : vector<1x128xf32> to vector<8x128xf32>
    %8 = arith.addf %5, %7 : vector<8x128xf32>
    %c0_6 = arith.constant 0 : index
    %c0_7 = arith.constant 0 : index
    %9 = vector.load %arg17[%c0_6, %c0_7] : memref<8x128xf32, #tpu.memory_space<vmem>>, vector<8x128xf32>
    tpu.vector_store %arg17[%c0_6, %c0_7], %8 {strides = array<i32>} : memref<8x128xf32, #tpu.memory_space<vmem>>, vector<8x128xf32>,
    return
  }
  func.func @transform_0(%arg0: i32, %arg1: i32) -> (i32, i32, i32) {
    %c0_i32 = arith.constant 0 : i32
    %c0_i32_0 = arith.constant 0 : i32
    %c0_i32_1 = arith.constant 0 : i32
    return %arg0, %c0_i32, %c0_i32_0 : i32, i32, i32
  }
  func.func @transform_1(%arg0: i32, %arg1: i32) -> (i32, i32, i32) {
    %c0_i32 = arith.constant 0 : i32
    %c0_i32_0 = arith.constant 0 : i32
    %c0_i32_1 = arith.constant 0 : i32
    return %arg0, %c0_i32, %c0_i32_0 : i32, i32, i32
  }
  func.func @transform_2(%arg0: i32, %arg1: i32) -> (i32, i32) {
    %c0_i32 = arith.constant 0 : i32
    %c0_i32_0 = arith.constant 0 : i32
    %c0_i32_1 = arith.constant 0 : i32
    return %c0_i32, %c0_i32_0 : i32, i32
  }
  func.func @transform_3(%arg0: i32, %arg1: i32) -> (i32, i32) {
    %c0_i32 = arith.constant 0 : i32
    %c0_i32_0 = arith.constant 0 : i32
    %c0_i32_1 = arith.constant 0 : i32
    return %c0_i32, %c0_i32_0 : i32, i32
  }
  func.func @transform_4(%arg0: i32, %arg1: i32) -> (i32, i32) {
    %c0_i32 = arith.constant 0 : i32
    %c0_i32_0 = arith.constant 0 : i32
    %c0_i32_1 = arith.constant 0 : i32
    return %c0_i32, %c0_i32_0 : i32, i32
  }
  func.func @transform_5(%arg0: i32, %arg1: i32) -> (i32, i32) {
    %c0_i32 = arith.constant 0 : i32
    %c0_i32_0 = arith.constant 0 : i32
    %c0_i32_1 = arith.constant 0 : i32
    return %c0_i32, %c0_i32_0 : i32, i32
  }
  func.func @transform_6(%arg0: i32, %arg1: i32) -> (i32, i32) {
    %c0_i32 = arith.constant 0 : i32
    %c0_i32_0 = arith.constant 0 : i32
    %c0_i32_1 = arith.constant 0 : i32
    return %c0_i32, %c0_i32_0 : i32, i32
  }
  func.func @transform_7(%arg0: i32, %arg1: i32) -> (i32, i32) {
    %c0_i32 = arith.constant 0 : i32
    %c0_i32_0 = arith.constant 0 : i32
    %c0_i32_1 = arith.constant 0 : i32
    return %c0_i32, %c0_i32_0 : i32, i32
  }
  func.func @transform_8(%arg0: i32, %arg1: i32) -> (i32, i32) {
    %c0_i32 = arith.constant 0 : i32
    %c0_i32_0 = arith.constant 0 : i32
    %c0_i32_1 = arith.constant 0 : i32
    return %c0_i32, %c0_i32_0 : i32, i32
  }
  func.func @transform_9(%arg0: i32, %arg1: i32) -> (i32, i32) {
    %c0_i32 = arith.constant 0 : i32
    %c0_i32_0 = arith.constant 0 : i32
    %c0_i32_1 = arith.constant 0 : i32
    return %c0_i32, %c0_i32_0 : i32, i32
  }
  func.func @transform_10(%arg0: i32, %arg1: i32) -> (i32, i32) {
    %c0_i32 = arith.constant 0 : i32
    %c0_i32_0 = arith.constant 0 : i32
    %c0_i32_1 = arith.constant 0 : i32
    return %c0_i32, %c0_i32_0 : i32, i32
  }
  func.func @transform_11(%arg0: i32, %arg1: i32) -> (i32, i32) {
    %c0_i32 = arith.constant 0 : i32
    %c0_i32_0 = arith.constant 0 : i32
    %c0_i32_1 = arith.constant 0 : i32
    return %c0_i32, %c0_i32_0 : i32, i32
  }
  func.func @transform_12(%arg0: i32, %arg1: i32) -> (i32, i32) {
    %c0_i32 = arith.constant 0 : i32
    %c0_i32_0 = arith.constant 0 : i32
    %c0_i32_1 = arith.constant 0 : i32
    return %c0_i32, %c0_i32_0 : i32, i32
  }
  func.func @transform_13(%arg0: i32, %arg1: i32) -> (i32, i32) {
    %c0_i32 = arith.constant 0 : i32
    %c0_i32_0 = arith.constant 0 : i32
    return %c0_i32, %arg1 : i32, i32
  }
  func.func @transform_14(%arg0: i32, %arg1: i32) -> (i32, i32) {
    %c0_i32 = arith.constant 0 : i32
    %c0_i32_0 = arith.constant 0 : i32
    return %c0_i32, %arg1 : i32, i32
  }
  func.func @transform_15(%arg0: i32, %arg1: i32) -> (i32, i32) {
    %c0_i32 = arith.constant 0 : i32
    return %arg0, %arg1 : i32, i32
  }
}

</mosaic_0001>

<llo_original>
// kernel: tpu_custom_call.1
$region0: #{tpu_custom_call.1}
  #allocation0 [shape = 'u32[]', space=smem, size = 0x4, offset = 0x4, fixed_abs, tag = 'smem constant byte address 0x4 - core index']
  #allocation1 [shape = 'u32[144,128]{1,0:T(1,128)}', space=vmem, size = 0x12000, scoped, tag = 'internal scratch']
  #allocation2 [shape = 'bf16[8,32]{1,0:T(8,128)(2,1)}', space=vmem, size = 0x800, scoped, tag = 'scratch operand']
  %s0 = inlined_call_operand.vmem [shape: f32[2,8,32], index: 0, kind: input, shape index: {}]
  %s1 = inlined_call_operand.vmem [shape: f32[2,8,32], index: 1, kind: input, shape index: {}]
  %s2 = inlined_call_operand.vmem [shape: bf16[32,96], index: 2, kind: input, shape index: {}]
  %s3 = inlined_call_operand.vmem [shape: bf16[32,32], index: 3, kind: input, shape index: {}]
  %s4 = inlined_call_operand.vmem [shape: bf16[32,32], index: 4, kind: input, shape index: {}]
  %s5 = inlined_call_operand.vmem [shape: bf16[32,64], index: 5, kind: input, shape index: {}]
  %s6 = inlined_call_operand.vmem [shape: bf16[32,32], index: 6, kind: input, shape index: {}]
  %s7 = inlined_call_operand.vmem [shape: f32[1,96], index: 7, kind: input, shape index: {}]
  %s8 = inlined_call_operand.vmem [shape: f32[1,64], index: 8, kind: input, shape index: {}]
  %s9 = inlined_call_operand.vmem [shape: f32[10,32], index: 9, kind: input, shape index: {}]
  %s10 = inlined_call_operand.vmem [shape: bf16[32,2048], index: 10, kind: input, shape index: {}]
  %s11 = inlined_call_operand.vmem [shape: f32[1,2048], index: 11, kind: input, shape index: {}]
  %s12 = inlined_call_operand.vmem [shape: bf16[2048,32], index: 12, kind: input, shape index: {}]
  %s13 = inlined_call_operand.vmem [shape: bf16[32,128], index: 13, kind: input, shape index: {}]
  %s14 = inlined_call_operand.vmem [shape: f32[1,128], index: 14, kind: input, shape index: {}]
  %s15 = inlined_call_operand.hbm [shape: f32[16,128], index: 15, kind: output, shape index: {}]
  %s16 = sld [smem:[#allocation0]]
  $region97: #{tpu_custom_call.1} parent=0
    _
  %s18 = ssub.s32 1, %s16
  %s19 = scalar_select 0, %s18, %s16
  $region1: #{tpu_custom_call.1} parent=0
    #allocation3 [shape = 'u8[8192]{0}', space=vmem, size = 0x2000, scoped, tag = 'output window, operand 0']
    #allocation4 [shape = 's32[2]{0}', space=sflag, size = 0x8, scoped, tag = 'scoped memory for tpu_custom_call.1']
    %20 = vsyncpa [#allocation4], 0
    %s21 = scalar_lea.sflag [#allocation4], 1
    %22 = vsyncpa %s21, 0
    loop: start=0, step=1, limit=4
    $region2: #{tpu_custom_call.1} parent=1 // loop_pre_header
      _
    $region3: #{tpu_custom_call.1} parent=1 // loop_header
      %s24 = sphi 0, %s28
      %p25 = scmp.ge.s32.totalorder %s24, 4
      %s31 = sphi 0, %s43
      %s32 = sphi 0, %s39
      %s33 = sphi 0, %s31
      %s34 = sphi 0, %s32
      %s35 = sphi 0, %s33
      %s36 = sphi 0, %s34
      %s46 = sphi 0, %s48
      %s49 = sphi 0, %s46
      %s50 = sphi 0, %s49
      %s66 = sphi 0, %s50
      %s72 = sphi 0, %s74
      %s75 = sphi 0, %s72
      %s76 = sphi 0, %s75
      %s92 = sphi 0, %s76
      %s96 = sphi 0, %s96
      %s98 = sphi 0, %s96
      %s99 = sphi 0, %s98
      %s113 = sphi 0, %s99
      %s117 = sphi 0, %s117
      %s119 = sphi 0, %s117
      %s120 = sphi 0, %s119
      %s134 = sphi 0, %s120
      %s138 = sphi 0, %s138
      %s140 = sphi 0, %s138
      %s141 = sphi 0, %s140
      %s155 = sphi 0, %s141
      %s159 = sphi 0, %s159
      %s161 = sphi 0, %s159
      %s162 = sphi 0, %s161
      %s176 = sphi 0, %s162
      %s180 = sphi 0, %s180
      %s182 = sphi 0, %s180
      %s183 = sphi 0, %s182
      %s197 = sphi 0, %s183
      %s201 = sphi 0, %s201
      %s203 = sphi 0, %s201
      %s204 = sphi 0, %s203
      %s218 = sphi 0, %s204
      %s222 = sphi 0, %s222
      %s224 = sphi 0, %s222
      %s225 = sphi 0, %s224
      %s239 = sphi 0, %s225
      %s243 = sphi 0, %s243
      %s245 = sphi 0, %s243
      %s246 = sphi 0, %s245
      %s260 = sphi 0, %s246
      %s264 = sphi 0, %s264
      %s266 = sphi 0, %s264
      %s267 = sphi 0, %s266
      %s281 = sphi 0, %s267
      %s285 = sphi 0, %s285
      %s287 = sphi 0, %s285
      %s288 = sphi 0, %s287
      %s302 = sphi 0, %s288
      %s306 = sphi 0, %s306
      %s308 = sphi 0, %s306
      %s309 = sphi 0, %s308
      %s323 = sphi 0, %s309
      %s329 = sphi 0, %s331
      %s332 = sphi 0, %s329
      %s333 = sphi 0, %s332
      %s349 = sphi 0, %s333
      %s355 = sphi 0, %s357
      %s358 = sphi 0, %s355
      %s359 = sphi 0, %s358
      %s375 = sphi 0, %s359
      %s383 = sphi 0, %s385
      %s386 = sphi 0, %s383
      %s387 = sphi 0, %s386
      %s403 = sphi 0, %s387
    $region4: #{tpu_custom_call.1} parent=1 // loop_header_branch
      %27 = sbr.rel (%p25) target = $region8
    $region5: #{tpu_custom_call.1} parent=1 // loop_body
      %s29 = ssub.s32 %s24, 1
      %s30 = ssub.s32 %s24, 2
      %s37 = sadd.s32 1, %s32
      %p38 = scmp.ge.s32.totalorder %s37, 1
      %s39 = scalar_select %p38, 0, %s37
      %s40 = sadd.s32 1, %s31
      %s41 = scalar_select %p38, %s40, %s31
      %p42 = scmp.ge.s32.totalorder %s41, 2
      %s43 = scalar_select %p42, 0, %s41
      %s44 = ssub.s32 %s31, %s43
      %p45 = scmp.eq.s32.totalorder %s44, 0
      %s47 = sadd.s32 %s46, 1
      %s48 = scalar_select %p45, %s46, %s47
      %p51 = pneg %p45
      %p52 = scmp.eq.s32.totalorder %s24, 1
      %p53 = por %p51, %p52
      %p54 = scmp.ne.s32.totalorder %s46, %s49
      %p55 = scmp.eq.s32.totalorder %s24, 0
      %p56 = por %p54, %p55
      %p57 = scmp.ne.s32.totalorder %s46, %s49
      %p58 = scmp.eq.s32.totalorder %s29, 1
      %p59 = por %p57, %p58
      %p60 = scmp.ne.s32.totalorder %s49, %s50
      %p61 = scmp.eq.s32.totalorder %s29, 0
      %p62 = por %p60, %p61
      %p63 = scmp.ne.s32.totalorder %s49, %s50
      %p64 = scmp.eq.s32.totalorder %s30, 1
      %p65 = por %p63, %p64
      %p67 = scmp.ne.s32.totalorder %s50, %s66
      %p68 = scmp.eq.s32.totalorder %s30, 0
      %p69 = por %p67, %p68
      %s70 = ssub.s32 %s31, %s43
      %p71 = scmp.eq.s32.totalorder %s70, 0
      %s73 = sadd.s32 %s72, 1
      %s74 = scalar_select %p71, %s72, %s73
      %p77 = pneg %p71
      %p78 = scmp.eq.s32.totalorder %s24, 1
      %p79 = por %p77, %p78
      %p80 = scmp.ne.s32.totalorder %s72, %s75
      %p81 = scmp.eq.s32.totalorder %s24, 0
      %p82 = por %p80, %p81
      %p83 = scmp.ne.s32.totalorder %s72, %s75
      %p84 = scmp.eq.s32.totalorder %s29, 1
      %p85 = por %p83, %p84
      %p86 = scmp.ne.s32.totalorder %s75, %s76
      %p87 = scmp.eq.s32.totalorder %s29, 0
      %p88 = por %p86, %p87
      %p89 = scmp.ne.s32.totalorder %s75, %s76
      %p90 = scmp.eq.s32.totalorder %s30, 1
      %p91 = por %p89, %p90
      %p93 = scmp.ne.s32.totalorder %s76, %s92
      %p94 = scmp.eq.s32.totalorder %s30, 0
      %p95 = por %p93, %p94
      %s97 = sadd.s32 %s96, 1
      %p100 = scmp.eq.s32.totalorder %s24, 1
      %p101 = scmp.ne.s32.totalorder %s96, %s98
      %p102 = scmp.eq.s32.totalorder %s24, 0
      %p103 = por %p101, %p102
      %p104 = scmp.ne.s32.totalorder %s96, %s98
      %p105 = scmp.eq.s32.totalorder %s29, 1
      %p106 = por %p104, %p105
      %p107 = scmp.ne.s32.totalorder %s98, %s99
      %p108 = scmp.eq.s32.totalorder %s29, 0
      %p109 = por %p107, %p108
      %p110 = scmp.ne.s32.totalorder %s98, %s99
      %p111 = scmp.eq.s32.totalorder %s30, 1
      %p112 = por %p110, %p111
      %p114 = scmp.ne.s32.totalorder %s99, %s113
      %p115 = scmp.eq.s32.totalorder %s30, 0
      %p116 = por %p114, %p115
      %s118 = sadd.s32 %s117, 1
      %p121 = scmp.eq.s32.totalorder %s24, 1
      %p122 = scmp.ne.s32.totalorder %s117, %s119
      %p123 = scmp.eq.s32.totalorder %s24, 0
      %p124 = por %p122, %p123
      %p125 = scmp.ne.s32.totalorder %s117, %s119
      %p126 = scmp.eq.s32.totalorder %s29, 1
      %p127 = por %p125, %p126
      %p128 = scmp.ne.s32.totalorder %s119, %s120
      %p129 = scmp.eq.s32.totalorder %s29, 0
      %p130 = por %p128, %p129
      %p131 = scmp.ne.s32.totalorder %s119, %s120
      %p132 = scmp.eq.s32.totalorder %s30, 1
      %p133 = por %p131, %p132
      %p135 = scmp.ne.s32.totalorder %s120, %s134
      %p136 = scmp.eq.s32.totalorder %s30, 0
      %p137 = por %p135, %p136
      %s139 = sadd.s32 %s138, 1
      %p142 = scmp.eq.s32.totalorder %s24, 1
      %p143 = scmp.ne.s32.totalorder %s138, %s140
      %p144 = scmp.eq.s32.totalorder %s24, 0
      %p145 = por %p143, %p144
      %p146 = scmp.ne.s32.totalorder %s138, %s140
      %p147 = scmp.eq.s32.totalorder %s29, 1
      %p148 = por %p146, %p147
      %p149 = scmp.ne.s32.totalorder %s140, %s141
      %p150 = scmp.eq.s32.totalorder %s29, 0
      %p151 = por %p149, %p150
      %p152 = scmp.ne.s32.totalorder %s140, %s141
      %p153 = scmp.eq.s32.totalorder %s30, 1
      %p154 = por %p152, %p153
      %p156 = scmp.ne.s32.totalorder %s141, %s155
      %p157 = scmp.eq.s32.totalorder %s30, 0
      %p158 = por %p156, %p157
      %s160 = sadd.s32 %s159, 1
      %p163 = scmp.eq.s32.totalorder %s24, 1
      %p164 = scmp.ne.s32.totalorder %s159, %s161
      %p165 = scmp.eq.s32.totalorder %s24, 0
      %p166 = por %p164, %p165
      %p167 = scmp.ne.s32.totalorder %s159, %s161
      %p168 = scmp.eq.s32.totalorder %s29, 1
      %p169 = por %p167, %p168
      %p170 = scmp.ne.s32.totalorder %s161, %s162
      %p171 = scmp.eq.s32.totalorder %s29, 0
      %p172 = por %p170, %p171
      %p173 = scmp.ne.s32.totalorder %s161, %s162
      %p174 = scmp.eq.s32.totalorder %s30, 1
      %p175 = por %p173, %p174
      %p177 = scmp.ne.s32.totalorder %s162, %s176
      %p178 = scmp.eq.s32.totalorder %s30, 0
      %p179 = por %p177, %p178
      %s181 = sadd.s32 %s180, 1
      %p184 = scmp.eq.s32.totalorder %s24, 1
      %p185 = scmp.ne.s32.totalorder %s180, %s182
      %p186 = scmp.eq.s32.totalorder %s24, 0
      %p187 = por %p185, %p186
      %p188 = scmp.ne.s32.totalorder %s180, %s182
      %p189 = scmp.eq.s32.totalorder %s29, 1
      %p190 = por %p188, %p189
      %p191 = scmp.ne.s32.totalorder %s182, %s183
      %p192 = scmp.eq.s32.totalorder %s29, 0
      %p193 = por %p191, %p192
      %p194 = scmp.ne.s32.totalorder %s182, %s183
      %p195 = scmp.eq.s32.totalorder %s30, 1
      %p196 = por %p194, %p195
      %p198 = scmp.ne.s32.totalorder %s183, %s197
      %p199 = scmp.eq.s32.totalorder %s30, 0
      %p200 = por %p198, %p199
      %s202 = sadd.s32 %s201, 1
      %p205 = scmp.eq.s32.totalorder %s24, 1
      %p206 = scmp.ne.s32.totalorder %s201, %s203
      %p207 = scmp.eq.s32.totalorder %s24, 0
      %p208 = por %p206, %p207
      %p209 = scmp.ne.s32.totalorder %s201, %s203
      %p210 = scmp.eq.s32.totalorder %s29, 1
      %p211 = por %p209, %p210
      %p212 = scmp.ne.s32.totalorder %s203, %s204
      %p213 = scmp.eq.s32.totalorder %s29, 0
      %p214 = por %p212, %p213
      %p215 = scmp.ne.s32.totalorder %s203, %s204
      %p216 = scmp.eq.s32.totalorder %s30, 1
      %p217 = por %p215, %p216
      %p219 = scmp.ne.s32.totalorder %s204, %s218
      %p220 = scmp.eq.s32.totalorder %s30, 0
      %p221 = por %p219, %p220
      %s223 = sadd.s32 %s222, 1
      %p226 = scmp.eq.s32.totalorder %s24, 1
      %p227 = scmp.ne.s32.totalorder %s222, %s224
      %p228 = scmp.eq.s32.totalorder %s24, 0
      %p229 = por %p227, %p228
      %p230 = scmp.ne.s32.totalorder %s222, %s224
      %p231 = scmp.eq.s32.totalorder %s29, 1
      %p232 = por %p230, %p231
      %p233 = scmp.ne.s32.totalorder %s224, %s225
      %p234 = scmp.eq.s32.totalorder %s29, 0
      %p235 = por %p233, %p234
      %p236 = scmp.ne.s32.totalorder %s224, %s225
      %p237 = scmp.eq.s32.totalorder %s30, 1
      %p238 = por %p236, %p237
      %p240 = scmp.ne.s32.totalorder %s225, %s239
      %p241 = scmp.eq.s32.totalorder %s30, 0
      %p242 = por %p240, %p241
      %s244 = sadd.s32 %s243, 1
      %p247 = scmp.eq.s32.totalorder %s24, 1
      %p248 = scmp.ne.s32.totalorder %s243, %s245
      %p249 = scmp.eq.s32.totalorder %s24, 0
      %p250 = por %p248, %p249
      %p251 = scmp.ne.s32.totalorder %s243, %s245
      %p252 = scmp.eq.s32.totalorder %s29, 1
      %p253 = por %p251, %p252
      %p254 = scmp.ne.s32.totalorder %s245, %s246
      %p255 = scmp.eq.s32.totalorder %s29, 0
      %p256 = por %p254, %p255
      %p257 = scmp.ne.s32.totalorder %s245, %s246
      %p258 = scmp.eq.s32.totalorder %s30, 1
      %p259 = por %p257, %p258
      %p261 = scmp.ne.s32.totalorder %s246, %s260
      %p262 = scmp.eq.s32.totalorder %s30, 0
      %p263 = por %p261, %p262
      %s265 = sadd.s32 %s264, 1
      %p268 = scmp.eq.s32.totalorder %s24, 1
      %p269 = scmp.ne.s32.totalorder %s264, %s266
      %p270 = scmp.eq.s32.totalorder %s24, 0
      %p271 = por %p269, %p270
      %p272 = scmp.ne.s32.totalorder %s264, %s266
      %p273 = scmp.eq.s32.totalorder %s29, 1
      %p274 = por %p272, %p273
      %p275 = scmp.ne.s32.totalorder %s266, %s267
      %p276 = scmp.eq.s32.totalorder %s29, 0
      %p277 = por %p275, %p276
      %p278 = scmp.ne.s32.totalorder %s266, %s267
      %p279 = scmp.eq.s32.totalorder %s30, 1
      %p280 = por %p278, %p279
      %p282 = scmp.ne.s32.totalorder %s267, %s281
      %p283 = scmp.eq.s32.totalorder %s30, 0
      %p284 = por %p282, %p283
      %s286 = sadd.s32 %s285, 1
      %p289 = scmp.eq.s32.totalorder %s24, 1
      %p290 = scmp.ne.s32.totalorder %s285, %s287
      %p291 = scmp.eq.s32.totalorder %s24, 0
      %p292 = por %p290, %p291
      %p293 = scmp.ne.s32.totalorder %s285, %s287
      %p294 = scmp.eq.s32.totalorder %s29, 1
      %p295 = por %p293, %p294
      %p296 = scmp.ne.s32.totalorder %s287, %s288
      %p297 = scmp.eq.s32.totalorder %s29, 0
      %p298 = por %p296, %p297
      %p299 = scmp.ne.s32.totalorder %s287, %s288
      %p300 = scmp.eq.s32.totalorder %s30, 1
      %p301 = por %p299, %p300
      %p303 = scmp.ne.s32.totalorder %s288, %s302
      %p304 = scmp.eq.s32.totalorder %s30, 0
      %p305 = por %p303, %p304
      %s307 = sadd.s32 %s306, 1
      %p310 = scmp.eq.s32.totalorder %s24, 1
      %p311 = scmp.ne.s32.totalorder %s306, %s308
      %p312 = scmp.eq.s32.totalorder %s24, 0
      %p313 = por %p311, %p312
      %p314 = scmp.ne.s32.totalorder %s306, %s308
      %p315 = scmp.eq.s32.totalorder %s29, 1
      %p316 = por %p314, %p315
      %p317 = scmp.ne.s32.totalorder %s308, %s309
      %p318 = scmp.eq.s32.totalorder %s29, 0
      %p319 = por %p317, %p318
      %p320 = scmp.ne.s32.totalorder %s308, %s309
      %p321 = scmp.eq.s32.totalorder %s30, 1
      %p322 = por %p320, %p321
      %p324 = scmp.ne.s32.totalorder %s309, %s323
      %p325 = scmp.eq.s32.totalorder %s30, 0
      %p326 = por %p324, %p325
      %s327 = ssub.s32 %s32, %s39
      %p328 = scmp.eq.s32.totalorder %s327, 0
      %s330 = sadd.s32 %s329, 1
      %s331 = scalar_select %p328, %s329, %s330
      %p334 = pneg %p328
      %p335 = scmp.eq.s32.totalorder %s24, 1
      %p336 = por %p334, %p335
      %p337 = scmp.ne.s32.totalorder %s329, %s332
      %p338 = scmp.eq.s32.totalorder %s24, 0
      %p339 = por %p337, %p338
      %p340 = scmp.ne.s32.totalorder %s329, %s332
      %p341 = scmp.eq.s32.totalorder %s29, 1
      %p342 = por %p340, %p341
      %p343 = scmp.ne.s32.totalorder %s332, %s333
      %p344 = scmp.eq.s32.totalorder %s29, 0
      %p345 = por %p343, %p344
      %p346 = scmp.ne.s32.totalorder %s332, %s333
      %p347 = scmp.eq.s32.totalorder %s30, 1
      %p348 = por %p346, %p347
      %p350 = scmp.ne.s32.totalorder %s333, %s349
      %p351 = scmp.eq.s32.totalorder %s30, 0
      %p352 = por %p350, %p351
      %s353 = ssub.s32 %s32, %s39
      %p354 = scmp.eq.s32.totalorder %s353, 0
      %s356 = sadd.s32 %s355, 1
      %s357 = scalar_select %p354, %s355, %s356
      %p360 = pneg %p354
      %p361 = scmp.eq.s32.totalorder %s24, 1
      %p362 = por %p360, %p361
      %p363 = scmp.ne.s32.totalorder %s355, %s358
      %p364 = scmp.eq.s32.totalorder %s24, 0
      %p365 = por %p363, %p364
      %p366 = scmp.ne.s32.totalorder %s355, %s358
      %p367 = scmp.eq.s32.totalorder %s29, 1
      %p368 = por %p366, %p367
      %p369 = scmp.ne.s32.totalorder %s358, %s359
      %p370 = scmp.eq.s32.totalorder %s29, 0
      %p371 = por %p369, %p370
      %p372 = scmp.ne.s32.totalorder %s358, %s359
      %p373 = scmp.eq.s32.totalorder %s30, 1
      %p374 = por %p372, %p373
      %p376 = scmp.ne.s32.totalorder %s359, %s375
      %p377 = scmp.eq.s32.totalorder %s30, 0
      %p378 = por %p376, %p377
      %s379 = ssub.s32 %s31, %s43
      %s380 = ssub.s32 %s32, %s39
      %s381 = sor.u32 %s379, %s380
      %p382 = scmp.eq.s32.totalorder %s381, 0
      %s384 = sadd.s32 %s383, 1
      %s385 = scalar_select %p382, %s383, %s384
      %p388 = pneg %p382
      %p389 = scmp.eq.s32.totalorder %s24, 1
      %p390 = por %p388, %p389
      %p391 = scmp.ne.s32.totalorder %s383, %s386
      %p392 = scmp.eq.s32.totalorder %s24, 0
      %p393 = por %p391, %p392
      %p394 = scmp.ne.s32.totalorder %s383, %s386
      %p395 = scmp.eq.s32.totalorder %s29, 1
      %p396 = por %p394, %p395
      %p397 = scmp.ne.s32.totalorder %s386, %s387
      %p398 = scmp.eq.s32.totalorder %s29, 0
      %p399 = por %p397, %p398
      %p400 = scmp.ne.s32.totalorder %s386, %s387
      %p401 = scmp.eq.s32.totalorder %s30, 1
      %p402 = por %p400, %p401
      %p404 = scmp.ne.s32.totalorder %s387, %s403
      %p405 = scmp.eq.s32.totalorder %s30, 0
      %p406 = por %p404, %p405
      %p407 = scmp.le.s32.totalorder 1, %s24
      %p408 = scmp.lt.s32.totalorder %s24, 3
      %p409 = pnand %p407, %p408
      %p410 = pneg %p409
      // Predicated region
      $region9: #{tpu_custom_call.1} parent=5 // pred_check
        _
      $region10: #{tpu_custom_call.1} parent=5 // pred_check_branch
        %412 = sbr.rel (%p409) target = $region12
      $region11: #{tpu_custom_call.1} parent=5 // pred_region
        %s413 = ssub.s32 %s24, 1
        // Predicated region
        $region13: #{tpu_custom_call.1} parent=11 // pred_check
          %p414 = pneg %p109
        $region14: #{tpu_custom_call.1} parent=11 // pred_check_branch
          %416 = sbr.rel (%p414) target = $region16
        $region15: #{tpu_custom_call.1} parent=11 // pred_region
          _
        $region16: #{tpu_custom_call.1} parent=11 // pred_fallthru
          _
        // Predicated region
        $region17: #{tpu_custom_call.1} parent=11 // pred_check
          %p417 = pneg %p130
        $region18: #{tpu_custom_call.1} parent=11 // pred_check_branch
          %419 = sbr.rel (%p417) target = $region20
        $region19: #{tpu_custom_call.1} parent=11 // pred_region
          _
        $region20: #{tpu_custom_call.1} parent=11 // pred_fallthru
          _
        // Predicated region
        $region21: #{tpu_custom_call.1} parent=11 // pred_check
          %p420 = pneg %p151
        $region22: #{tpu_custom_call.1} parent=11 // pred_check_branch
          %422 = sbr.rel (%p420) target = $region24
        $region23: #{tpu_custom_call.1} parent=11 // pred_region
          _
        $region24: #{tpu_custom_call.1} parent=11 // pred_fallthru
          _
        // Predicated region
        $region25: #{tpu_custom_call.1} parent=11 // pred_check
          %p423 = pneg %p172
        $region26: #{tpu_custom_call.1} parent=11 // pred_check_branch
          %425 = sbr.rel (%p423) target = $region28
        $region27: #{tpu_custom_call.1} parent=11 // pred_region
          _
        $region28: #{tpu_custom_call.1} parent=11 // pred_fallthru
          _
        // Predicated region
        $region29: #{tpu_custom_call.1} parent=11 // pred_check
          %p426 = pneg %p193
        $region30: #{tpu_custom_call.1} parent=11 // pred_check_branch
          %428 = sbr.rel (%p426) target = $region32
        $region31: #{tpu_custom_call.1} parent=11 // pred_region
          _
        $region32: #{tpu_custom_call.1} parent=11 // pred_fallthru
          _
        // Predicated region
        $region33: #{tpu_custom_call.1} parent=11 // pred_check
          %p429 = pneg %p214
        $region34: #{tpu_custom_call.1} parent=11 // pred_check_branch
          %431 = sbr.rel (%p429) target = $region36
        $region35: #{tpu_custom_call.1} parent=11 // pred_region
          _
        $region36: #{tpu_custom_call.1} parent=11 // pred_fallthru
          _
        // Predicated region
        $region37: #{tpu_custom_call.1} parent=11 // pred_check
          %p432 = pneg %p235
        $region38: #{tpu_custom_call.1} parent=11 // pred_check_branch
          %434 = sbr.rel (%p432) target = $region40
        $region39: #{tpu_custom_call.1} parent=11 // pred_region
          _
        $region40: #{tpu_custom_call.1} parent=11 // pred_fallthru
          _
        // Predicated region
        $region41: #{tpu_custom_call.1} parent=11 // pred_check
          %p435 = pneg %p256
        $region42: #{tpu_custom_call.1} parent=11 // pred_check_branch
          %437 = sbr.rel (%p435) target = $region44
        $region43: #{tpu_custom_call.1} parent=11 // pred_region
          _
        $region44: #{tpu_custom_call.1} parent=11 // pred_fallthru
          _
        // Predicated region
        $region45: #{tpu_custom_call.1} parent=11 // pred_check
          %p438 = pneg %p277
        $region46: #{tpu_custom_call.1} parent=11 // pred_check_branch
          %440 = sbr.rel (%p438) target = $region48
        $region47: #{tpu_custom_call.1} parent=11 // pred_region
          _
        $region48: #{tpu_custom_call.1} parent=11 // pred_fallthru
          _
        // Predicated region
        $region49: #{tpu_custom_call.1} parent=11 // pred_check
          %p441 = pneg %p298
        $region50: #{tpu_custom_call.1} parent=11 // pred_check_branch
          %443 = sbr.rel (%p441) target = $region52
        $region51: #{tpu_custom_call.1} parent=11 // pred_region
          _
        $region52: #{tpu_custom_call.1} parent=11 // pred_fallthru
          _
        // Predicated region
        $region53: #{tpu_custom_call.1} parent=11 // pred_check
          %p444 = pneg %p319
        $region54: #{tpu_custom_call.1} parent=11 // pred_check_branch
          %446 = sbr.rel (%p444) target = $region56
        $region55: #{tpu_custom_call.1} parent=11 // pred_region
          _
        $region56: #{tpu_custom_call.1} parent=11 // pred_fallthru
          _
        // Predicated region
        $region57: #{tpu_custom_call.1} parent=11 // pred_check
          %p447 = pneg %p345
        $region58: #{tpu_custom_call.1} parent=11 // pred_check_branch
          %449 = sbr.rel (%p447) target = $region60
        $region59: #{tpu_custom_call.1} parent=11 // pred_region
          %p450 = scmp.lt.s32.totalorder %s34, 0
          %s451 = scalar_select %p450, %s34, 0
          %s452 = smul.addr %s451, 4
          %s453 = scalar_lea.vmem %s13, %s452
        $region60: #{tpu_custom_call.1} parent=11 // pred_fallthru
          _
        // Predicated region
        $region61: #{tpu_custom_call.1} parent=11 // pred_check
          %p454 = pneg %p371
        $region62: #{tpu_custom_call.1} parent=11 // pred_check_branch
          %456 = sbr.rel (%p454) target = $region64
        $region63: #{tpu_custom_call.1} parent=11 // pred_region
          %p457 = scmp.lt.s32.totalorder %s34, 0
          %s458 = scalar_select %p457, %s34, 0
          %s459 = scalar_lea.vmem %s14, %s458
        $region64: #{tpu_custom_call.1} parent=11 // pred_fallthru
          _
      $region12: #{tpu_custom_call.1} parent=5 // pred_fallthru
        _
      %p460 = scmp.lt.s32.totalorder %s24, 2
      // Predicated region
      $region65: #{tpu_custom_call.1} parent=5 // pred_check
        %p461 = pneg %p460
      $region66: #{tpu_custom_call.1} parent=5 // pred_check_branch
        %463 = sbr.rel (%p461) target = $region68
      $region67: #{tpu_custom_call.1} parent=5 // pred_region
        // Predicated region
        $region69: #{tpu_custom_call.1} parent=67 // pred_check
          %p464 = pneg %p56
        $region70: #{tpu_custom_call.1} parent=67 // pred_check_branch
          %466 = sbr.rel (%p464) target = $region72
        $region71: #{tpu_custom_call.1} parent=67 // pred_region
          %p467 = scmp.lt.s32.totalorder %s31, 1
          %s468 = scalar_select %p467, %s31, 1
          %s469 = smul.addr %s468, 8
          %s470 = scalar_lea.vmem %s0, %s469
        $region72: #{tpu_custom_call.1} parent=67 // pred_fallthru
          _
        // Predicated region
        $region73: #{tpu_custom_call.1} parent=67 // pred_check
          %p471 = pneg %p82
        $region74: #{tpu_custom_call.1} parent=67 // pred_check_branch
          %473 = sbr.rel (%p471) target = $region76
        $region75: #{tpu_custom_call.1} parent=67 // pred_region
          %p474 = scmp.lt.s32.totalorder %s31, 1
          %s475 = scalar_select %p474, %s31, 1
          %s476 = smul.addr %s475, 8
          %s477 = scalar_lea.vmem %s1, %s476
        $region76: #{tpu_custom_call.1} parent=67 // pred_fallthru
          _
      $region68: #{tpu_custom_call.1} parent=5 // pred_fallthru
        _
      %p478 = scmp.le.s32.totalorder 1, %s24
      %p479 = scmp.lt.s32.totalorder %s24, 3
      %p480 = pnand %p478, %p479
      %p481 = pneg %p480
      // Predicated region
      $region77: #{tpu_custom_call.1} parent=5 // pred_check
        _
      $region78: #{tpu_custom_call.1} parent=5 // pred_check_branch
        %483 = sbr.rel (%p480) target = $region80
      $region79: #{tpu_custom_call.1} parent=5 // pred_region
        %s484 = ssub.s32 %s24, 1
        %p485 = scmp.lt.s32.totalorder %s33, 1
        %s486 = scalar_select %p485, %s33, 1
        %s487 = smul.addr %s486, 8
        %s488 = scalar_lea.vmem %s0, %s487
        %p489 = pneg %p62
        %p490 = pneg %p59
        %p491 = scmp.lt.s32.totalorder %s33, 1
        %s492 = scalar_select %p491, %s33, 1
        %s493 = smul.addr %s492, 8
        %s494 = scalar_lea.vmem %s1, %s493
        %p495 = pneg %p88
        %p496 = pneg %p85
        %p497 = pneg %p109
        %p498 = pneg %p106
        %p499 = pneg %p130
        %p500 = pneg %p127
        %p501 = pneg %p151
        %p502 = pneg %p148
        %p503 = pneg %p172
        %p504 = pneg %p169
        %p505 = pneg %p193
        %p506 = pneg %p190
        %p507 = pneg %p214
        %p508 = pneg %p211
        %p509 = pneg %p235
        %p510 = pneg %p232
        %p511 = pneg %p256
        %p512 = pneg %p253
        %p513 = pneg %p277
        %p514 = pneg %p274
        %p515 = pneg %p298
        %p516 = pneg %p295
        %p517 = pneg %p319
        %p518 = pneg %p316
        %p519 = scmp.lt.s32.totalorder %s34, 0
        %s520 = scalar_select %p519, %s34, 0
        %s521 = smul.addr %s520, 4
        %s522 = scalar_lea.vmem %s13, %s521
        %p523 = pneg %p345
        %p524 = pneg %p342
        %p525 = scmp.lt.s32.totalorder %s34, 0
        %s526 = scalar_select %p525, %s34, 0
        %s527 = scalar_lea.vmem %s14, %s526
        %p528 = pneg %p371
        %p529 = pneg %p368
        %p530 = pneg %p399
        %p531 = pneg %p396
        %s532 = sand.u32 %s386, 1
        %s533 = scalar_lea.sflag [#allocation4], %s532
        %s534 = sand.u32 %s386, 1
        %s535 = smul.addr %s534, 8
        %s536 = scalar_lea.vmem [#allocation3], %s535
        %p537 = scmp.lt.s32.totalorder %s33, 1
        %s538 = scalar_select %p537, %s33, 1
        %s539 = smul.addr %s538, 8
        %s540 = scalar_lea.vmem %s0, %s539
        %p541 = scmp.lt.s32.totalorder %s33, 1
        %s542 = scalar_select %p541, %s33, 1
        %s543 = smul.addr %s542, 8
        %s544 = scalar_lea.vmem %s1, %s543
        %p545 = scmp.lt.s32.totalorder %s34, 0
        %s546 = scalar_select %p545, %s34, 0
        %s547 = smul.addr %s546, 4
        %s548 = scalar_lea.vmem %s13, %s547
        %p549 = scmp.lt.s32.totalorder %s34, 0
        %s550 = scalar_select %p549, %s34, 0
        %s551 = scalar_lea.vmem %s14, %s550
        %p553 = scmp.eq.s32.totalorder %s34, 0
        // Predicated region
        $region81: #{tpu_custom_call.1} parent=79 // pred_check
          %p554 = pneg %p553
        $region82: #{tpu_custom_call.1} parent=79 // pred_check_branch
          %556 = sbr.rel (%p554) target = $region84
        $region83: #{tpu_custom_call.1} parent=79 // pred_region
          %v557 = vld [vmem:[%s540] sm:$0xff]
          %v558 = vld [vmem:[%s544] sm:$0xff]
          %v559 = vld [vmem:[%s7] sm:$0x1]
          %v560 = vpack.c.bf16 %v557, %v557
          %v561 = vld [vmem:[%s2] sm:$0xf]
          %v562 = vld [vmem:[%s2 + $0x4] sm:$0xf]
          %v563 = vld [vmem:[%s2 + $0x8] sm:$0xf]
          %v564 = vld [vmem:[%s2 + $0xc] sm:$0xf]
          %v566 = vlaneseq
          %v567 = vshrl.u32 %v566, 7
          %v568 = vsub.s32 0, %v567
          %v569 = vrot.slane %v559, %v568
          %v575 = vunpack.c.l.b16 %v561
          %v576 = vunpack.c.l.b16 %v562
          %v577 = vunpack.c.l.b16 %v563
          %v578 = vunpack.c.l.b16 %v564
          %v579 = vpack.c.b16 %v576, %v575
          %v580 = vpack.c.b16 %v578, %v577
          %vm583 = vcmask 261120
          %v585 = vsel %vm583, %v560, 0
          %587 = vmatprep.subr.bf16.mxu0 0
          %588 = vmatpush1.bf16.msra.mxu0 0
          %589 = vmatprep.subr.bf16.mxu0 0
          %590 = vmatpush1.bf16.msra.mxu0 0
          %591 = vmatprep.subr.bf16.mxu0 0
          %592 = vmatpush1.bf16.msra.mxu0 0
          %593 = vmatprep.subr.bf16.mxu0 0
          %594 = vmatpush1.bf16.msra.mxu0 0
          %595 = vmatprep.subr.bf16.mxu0 0
          %596 = vmatpush1.bf16.msra.mxu0 0
          %597 = vmatprep.subr.bf16.mxu0 0
          %598 = vmatpush1.bf16.msra.mxu0 0
          %599 = vmatprep.subr.bf16.mxu0 0
          %600 = vmatpush1.bf16.msra.mxu0 %v580
          %601 = vmatprep.subr.bf16.mxu0 0
          %602 = vmatpush1.bf16.msra.mxu0 %v579
          %603 = vmatprep.subr.bf16.mxu0 0
          %604 = vmatpush2.bf16.msra.mxu0 0
          %605 = vmatprep.subr.bf16.mxu0 0
          %606 = vmatpush2.bf16.msra.mxu0 0
          %607 = vmatprep.subr.bf16.mxu0 0
          %608 = vmatpush2.bf16.msra.mxu0 0
          %609 = vmatprep.subr.bf16.mxu0 0
          %610 = vmatpush2.bf16.msra.mxu0 0
          %611 = vmatprep.subr.bf16.mxu0 0
          %612 = vmatpush2.bf16.msra.mxu0 0
          %613 = vmatprep.subr.bf16.mxu0 0
          %614 = vmatpush2.bf16.msra.mxu0 0
          %615 = vmatprep.subr.bf16.mxu0 0
          %616 = vmatpush2.bf16.msra.mxu0 0
          %617 = vmatprep.subr.bf16.mxu0 0
          %618 = vmatpush2.bf16.msra.mxu0 0
          %619 = vmatprep.mubr.bf16.mxu0 0
          %620 = vmatmul.mubr.bf16.gmra.mxu0 %v585
          %v621 = vpop.f32.mrf.mxu0
          %v622 = vadd.f32 %v569, %v621
          %v623 = vpop.f32.mrf.mxu0
          %v624 = vpop.f32.mrf.mxu0
          %v625 = vpop.f32.mrf.mxu0
          %626 = vdwg.mxu0
          %v627 = vmul.f32 %v622, 0.17677669
          %v628 = vpack.c.bf16 %v627, %v627
          %v629 = vpack.c.bf16 %v622, %v622
          %631 = vrot.lane.b32.xlu0 %v629, 96
          %v632 = vpop.permute.xlu0 %631
          %v634 = vsel %vm583, %v628, 0
          %v637 = vsel %vm583, %v632, 0
          %639 = vmatprep.subr.bf16.mxu0 0
          %640 = vmatpush1.bf16.xpose.msra.mxu0 0
          %641 = vmatprep.subr.bf16.mxu0 0
          %642 = vmatpush1.bf16.xpose.msra.mxu0 0
          %643 = vmatprep.subr.bf16.mxu0 0
          %644 = vmatpush1.bf16.xpose.msra.mxu0 0
          %645 = vmatprep.subr.bf16.mxu0 0
          %646 = vmatpush1.bf16.xpose.msra.mxu0 0
          %647 = vmatprep.subr.bf16.mxu0 0
          %648 = vmatpush1.bf16.xpose.msra.mxu0 0
          %649 = vmatprep.subr.bf16.mxu0 0
          %650 = vmatpush1.bf16.xpose.msra.mxu0 0
          %651 = vmatprep.subr.bf16.mxu0 0
          %652 = vmatpush1.bf16.xpose.msra.mxu0 0
          %653 = vmatprep.subr.bf16.mxu0 0
          %654 = vmatpush1.bf16.xpose.msra.mxu0 %v637
          %655 = vmatprep.subr.bf16.mxu0 0
          %656 = vmatpush2.bf16.xpose.msra.mxu0 0
          %657 = vmatprep.subr.bf16.mxu0 0
          %658 = vmatpush2.bf16.xpose.msra.mxu0 0
          %659 = vmatprep.subr.bf16.mxu0 0
          %660 = vmatpush2.bf16.xpose.msra.mxu0 0
          %661 = vmatprep.subr.bf16.mxu0 0
          %662 = vmatpush2.bf16.xpose.msra.mxu0 0
          %663 = vmatprep.subr.bf16.mxu0 0
          %664 = vmatpush2.bf16.xpose.msra.mxu0 0
          %665 = vmatprep.subr.bf16.mxu0 0
          %666 = vmatpush2.bf16.xpose.msra.mxu0 0
          %667 = vmatprep.subr.bf16.mxu0 0
          %668 = vmatpush2.bf16.xpose.msra.mxu0 0
          %669 = vmatprep.subr.bf16.mxu0 0
          %670 = vmatpush2.bf16.xpose.msra.mxu0 0
          %671 = vmatprep.mubr.bf16.mxu0 0
          %672 = vmatmul.mubr.bf16.gmra.mxu0 %v634
          %v673 = vpop.f32.mrf.mxu0
          %v674 = vadd.f32 0.0, %v673
          %v675 = vpop.f32.mrf.mxu0
          %v676 = vpop.f32.mrf.mxu0
          %v677 = vpop.f32.mrf.mxu0
          %678 = vdwg.mxu0
          %v679 = vlaneseq
          %v680 = vshrl.u32 %v679, 7
          %v681 = vlaneseq
          %v682 = vand.u32 %v681, 127
          %vm683 = vcmp.le.s32.totalorder %v682, %v680
          %v684 = vsel %vm683, %v674, -1e+30
          %vm685 = vcmask 64512
          %v686 = vsel %vm685, %v684, -inf
          %687 = vmax.xlane.f32.xlu0 %v686
          %v688 = vpop.xlane.xlu0 %687
          %v689 = vsub.f32 %v684, %v688
          %v690 = vmul.f32 %v689, 1.442695
          %v691 = vpow.pop %v690
          %v692 = vsel %vm685, %v691, 0.0
          %693 = vadd.xlane.f32.xlu0 %v692
          %v694 = vpop.xlane.xlu0 %693
          %v695 = vpack.c.bf16 %v691, %v691
          %696 = vrot.lane.b32.xlu0 %v629, 64
          %v697 = vpop.permute.xlu0 %696
          %v699 = vsel %vm685, %v695, 0
          %vm701 = vcmask 1043456
          %v703 = vsel %vm701, %v697, 0
          %705 = vmatprep.subr.bf16.mxu0 0
          %706 = vmatpush1.bf16.msra.mxu0 0
          %707 = vmatprep.subr.bf16.mxu0 0
          %708 = vmatpush1.bf16.msra.mxu0 0
          %709 = vmatprep.subr.bf16.mxu0 0
          %710 = vmatpush1.bf16.msra.mxu0 0
          %711 = vmatprep.subr.bf16.mxu0 0
          %712 = vmatpush1.bf16.msra.mxu0 0
          %713 = vmatprep.subr.bf16.mxu0 0
          %714 = vmatpush1.bf16.msra.mxu0 0
          %715 = vmatprep.subr.bf16.mxu0 0
          %716 = vmatpush1.bf16.msra.mxu0 0
          %717 = vmatprep.subr.bf16.mxu0 0
          %718 = vmatpush1.bf16.msra.mxu0 0
          %719 = vmatprep.subr.bf16.mxu0 0
          %720 = vmatpush1.bf16.msra.mxu0 %v703
          %721 = vmatprep.subr.bf16.mxu0 0
          %722 = vmatpush2.bf16.msra.mxu0 0
          %723 = vmatprep.subr.bf16.mxu0 0
          %724 = vmatpush2.bf16.msra.mxu0 0
          %725 = vmatprep.subr.bf16.mxu0 0
          %726 = vmatpush2.bf16.msra.mxu0 0
          %727 = vmatprep.subr.bf16.mxu0 0
          %728 = vmatpush2.bf16.msra.mxu0 0
          %729 = vmatprep.subr.bf16.mxu0 0
          %730 = vmatpush2.bf16.msra.mxu0 0
          %731 = vmatprep.subr.bf16.mxu0 0
          %732 = vmatpush2.bf16.msra.mxu0 0
          %733 = vmatprep.subr.bf16.mxu0 0
          %734 = vmatpush2.bf16.msra.mxu0 0
          %735 = vmatprep.subr.bf16.mxu0 0
          %736 = vmatpush2.bf16.msra.mxu0 0
          %737 = vmatprep.mubr.bf16.mxu0 0
          %738 = vmatmul.mubr.bf16.gmra.mxu0 %v699
          %v739 = vpop.f32.mrf.mxu0
          %v740 = vadd.f32 0.0, %v739
          %v741 = vpop.f32.mrf.mxu0
          %v742 = vpop.f32.mrf.mxu0
          %v743 = vpop.f32.mrf.mxu0
          %744 = vdwg.mxu0
          %v745 = vrcp.pop %v694
          %v746 = vmul.f32 %v740, %v745
          %v747 = vld [vmem:[%s9 + $0x1] sm:$0x1]
          %v748 = vpack.c.bf16 %v746, %v746
          %v749 = vld [vmem:[%s3] sm:$0xf]
          %v750 = vld [vmem:[%s3 + $0x4] sm:$0xf]
          %v751 = vld [vmem:[%s3 + $0x8] sm:$0xf]
          %v752 = vld [vmem:[%s3 + $0xc] sm:$0xf]
          %v753 = vlaneseq
          %v754 = vshrl.u32 %v753, 7
          %v755 = vsub.s32 0, %v754
          %v756 = vrot.slane %v747, %v755
          %v761 = vunpack.c.l.b16 %v749
          %v762 = vunpack.c.l.b16 %v750
          %v763 = vunpack.c.l.b16 %v751
          %v764 = vunpack.c.l.b16 %v752
          %v765 = vpack.c.b16 %v762, %v761
          %v766 = vpack.c.b16 %v764, %v763
          %v770 = vsel %vm583, %v748, 0
          %772 = vmatprep.subr.bf16.mxu0 0
          %773 = vmatpush1.bf16.msra.mxu0 0
          %774 = vmatprep.subr.bf16.mxu0 0
          %775 = vmatpush1.bf16.msra.mxu0 0
          %776 = vmatprep.subr.bf16.mxu0 0
          %777 = vmatpush1.bf16.msra.mxu0 0
          %778 = vmatprep.subr.bf16.mxu0 0
          %779 = vmatpush1.bf16.msra.mxu0 0
          %780 = vmatprep.subr.bf16.mxu0 0
          %781 = vmatpush1.bf16.msra.mxu0 0
          %782 = vmatprep.subr.bf16.mxu0 0
          %783 = vmatpush1.bf16.msra.mxu0 0
          %784 = vmatprep.subr.bf16.mxu0 0
          %785 = vmatpush1.bf16.msra.mxu0 %v766
          %786 = vmatprep.subr.bf16.mxu0 0
          %787 = vmatpush1.bf16.msra.mxu0 %v765
          %788 = vmatprep.subr.bf16.mxu0 0
          %789 = vmatpush2.bf16.msra.mxu0 0
          %790 = vmatprep.subr.bf16.mxu0 0
          %791 = vmatpush2.bf16.msra.mxu0 0
          %792 = vmatprep.subr.bf16.mxu0 0
          %793 = vmatpush2.bf16.msra.mxu0 0
          %794 = vmatprep.subr.bf16.mxu0 0
          %795 = vmatpush2.bf16.msra.mxu0 0
          %796 = vmatprep.subr.bf16.mxu0 0
          %797 = vmatpush2.bf16.msra.mxu0 0
          %798 = vmatprep.subr.bf16.mxu0 0
          %799 = vmatpush2.bf16.msra.mxu0 0
          %800 = vmatprep.subr.bf16.mxu0 0
          %801 = vmatpush2.bf16.msra.mxu0 0
          %802 = vmatprep.subr.bf16.mxu0 0
          %803 = vmatpush2.bf16.msra.mxu0 0
          %804 = vmatprep.mubr.bf16.mxu0 0
          %805 = vmatmul.mubr.bf16.gmra.mxu0 %v770
          %v806 = vpop.f32.mrf.mxu0
          %v807 = vadd.f32 %v756, %v806
          %v808 = vpop.f32.mrf.mxu0
          %v809 = vpop.f32.mrf.mxu0
          %v810 = vpop.f32.mrf.mxu0
          %811 = vdwg.mxu0
          %v812 = vadd.f32 %v557, %v807
          %v813 = vld [vmem:[%s9 + $0x3] sm:$0x1]
          %v814 = vld [vmem:[%s9 + $0x4] sm:$0x1]
          %v815 = vsel %vm583, %v812, 0.0
          %816 = vadd.xlane.f32.xlu0 %v815
          %v817 = vpop.xlane.xlu0 %816
          %v818 = vrcp.pop 32.0
          %v819 = vmul.f32 %v817, %v818
          %v820 = vsub.f32 %v812, %v819
          %v821 = vmul.f32 %v820, %v820
          %v822 = vsel %vm583, %v821, 0.0
          %823 = vadd.xlane.f32.xlu0 %v822
          %v824 = vpop.xlane.xlu0 %823
          %v825 = vmul.f32 %v824, %v818
          %v826 = vadd.f32 %v825, 1e-05
          %v827 = vrsqrt.pop %v826
          %v828 = vmul.f32 %v820, %v827
          %v829 = vlaneseq
          %v830 = vshrl.u32 %v829, 7
          %v831 = vsub.s32 0, %v830
          %v832 = vrot.slane %v813, %v831
          %v833 = vmul.f32 %v828, %v832
          %v834 = vlaneseq
          %v835 = vshrl.u32 %v834, 7
          %v836 = vsub.s32 0, %v835
          %v837 = vrot.slane %v814, %v836
          %v838 = vadd.f32 %v833, %v837
          %v839 = vld [vmem:[%s9] sm:$0x1]
          %v840 = vpack.c.bf16 %v838, %v838
          %v841 = vld [vmem:[%s4] sm:$0xf]
          %v842 = vld [vmem:[%s4 + $0x4] sm:$0xf]
          %v843 = vld [vmem:[%s4 + $0x8] sm:$0xf]
          %v844 = vld [vmem:[%s4 + $0xc] sm:$0xf]
          %v845 = vlaneseq
          %v846 = vshrl.u32 %v845, 7
          %v847 = vsub.s32 0, %v846
          %v848 = vrot.slane %v839, %v847
          %v853 = vunpack.c.l.b16 %v841
          %v854 = vunpack.c.l.b16 %v842
          %v855 = vunpack.c.l.b16 %v843
          %v856 = vunpack.c.l.b16 %v844
          %v857 = vpack.c.b16 %v854, %v853
          %v858 = vpack.c.b16 %v856, %v855
          %v862 = vsel %vm583, %v840, 0
          %864 = vmatprep.subr.bf16.mxu0 0
          %865 = vmatpush1.bf16.msra.mxu0 0
          %866 = vmatprep.subr.bf16.mxu0 0
          %867 = vmatpush1.bf16.msra.mxu0 0
          %868 = vmatprep.subr.bf16.mxu0 0
          %869 = vmatpush1.bf16.msra.mxu0 0
          %870 = vmatprep.subr.bf16.mxu0 0
          %871 = vmatpush1.bf16.msra.mxu0 0
          %872 = vmatprep.subr.bf16.mxu0 0
          %873 = vmatpush1.bf16.msra.mxu0 0
          %874 = vmatprep.subr.bf16.mxu0 0
          %875 = vmatpush1.bf16.msra.mxu0 0
          %876 = vmatprep.subr.bf16.mxu0 0
          %877 = vmatpush1.bf16.msra.mxu0 %v858
          %878 = vmatprep.subr.bf16.mxu0 0
          %879 = vmatpush1.bf16.msra.mxu0 %v857
          %880 = vmatprep.subr.bf16.mxu0 0
          %881 = vmatpush2.bf16.msra.mxu0 0
          %882 = vmatprep.subr.bf16.mxu0 0
          %883 = vmatpush2.bf16.msra.mxu0 0
          %884 = vmatprep.subr.bf16.mxu0 0
          %885 = vmatpush2.bf16.msra.mxu0 0
          %886 = vmatprep.subr.bf16.mxu0 0
          %887 = vmatpush2.bf16.msra.mxu0 0
          %888 = vmatprep.subr.bf16.mxu0 0
          %889 = vmatpush2.bf16.msra.mxu0 0
          %890 = vmatprep.subr.bf16.mxu0 0
          %891 = vmatpush2.bf16.msra.mxu0 0
          %892 = vmatprep.subr.bf16.mxu0 0
          %893 = vmatpush2.bf16.msra.mxu0 0
          %894 = vmatprep.subr.bf16.mxu0 0
          %895 = vmatpush2.bf16.msra.mxu0 0
          %896 = vmatprep.mubr.bf16.mxu0 0
          %897 = vmatmul.mubr.bf16.gmra.mxu0 %v862
          %v898 = vpop.f32.mrf.mxu0
          %v899 = vadd.f32 %v848, %v898
          %v900 = vpop.f32.mrf.mxu0
          %v901 = vpop.f32.mrf.mxu0
          %v902 = vpop.f32.mrf.mxu0
          %903 = vdwg.mxu0
          %v904 = vld [vmem:[%s8] sm:$0x1]
          %v905 = vpack.c.bf16 %v558, %v558
          %v906 = vld [vmem:[%s5] sm:$0xf]
          %v907 = vld [vmem:[%s5 + $0x4] sm:$0xf]
          %v908 = vld [vmem:[%s5 + $0x8] sm:$0xf]
          %v909 = vld [vmem:[%s5 + $0xc] sm:$0xf]
          %v911 = vlaneseq
          %v912 = vshrl.u32 %v911, 7
          %v913 = vsub.s32 0, %v912
          %v914 = vrot.slane %v904, %v913
          %v920 = vunpack.c.l.b16 %v906
          %v921 = vunpack.c.l.b16 %v907
          %v922 = vunpack.c.l.b16 %v908
          %v923 = vunpack.c.l.b16 %v909
          %v924 = vpack.c.b16 %v921, %v920
          %v925 = vpack.c.b16 %v923, %v922
          %v929 = vsel %vm583, %v905, 0
          %931 = vmatprep.subr.bf16.mxu0 0
          %932 = vmatpush1.bf16.msra.mxu0 0
          %933 = vmatprep.subr.bf16.mxu0 0
          %934 = vmatpush1.bf16.msra.mxu0 0
          %935 = vmatprep.subr.bf16.mxu0 0
          %936 = vmatpush1.bf16.msra.mxu0 0
          %937 = vmatprep.subr.bf16.mxu0 0
          %938 = vmatpush1.bf16.msra.mxu0 0
          %939 = vmatprep.subr.bf16.mxu0 0
          %940 = vmatpush1.bf16.msra.mxu0 0
          %941 = vmatprep.subr.bf16.mxu0 0
          %942 = vmatpush1.bf16.msra.mxu0 0
          %943 = vmatprep.subr.bf16.mxu0 0
          %944 = vmatpush1.bf16.msra.mxu0 %v925
          %945 = vmatprep.subr.bf16.mxu0 0
          %946 = vmatpush1.bf16.msra.mxu0 %v924
          %947 = vmatprep.subr.bf16.mxu0 0
          %948 = vmatpush2.bf16.msra.mxu0 0
          %949 = vmatprep.subr.bf16.mxu0 0
          %950 = vmatpush2.bf16.msra.mxu0 0
          %951 = vmatprep.subr.bf16.mxu0 0
          %952 = vmatpush2.bf16.msra.mxu0 0
          %953 = vmatprep.subr.bf16.mxu0 0
          %954 = vmatpush2.bf16.msra.mxu0 0
          %955 = vmatprep.subr.bf16.mxu0 0
          %956 = vmatpush2.bf16.msra.mxu0 0
          %957 = vmatprep.subr.bf16.mxu0 0
          %958 = vmatpush2.bf16.msra.mxu0 0
          %959 = vmatprep.subr.bf16.mxu0 0
          %960 = vmatpush2.bf16.msra.mxu0 0
          %961 = vmatprep.subr.bf16.mxu0 0
          %962 = vmatpush2.bf16.msra.mxu0 0
          %963 = vmatprep.mubr.bf16.mxu0 0
          %964 = vmatmul.mubr.bf16.gmra.mxu0 %v929
          %v965 = vpop.f32.mrf.mxu0
          %v966 = vadd.f32 %v914, %v965
          %v967 = vpop.f32.mrf.mxu0
          %v968 = vpop.f32.mrf.mxu0
          %v969 = vpop.f32.mrf.mxu0
          %970 = vdwg.mxu0
          %v971 = vmul.f32 %v899, 0.17677669
          %v972 = vpack.c.bf16 %v971, %v971
          %v973 = vpack.c.bf16 %v966, %v966
          %v975 = vsel %vm583, %v972, 0
          %v978 = vsel %vm583, %v973, 0
          %980 = vmatprep.subr.bf16.mxu0 0
          %981 = vmatpush1.bf16.xpose.msra.mxu0 0
          %982 = vmatprep.subr.bf16.mxu0 0
          %983 = vmatpush1.bf16.xpose.msra.mxu0 0
          %984 = vmatprep.subr.bf16.mxu0 0
          %985 = vmatpush1.bf16.xpose.msra.mxu0 0
          %986 = vmatprep.subr.bf16.mxu0 0
          %987 = vmatpush1.bf16.xpose.msra.mxu0 0
          %988 = vmatprep.subr.bf16.mxu0 0
          %989 = vmatpush1.bf16.xpose.msra.mxu0 0
          %990 = vmatprep.subr.bf16.mxu0 0
          %991 = vmatpush1.bf16.xpose.msra.mxu0 0
          %992 = vmatprep.subr.bf16.mxu0 0
          %993 = vmatpush1.bf16.xpose.msra.mxu0 0
          %994 = vmatprep.subr.bf16.mxu0 0
          %995 = vmatpush1.bf16.xpose.msra.mxu0 %v978
          %996 = vmatprep.subr.bf16.mxu0 0
          %997 = vmatpush2.bf16.xpose.msra.mxu0 0
          %998 = vmatprep.subr.bf16.mxu0 0
          %999 = vmatpush2.bf16.xpose.msra.mxu0 0
          %1000 = vmatprep.subr.bf16.mxu0 0
          %1001 = vmatpush2.bf16.xpose.msra.mxu0 0
          %1002 = vmatprep.subr.bf16.mxu0 0
          %1003 = vmatpush2.bf16.xpose.msra.mxu0 0
          %1004 = vmatprep.subr.bf16.mxu0 0
          %1005 = vmatpush2.bf16.xpose.msra.mxu0 0
          %1006 = vmatprep.subr.bf16.mxu0 0
          %1007 = vmatpush2.bf16.xpose.msra.mxu0 0
          %1008 = vmatprep.subr.bf16.mxu0 0
          %1009 = vmatpush2.bf16.xpose.msra.mxu0 0
          %1010 = vmatprep.subr.bf16.mxu0 0
          %1011 = vmatpush2.bf16.xpose.msra.mxu0 0
          %1012 = vmatprep.mubr.bf16.mxu0 0
          %1013 = vmatmul.mubr.bf16.gmra.mxu0 %v975
          %v1014 = vpop.f32.mrf.mxu0
          %v1015 = vadd.f32 0.0, %v1014
          %v1016 = vpop.f32.mrf.mxu0
          %v1017 = vpop.f32.mrf.mxu0
          %v1018 = vpop.f32.mrf.mxu0
          %1019 = vdwg.mxu0
          %v1020 = vsel %vm685, %v1015, -inf
          %1021 = vmax.xlane.f32.xlu0 %v1020
          %v1022 = vpop.xlane.xlu0 %1021
          %v1023 = vsub.f32 %v1015, %v1022
          %v1024 = vmul.f32 %v1023, 1.442695
          %v1025 = vpow.pop %v1024
          %v1026 = vsel %vm685, %v1025, 0.0
          %1027 = vadd.xlane.f32.xlu0 %v1026
          %v1028 = vpop.xlane.xlu0 %1027
          %v1029 = vpack.c.bf16 %v1025, %v1025
          %1031 = vrot.lane.b32.xlu0 %v973, 96
          %v1032 = vpop.permute.xlu0 %1031
          %v1034 = vsel %vm685, %v1029, 0
          %v1037 = vsel %vm701, %v1032, 0
          %1039 = vmatprep.subr.bf16.mxu0 0
          %1040 = vmatpush1.bf16.msra.mxu0 0
          %1041 = vmatprep.subr.bf16.mxu0 0
          %1042 = vmatpush1.bf16.msra.mxu0 0
          %1043 = vmatprep.subr.bf16.mxu0 0
          %1044 = vmatpush1.bf16.msra.mxu0 0
          %1045 = vmatprep.subr.bf16.mxu0 0
          %1046 = vmatpush1.bf16.msra.mxu0 0
          %1047 = vmatprep.subr.bf16.mxu0 0
          %1048 = vmatpush1.bf16.msra.mxu0 0
          %1049 = vmatprep.subr.bf16.mxu0 0
          %1050 = vmatpush1.bf16.msra.mxu0 0
          %1051 = vmatprep.subr.bf16.mxu0 0
          %1052 = vmatpush1.bf16.msra.mxu0 0
          %1053 = vmatprep.subr.bf16.mxu0 0
          %1054 = vmatpush1.bf16.msra.mxu0 %v1037
          %1055 = vmatprep.subr.bf16.mxu0 0
          %1056 = vmatpush2.bf16.msra.mxu0 0
          %1057 = vmatprep.subr.bf16.mxu0 0
          %1058 = vmatpush2.bf16.msra.mxu0 0
          %1059 = vmatprep.subr.bf16.mxu0 0
          %1060 = vmatpush2.bf16.msra.mxu0 0
          %1061 = vmatprep.subr.bf16.mxu0 0
          %1062 = vmatpush2.bf16.msra.mxu0 0
          %1063 = vmatprep.subr.bf16.mxu0 0
          %1064 = vmatpush2.bf16.msra.mxu0 0
          %1065 = vmatprep.subr.bf16.mxu0 0
          %1066 = vmatpush2.bf16.msra.mxu0 0
          %1067 = vmatprep.subr.bf16.mxu0 0
          %1068 = vmatpush2.bf16.msra.mxu0 0
          %1069 = vmatprep.subr.bf16.mxu0 0
          %1070 = vmatpush2.bf16.msra.mxu0 0
          %1071 = vmatprep.mubr.bf16.mxu0 0
          %1072 = vmatmul.mubr.bf16.gmra.mxu0 %v1034
          %v1073 = vpop.f32.mrf.mxu0
          %v1074 = vadd.f32 0.0, %v1073
          %v1075 = vpop.f32.mrf.mxu0
          %v1076 = vpop.f32.mrf.mxu0
          %v1077 = vpop.f32.mrf.mxu0
          %1078 = vdwg.mxu0
          %v1079 = vrcp.pop %v1028
          %v1080 = vmul.f32 %v1074, %v1079
          %v1081 = vld [vmem:[%s9 + $0x2] sm:$0x1]
          %v1082 = vpack.c.bf16 %v1080, %v1080
          %v1083 = vld [vmem:[%s6] sm:$0xf]
          %v1084 = vld [vmem:[%s6 + $0x4] sm:$0xf]
          %v1085 = vld [vmem:[%s6 + $0x8] sm:$0xf]
          %v1086 = vld [vmem:[%s6 + $0xc] sm:$0xf]
          %v1087 = vlaneseq
          %v1088 = vshrl.u32 %v1087, 7
          %v1089 = vsub.s32 0, %v1088
          %v1090 = vrot.slane %v1081, %v1089
          %v1095 = vunpack.c.l.b16 %v1083
          %v1096 = vunpack.c.l.b16 %v1084
          %v1097 = vunpack.c.l.b16 %v1085
          %v1098 = vunpack.c.l.b16 %v1086
          %v1099 = vpack.c.b16 %v1096, %v1095
          %v1100 = vpack.c.b16 %v1098, %v1097
          %v1104 = vsel %vm583, %v1082, 0
          %1106 = vmatprep.subr.bf16.mxu0 0
          %1107 = vmatpush1.bf16.msra.mxu0 0
          %1108 = vmatprep.subr.bf16.mxu0 0
          %1109 = vmatpush1.bf16.msra.mxu0 0
          %1110 = vmatprep.subr.bf16.mxu0 0
          %1111 = vmatpush1.bf16.msra.mxu0 0
          %1112 = vmatprep.subr.bf16.mxu0 0
          %1113 = vmatpush1.bf16.msra.mxu0 0
          %1114 = vmatprep.subr.bf16.mxu0 0
          %1115 = vmatpush1.bf16.msra.mxu0 0
          %1116 = vmatprep.subr.bf16.mxu0 0
          %1117 = vmatpush1.bf16.msra.mxu0 0
          %1118 = vmatprep.subr.bf16.mxu0 0
          %1119 = vmatpush1.bf16.msra.mxu0 %v1100
          %1120 = vmatprep.subr.bf16.mxu0 0
          %1121 = vmatpush1.bf16.msra.mxu0 %v1099
          %1122 = vmatprep.subr.bf16.mxu0 0
          %1123 = vmatpush2.bf16.msra.mxu0 0
          %1124 = vmatprep.subr.bf16.mxu0 0
          %1125 = vmatpush2.bf16.msra.mxu0 0
          %1126 = vmatprep.subr.bf16.mxu0 0
          %1127 = vmatpush2.bf16.msra.mxu0 0
          %1128 = vmatprep.subr.bf16.mxu0 0
          %1129 = vmatpush2.bf16.msra.mxu0 0
          %1130 = vmatprep.subr.bf16.mxu0 0
          %1131 = vmatpush2.bf16.msra.mxu0 0
          %1132 = vmatprep.subr.bf16.mxu0 0
          %1133 = vmatpush2.bf16.msra.mxu0 0
          %1134 = vmatprep.subr.bf16.mxu0 0
          %1135 = vmatpush2.bf16.msra.mxu0 0
          %1136 = vmatprep.subr.bf16.mxu0 0
          %1137 = vmatpush2.bf16.msra.mxu0 0
          %1138 = vmatprep.mubr.bf16.mxu0 0
          %1139 = vmatmul.mubr.bf16.gmra.mxu0 %v1104
          %v1140 = vpop.f32.mrf.mxu0
          %v1141 = vadd.f32 %v1090, %v1140
          %v1142 = vpop.f32.mrf.mxu0
          %v1143 = vpop.f32.mrf.mxu0
          %v1144 = vpop.f32.mrf.mxu0
          %1145 = vdwg.mxu0
          %v1146 = vadd.f32 %v838, %v1141
          %v1147 = vld [vmem:[%s9 + $0x5] sm:$0x1]
          %v1148 = vld [vmem:[%s9 + $0x6] sm:$0x1]
          %v1149 = vsel %vm583, %v1146, 0.0
          %1150 = vadd.xlane.f32.xlu0 %v1149
          %v1151 = vpop.xlane.xlu0 %1150
          %v1152 = vmul.f32 %v1151, %v818
          %v1153 = vsub.f32 %v1146, %v1152
          %v1154 = vmul.f32 %v1153, %v1153
          %v1155 = vsel %vm583, %v1154, 0.0
          %1156 = vadd.xlane.f32.xlu0 %v1155
          %v1157 = vpop.xlane.xlu0 %1156
          %v1158 = vmul.f32 %v1157, %v818
          %v1159 = vadd.f32 %v1158, 1e-05
          %v1160 = vrsqrt.pop %v1159
          %v1161 = vmul.f32 %v1153, %v1160
          %v1162 = vlaneseq
          %v1163 = vshrl.u32 %v1162, 7
          %v1164 = vsub.s32 0, %v1163
          %v1165 = vrot.slane %v1147, %v1164
          %v1166 = vmul.f32 %v1161, %v1165
          %v1167 = vlaneseq
          %v1168 = vshrl.u32 %v1167, 7
          %v1169 = vsub.s32 0, %v1168
          %v1170 = vrot.slane %v1148, %v1169
          %v1171 = vadd.f32 %v1166, %v1170
          %v1172 = vpack.c.bf16 %v1171, %v1171
          %v1173 = vld [vmem:[%s10] sm:$0xff]
          %v1174 = vld [vmem:[%s10 + $0x8] sm:$0xff]
          %v1175 = vld [vmem:[%s10 + $0x40] sm:$0xff]
          %v1176 = vld [vmem:[%s10 + $0x48] sm:$0xff]
          %v1177 = vld [vmem:[%s10 + $0x80] sm:$0xff]
          %v1178 = vld [vmem:[%s10 + $0x88] sm:$0xff]
          %v1179 = vld [vmem:[%s10 + $0xc0] sm:$0xff]
          %v1180 = vld [vmem:[%s10 + $0xc8] sm:$0xff]
          %v1181 = vld [vmem:[%s11] sm:$0xf]
          %v1183 = vlaneseq
          %v1184 = vshrl.u32 %v1183, 7
          %v1185 = vsub.s32 0, %v1184
          %v1186 = vrot.slane %v1181, %v1185
          %v1187 = vlaneseq
          %v1188 = vshrl.u32 %v1187, 7
          %v1189 = vsub.s32 1, %v1188
          %v1190 = vrot.slane %v1181, %v1189
          %v1191 = vlaneseq
          %v1192 = vshrl.u32 %v1191, 7
          %v1193 = vsub.s32 2, %v1192
          %v1194 = vrot.slane %v1181, %v1193
          %v1195 = vlaneseq
          %v1196 = vshrl.u32 %v1195, 7
          %v1197 = vsub.s32 3, %v1196
          %v1198 = vrot.slane %v1181, %v1197
          %v1211 = vunpack.c.l.b16 %v1173
          %v1212 = vunpack.c.h.b16 %v1173
          %v1213 = vunpack.c.l.b16 %v1174
          %v1214 = vunpack.c.h.b16 %v1174
          %v1215 = vunpack.c.l.b16 %v1175
          %v1216 = vunpack.c.h.b16 %v1175
          %v1217 = vunpack.c.l.b16 %v1176
          %v1218 = vunpack.c.h.b16 %v1176
          %v1219 = vunpack.c.l.b16 %v1177
          %v1220 = vunpack.c.h.b16 %v1177
          %v1221 = vunpack.c.l.b16 %v1178
          %v1222 = vunpack.c.h.b16 %v1178
          %v1223 = vunpack.c.l.b16 %v1179
          %v1224 = vunpack.c.h.b16 %v1179
          %v1225 = vunpack.c.l.b16 %v1180
          %v1226 = vunpack.c.h.b16 %v1180
          %v1227 = vpack.c.b16 %v1215, %v1211
          %v1228 = vpack.c.b16 %v1216, %v1212
          %v1229 = vpack.c.b16 %v1217, %v1213
          %v1230 = vpack.c.b16 %v1218, %v1214
          %v1231 = vpack.c.b16 %v1223, %v1219
          %v1232 = vpack.c.b16 %v1224, %v1220
          %v1233 = vpack.c.b16 %v1225, %v1221
          %v1234 = vpack.c.b16 %v1226, %v1222
          %v1244 = vsel %vm583, %v1172, 0
          %1246 = vmatprep.subr.bf16.mxu0 0
          %1247 = vmatpush1.bf16.msra.mxu0 0
          %1248 = vmatprep.subr.bf16.mxu0 0
          %1249 = vmatpush1.bf16.msra.mxu0 0
          %1250 = vmatprep.subr.bf16.mxu0 0
          %1251 = vmatpush1.bf16.msra.mxu0 0
          %1252 = vmatprep.subr.bf16.mxu0 0
          %1253 = vmatpush1.bf16.msra.mxu0 0
          %1254 = vmatprep.subr.bf16.mxu0 0
          %1255 = vmatpush1.bf16.msra.mxu0 0
          %1256 = vmatprep.subr.bf16.mxu0 0
          %1257 = vmatpush1.bf16.msra.mxu0 0
          %1258 = vmatprep.subr.bf16.mxu0 %v1232
          %1259 = vmatpush1.bf16.msra.mxu0 %v1231
          %1260 = vmatprep.subr.bf16.mxu0 %v1228
          %1261 = vmatpush1.bf16.msra.mxu0 %v1227
          %1262 = vmatprep.subr.bf16.mxu0 0
          %1263 = vmatpush2.bf16.msra.mxu0 0
          %1264 = vmatprep.subr.bf16.mxu0 0
          %1265 = vmatpush2.bf16.msra.mxu0 0
          %1266 = vmatprep.subr.bf16.mxu0 0
          %1267 = vmatpush2.bf16.msra.mxu0 0
          %1268 = vmatprep.subr.bf16.mxu0 0
          %1269 = vmatpush2.bf16.msra.mxu0 0
          %1270 = vmatprep.subr.bf16.mxu0 0
          %1271 = vmatpush2.bf16.msra.mxu0 0
          %1272 = vmatprep.subr.bf16.mxu0 0
          %1273 = vmatpush2.bf16.msra.mxu0 0
          %1274 = vmatprep.subr.bf16.mxu0 0
          %1275 = vmatpush2.bf16.msra.mxu0 0
          %1276 = vmatprep.subr.bf16.mxu0 0
          %1277 = vmatpush2.bf16.msra.mxu0 0
          %1278 = vmatprep.mubr.bf16.mxu0 0
          %1279 = vmatmul.mubr.bf16.gmra.mxu0 %v1244
          %v1280 = vpop.f32.mrf.mxu0
          %v1281 = vadd.f32 %v1186, %v1280
          %v1282 = vpop.f32.mrf.mxu0
          %v1283 = vadd.f32 %v1190, %v1282
          %v1284 = vpop.f32.mrf.mxu0
          %v1285 = vpop.f32.mrf.mxu0
          %1286 = vdwg.mxu0
          %1287 = vmatprep.subr.bf16.mxu0 0
          %1288 = vmatpush1.bf16.msra.mxu0 0
          %1289 = vmatprep.subr.bf16.mxu0 0
          %1290 = vmatpush1.bf16.msra.mxu0 0
          %1291 = vmatprep.subr.bf16.mxu0 0
          %1292 = vmatpush1.bf16.msra.mxu0 0
          %1293 = vmatprep.subr.bf16.mxu0 0
          %1294 = vmatpush1.bf16.msra.mxu0 0
          %1295 = vmatprep.subr.bf16.mxu0 0
          %1296 = vmatpush1.bf16.msra.mxu0 0
          %1297 = vmatprep.subr.bf16.mxu0 0
          %1298 = vmatpush1.bf16.msra.mxu0 0
          %1299 = vmatprep.subr.bf16.mxu0 %v1234
          %1300 = vmatpush1.bf16.msra.mxu0 %v1233
          %1301 = vmatprep.subr.bf16.mxu0 %v1230
          %1302 = vmatpush1.bf16.msra.mxu0 %v1229
          %1303 = vmatprep.subr.bf16.mxu0 0
          %1304 = vmatpush2.bf16.msra.mxu0 0
          %1305 = vmatprep.subr.bf16.mxu0 0
          %1306 = vmatpush2.bf16.msra.mxu0 0
          %1307 = vmatprep.subr.bf16.mxu0 0
          %1308 = vmatpush2.bf16.msra.mxu0 0
          %1309 = vmatprep.subr.bf16.mxu0 0
          %1310 = vmatpush2.bf16.msra.mxu0 0
          %1311 = vmatprep.subr.bf16.mxu0 0
          %1312 = vmatpush2.bf16.msra.mxu0 0
          %1313 = vmatprep.subr.bf16.mxu0 0
          %1314 = vmatpush2.bf16.msra.mxu0 0
          %1315 = vmatprep.subr.bf16.mxu0 0
          %1316 = vmatpush2.bf16.msra.mxu0 0
          %1317 = vmatprep.subr.bf16.mxu0 0
          %1318 = vmatpush2.bf16.msra.mxu0 0
          %1319 = vmatprep.mubr.bf16.mxu0 0
          %1320 = vmatmul.mubr.bf16.gmra.mxu0 %v1244
          %v1321 = vpop.f32.mrf.mxu0
          %v1322 = vadd.f32 %v1194, %v1321
          %v1323 = vpop.f32.mrf.mxu0
          %v1324 = vadd.f32 %v1198, %v1323
          %v1325 = vpop.f32.mrf.mxu0
          %v1326 = vpop.f32.mrf.mxu0
          %1327 = vdwg.mxu0
          %v1328 = vmax.f32 %v1281, 0.0
          %v1329 = vmax.f32 %v1283, 0.0
          %v1330 = vmax.f32 %v1322, 0.0
          %v1331 = vmax.f32 %v1324, 0.0
          %v1332 = vpack.c.bf16 %v1328, %v1328
          %v1333 = vpack.c.bf16 %v1329, %v1329
          %v1334 = vpack.c.bf16 %v1330, %v1330
          %v1335 = vpack.c.bf16 %v1331, %v1331
          %v1336 = vld [vmem:[%s12] sm:$0xf]
          %v1337 = vld [vmem:[%s12 + $0x4] sm:$0xf]
          %v1338 = vld [vmem:[%s12 + $0x8] sm:$0xf]
          %v1339 = vld [vmem:[%s12 + $0xc] sm:$0xf]
          %v1340 = vld [vmem:[%s12 + $0x10] sm:$0xf]
          %v1341 = vld [vmem:[%s12 + $0x14] sm:$0xf]
          %v1342 = vld [vmem:[%s12 + $0x18] sm:$0xf]
          %v1343 = vld [vmem:[%s12 + $0x1c] sm:$0xf]
          %v1344 = vld [vmem:[%s12 + $0x20] sm:$0xf]
          %v1345 = vld [vmem:[%s12 + $0x24] sm:$0xf]
          %v1346 = vld [vmem:[%s12 + $0x28] sm:$0xf]
          %v1347 = vld [vmem:[%s12 + $0x2c] sm:$0xf]
          %v1348 = vld [vmem:[%s12 + $0x30] sm:$0xf]
          %v1349 = vld [vmem:[%s12 + $0x34] sm:$0xf]
          %v1350 = vld [vmem:[%s12 + $0x38] sm:$0xf]
          %v1351 = vld [vmem:[%s12 + $0x3c] sm:$0xf]
          %v1352 = vld [vmem:[%s12 + $0x40] sm:$0xf]
          %v1353 = vld [vmem:[%s12 + $0x44] sm:$0xf]
          %v1354 = vld [vmem:[%s12 + $0x48] sm:$0xf]
          %v1355 = vld [vmem:[%s12 + $0x4c] sm:$0xf]
          %v1356 = vld [vmem:[%s12 + $0x50] sm:$0xf]
          %v1357 = vld [vmem:[%s12 + $0x54] sm:$0xf]
          %v1358 = vld [vmem:[%s12 + $0x58] sm:$0xf]
          %v1359 = vld [vmem:[%s12 + $0x5c] sm:$0xf]
          %v1360 = vld [vmem:[%s12 + $0x60] sm:$0xf]
          %v1361 = vld [vmem:[%s12 + $0x64] sm:$0xf]
          %v1362 = vld [vmem:[%s12 + $0x68] sm:$0xf]
          %v1363 = vld [vmem:[%s12 + $0x6c] sm:$0xf]
          %v1364 = vld [vmem:[%s12 + $0x70] sm:$0xf]
          %v1365 = vld [vmem:[%s12 + $0x74] sm:$0xf]
          %v1366 = vld [vmem:[%s12 + $0x78] sm:$0xf]
          %v1367 = vld [vmem:[%s12 + $0x7c] sm:$0xf]
          %v1368 = vld [vmem:[%s12 + $0x80] sm:$0xf]
          %v1369 = vld [vmem:[%s12 + $0x84] sm:$0xf]
          %v1370 = vld [vmem:[%s12 + $0x88] sm:$0xf]
          %v1371 = vld [vmem:[%s12 + $0x8c] sm:$0xf]
          %v1372 = vld [vmem:[%s12 + $0x90] sm:$0xf]
          %v1373 = vld [vmem:[%s12 + $0x94] sm:$0xf]
          %v1374 = vld [vmem:[%s12 + $0x98] sm:$0xf]
          %v1375 = vld [vmem:[%s12 + $0x9c] sm:$0xf]
          %v1376 = vld [vmem:[%s12 + $0xa0] sm:$0xf]
          %v1377 = vld [vmem:[%s12 + $0xa4] sm:$0xf]
          %v1378 = vld [vmem:[%s12 + $0xa8] sm:$0xf]
          %v1379 = vld [vmem:[%s12 + $0xac] sm:$0xf]
          %v1380 = vld [vmem:[%s12 + $0xb0] sm:$0xf]
          %v1381 = vld [vmem:[%s12 + $0xb4] sm:$0xf]
          %v1382 = vld [vmem:[%s12 + $0xb8] sm:$0xf]
          %v1383 = vld [vmem:[%s12 + $0xbc] sm:$0xf]
          %v1384 = vld [vmem:[%s12 + $0xc0] sm:$0xf]
          %v1385 = vld [vmem:[%s12 + $0xc4] sm:$0xf]
          %v1386 = vld [vmem:[%s12 + $0xc8] sm:$0xf]
          %v1387 = vld [vmem:[%s12 + $0xcc] sm:$0xf]
          %v1388 = vld [vmem:[%s12 + $0xd0] sm:$0xf]
          %v1389 = vld [vmem:[%s12 + $0xd4] sm:$0xf]
          %v1390 = vld [vmem:[%s12 + $0xd8] sm:$0xf]
          %v1391 = vld [vmem:[%s12 + $0xdc] sm:$0xf]
          %v1392 = vld [vmem:[%s12 + $0xe0] sm:$0xf]
          %v1393 = vld [vmem:[%s12 + $0xe4] sm:$0xf]
          %v1394 = vld [vmem:[%s12 + $0xe8] sm:$0xf]
          %v1395 = vld [vmem:[%s12 + $0xec] sm:$0xf]
          %v1396 = vld [vmem:[%s12 + $0xf0] sm:$0xf]
          %v1397 = vld [vmem:[%s12 + $0xf4] sm:$0xf]
          %v1398 = vld [vmem:[%s12 + $0xf8] sm:$0xf]
          %v1399 = vld [vmem:[%s12 + $0xfc] sm:$0xf]
          %v1400 = vld [vmem:[%s10 + $0x10] sm:$0xff]
          %v1401 = vld [vmem:[%s10 + $0x18] sm:$0xff]
          %v1402 = vld [vmem:[%s10 + $0x50] sm:$0xff]
          %v1403 = vld [vmem:[%s10 + $0x58] sm:$0xff]
          %v1404 = vld [vmem:[%s10 + $0x90] sm:$0xff]
          %v1405 = vld [vmem:[%s10 + $0x98] sm:$0xff]
          %v1406 = vld [vmem:[%s10 + $0xd0] sm:$0xff]
          %v1407 = vld [vmem:[%s10 + $0xd8] sm:$0xff]
          %v1408 = vld [vmem:[%s11 + $0x4] sm:$0xf]
          %v1410 = vlaneseq
          %v1411 = vshrl.u32 %v1410, 7
          %v1412 = vsub.s32 0, %v1411
          %v1413 = vrot.slane %v1408, %v1412
          %v1414 = vlaneseq
          %v1415 = vshrl.u32 %v1414, 7
          %v1416 = vsub.s32 1, %v1415
          %v1417 = vrot.slane %v1408, %v1416
          %v1418 = vlaneseq
          %v1419 = vshrl.u32 %v1418, 7
          %v1420 = vsub.s32 2, %v1419
          %v1421 = vrot.slane %v1408, %v1420
          %v1422 = vlaneseq
          %v1423 = vshrl.u32 %v1422, 7
          %v1424 = vsub.s32 3, %v1423
          %v1425 = vrot.slane %v1408, %v1424
          %v1438 = vunpack.c.l.b16 %v1400
          %v1439 = vunpack.c.h.b16 %v1400
          %v1440 = vunpack.c.l.b16 %v1401
          %v1441 = vunpack.c.h.b16 %v1401
          %v1442 = vunpack.c.l.b16 %v1402
          %v1443 = vunpack.c.h.b16 %v1402
          %v1444 = vunpack.c.l.b16 %v1403
          %v1445 = vunpack.c.h.b16 %v1403
          %v1446 = vunpack.c.l.b16 %v1404
          %v1447 = vunpack.c.h.b16 %v1404
          %v1448 = vunpack.c.l.b16 %v1405
          %v1449 = vunpack.c.h.b16 %v1405
          %v1450 = vunpack.c.l.b16 %v1406
          %v1451 = vunpack.c.h.b16 %v1406
          %v1452 = vunpack.c.l.b16 %v1407
          %v1453 = vunpack.c.h.b16 %v1407
          %v1454 = vpack.c.b16 %v1442, %v1438
          %v1455 = vpack.c.b16 %v1443, %v1439
          %v1456 = vpack.c.b16 %v1444, %v1440
          %v1457 = vpack.c.b16 %v1445, %v1441
          %v1458 = vpack.c.b16 %v1450, %v1446
          %v1459 = vpack.c.b16 %v1451, %v1447
          %v1460 = vpack.c.b16 %v1452, %v1448
          %v1461 = vpack.c.b16 %v1453, %v1449
          %1470 = vmatprep.subr.bf16.mxu0 0
          %1471 = vmatpush1.bf16.msra.mxu0 0
          %1472 = vmatprep.subr.bf16.mxu0 0
          %1473 = vmatpush1.bf16.msra.mxu0 0
          %1474 = vmatprep.subr.bf16.mxu0 0
          %1475 = vmatpush1.bf16.msra.mxu0 0
          %1476 = vmatprep.subr.bf16.mxu0 0
          %1477 = vmatpush1.bf16.msra.mxu0 0
          %1478 = vmatprep.subr.bf16.mxu0 0
          %1479 = vmatpush1.bf16.msra.mxu0 0
          %1480 = vmatprep.subr.bf16.mxu0 0
          %1481 = vmatpush1.bf16.msra.mxu0 0
          %1482 = vmatprep.subr.bf16.mxu0 %v1459
          %1483 = vmatpush1.bf16.msra.mxu0 %v1458
          %1484 = vmatprep.subr.bf16.mxu0 %v1455
          %1485 = vmatpush1.bf16.msra.mxu0 %v1454
          %1486 = vmatprep.subr.bf16.mxu0 0
          %1487 = vmatpush2.bf16.msra.mxu0 0
          %1488 = vmatprep.subr.bf16.mxu0 0
          %1489 = vmatpush2.bf16.msra.mxu0 0
          %1490 = vmatprep.subr.bf16.mxu0 0
          %1491 = vmatpush2.bf16.msra.mxu0 0
          %1492 = vmatprep.subr.bf16.mxu0 0
          %1493 = vmatpush2.bf16.msra.mxu0 0
          %1494 = vmatprep.subr.bf16.mxu0 0
          %1495 = vmatpush2.bf16.msra.mxu0 0
          %1496 = vmatprep.subr.bf16.mxu0 0
          %1497 = vmatpush2.bf16.msra.mxu0 0
          %1498 = vmatprep.subr.bf16.mxu0 0
          %1499 = vmatpush2.bf16.msra.mxu0 0
          %1500 = vmatprep.subr.bf16.mxu0 0
          %1501 = vmatpush2.bf16.msra.mxu0 0
          %1502 = vmatprep.mubr.bf16.mxu0 0
          %1503 = vmatmul.mubr.bf16.gmra.mxu0 %v1244
          %v1504 = vpop.f32.mrf.mxu0
          %v1505 = vadd.f32 %v1413, %v1504
          %v1506 = vpop.f32.mrf.mxu0
          %v1507 = vadd.f32 %v1417, %v1506
          %v1508 = vpop.f32.mrf.mxu0
          %v1509 = vpop.f32.mrf.mxu0
          %1510 = vdwg.mxu0
          %1511 = vmatprep.subr.bf16.mxu0 0
          %1512 = vmatpush1.bf16.msra.mxu0 0
          %1513 = vmatprep.subr.bf16.mxu0 0
          %1514 = vmatpush1.bf16.msra.mxu0 0
          %1515 = vmatprep.subr.bf16.mxu0 0
          %1516 = vmatpush1.bf16.msra.mxu0 0
          %1517 = vmatprep.subr.bf16.mxu0 0
          %1518 = vmatpush1.bf16.msra.mxu0 0
          %1519 = vmatprep.subr.bf16.mxu0 0
          %1520 = vmatpush1.bf16.msra.mxu0 0
          %1521 = vmatprep.subr.bf16.mxu0 0
          %1522 = vmatpush1.bf16.msra.mxu0 0
          %1523 = vmatprep.subr.bf16.mxu0 %v1461
          %1524 = vmatpush1.bf16.msra.mxu0 %v1460
          %1525 = vmatprep.subr.bf16.mxu0 %v1457
          %1526 = vmatpush1.bf16.msra.mxu0 %v1456
          %1527 = vmatprep.subr.bf16.mxu0 0
          %1528 = vmatpush2.bf16.msra.mxu0 0
          %1529 = vmatprep.subr.bf16.mxu0 0
          %1530 = vmatpush2.bf16.msra.mxu0 0
          %1531 = vmatprep.subr.bf16.mxu0 0
          %1532 = vmatpush2.bf16.msra.mxu0 0
          %1533 = vmatprep.subr.bf16.mxu0 0
          %1534 = vmatpush2.bf16.msra.mxu0 0
          %1535 = vmatprep.subr.bf16.mxu0 0
          %1536 = vmatpush2.bf16.msra.mxu0 0
          %1537 = vmatprep.subr.bf16.mxu0 0
          %1538 = vmatpush2.bf16.msra.mxu0 0
          %1539 = vmatprep.subr.bf16.mxu0 0
          %1540 = vmatpush2.bf16.msra.mxu0 0
          %1541 = vmatprep.subr.bf16.mxu0 0
          %1542 = vmatpush2.bf16.msra.mxu0 0
          %1543 = vmatprep.mubr.bf16.mxu0 0
          %1544 = vmatmul.mubr.bf16.gmra.mxu0 %v1244
          %v1545 = vpop.f32.mrf.mxu0
          %v1546 = vadd.f32 %v1421, %v1545
          %v1547 = vpop.f32.mrf.mxu0
          %v1548 = vadd.f32 %v1425, %v1547
          %v1549 = vpop.f32.mrf.mxu0
          %v1550 = vpop.f32.mrf.mxu0
          %1551 = vdwg.mxu0
          %v1552 = vmax.f32 %v1505, 0.0
          %v1553 = vmax.f32 %v1507, 0.0
          %v1554 = vmax.f32 %v1546, 0.0
          %v1555 = vmax.f32 %v1548, 0.0
          %v1556 = vpack.c.bf16 %v1552, %v1552
          %v1557 = vpack.c.bf16 %v1553, %v1553
          %v1558 = vpack.c.bf16 %v1554, %v1554
          %v1559 = vpack.c.bf16 %v1555, %v1555
          %v1560 = vld [vmem:[%s12 + $0x100] sm:$0xf]
          %v1561 = vld [vmem:[%s12 + $0x104] sm:$0xf]
          %v1562 = vld [vmem:[%s12 + $0x108] sm:$0xf]
          %v1563 = vld [vmem:[%s12 + $0x10c] sm:$0xf]
          %v1564 = vld [vmem:[%s12 + $0x110] sm:$0xf]
          %v1565 = vld [vmem:[%s12 + $0x114] sm:$0xf]
          %v1566 = vld [vmem:[%s12 + $0x118] sm:$0xf]
          %v1567 = vld [vmem:[%s12 + $0x11c] sm:$0xf]
          %v1568 = vld [vmem:[%s12 + $0x120] sm:$0xf]
          %v1569 = vld [vmem:[%s12 + $0x124] sm:$0xf]
          %v1570 = vld [vmem:[%s12 + $0x128] sm:$0xf]
          %v1571 = vld [vmem:[%s12 + $0x12c] sm:$0xf]
          %v1572 = vld [vmem:[%s12 + $0x130] sm:$0xf]
          %v1573 = vld [vmem:[%s12 + $0x134] sm:$0xf]
          %v1574 = vld [vmem:[%s12 + $0x138] sm:$0xf]
          %v1575 = vld [vmem:[%s12 + $0x13c] sm:$0xf]
          %v1576 = vld [vmem:[%s12 + $0x140] sm:$0xf]
          %v1577 = vld [vmem:[%s12 + $0x144] sm:$0xf]
          %v1578 = vld [vmem:[%s12 + $0x148] sm:$0xf]
          %v1579 = vld [vmem:[%s12 + $0x14c] sm:$0xf]
          %v1580 = vld [vmem:[%s12 + $0x150] sm:$0xf]
          %v1581 = vld [vmem:[%s12 + $0x154] sm:$0xf]
          %v1582 = vld [vmem:[%s12 + $0x158] sm:$0xf]
          %v1583 = vld [vmem:[%s12 + $0x15c] sm:$0xf]
          %v1584 = vld [vmem:[%s12 + $0x160] sm:$0xf]
          %v1585 = vld [vmem:[%s12 + $0x164] sm:$0xf]
          %v1586 = vld [vmem:[%s12 + $0x168] sm:$0xf]
          %v1587 = vld [vmem:[%s12 + $0x16c] sm:$0xf]
          %v1588 = vld [vmem:[%s12 + $0x170] sm:$0xf]
          %v1589 = vld [vmem:[%s12 + $0x174] sm:$0xf]
          %v1590 = vld [vmem:[%s12 + $0x178] sm:$0xf]
          %v1591 = vld [vmem:[%s12 + $0x17c] sm:$0xf]
          %v1592 = vld [vmem:[%s12 + $0x180] sm:$0xf]
          %v1593 = vld [vmem:[%s12 + $0x184] sm:$0xf]
          %v1594 = vld [vmem:[%s12 + $0x188] sm:$0xf]
          %v1595 = vld [vmem:[%s12 + $0x18c] sm:$0xf]
          %v1596 = vld [vmem:[%s12 + $0x190] sm:$0xf]
          %v1597 = vld [vmem:[%s12 + $0x194] sm:$0xf]
          %v1598 = vld [vmem:[%s12 + $0x198] sm:$0xf]
          %v1599 = vld [vmem:[%s12 + $0x19c] sm:$0xf]
          %v1600 = vld [vmem:[%s12 + $0x1a0] sm:$0xf]
          %v1601 = vld [vmem:[%s12 + $0x1a4] sm:$0xf]
          %v1602 = vld [vmem:[%s12 + $0x1a8] sm:$0xf]
          %v1603 = vld [vmem:[%s12 + $0x1ac] sm:$0xf]
          %v1604 = vld [vmem:[%s12 + $0x1b0] sm:$0xf]
          %v1605 = vld [vmem:[%s12 + $0x1b4] sm:$0xf]
          %v1606 = vld [vmem:[%s12 + $0x1b8] sm:$0xf]
          %v1607 = vld [vmem:[%s12 + $0x1bc] sm:$0xf]
          %v1608 = vld [vmem:[%s12 + $0x1c0] sm:$0xf]
          %v1609 = vld [vmem:[%s12 + $0x1c4] sm:$0xf]
          %v1610 = vld [vmem:[%s12 + $0x1c8] sm:$0xf]
          %v1611 = vld [vmem:[%s12 + $0x1cc] sm:$0xf]
          %v1612 = vld [vmem:[%s12 + $0x1d0] sm:$0xf]
          %v1613 = vld [vmem:[%s12 + $0x1d4] sm:$0xf]
          %v1614 = vld [vmem:[%s12 + $0x1d8] sm:$0xf]
          %v1615 = vld [vmem:[%s12 + $0x1dc] sm:$0xf]
          %v1616 = vld [vmem:[%s12 + $0x1e0] sm:$0xf]
          %v1617 = vld [vmem:[%s12 + $0x1e4] sm:$0xf]
          %v1618 = vld [vmem:[%s12 + $0x1e8] sm:$0xf]
          %v1619 = vld [vmem:[%s12 + $0x1ec] sm:$0xf]
          %v1620 = vld [vmem:[%s12 + $0x1f0] sm:$0xf]
          %v1621 = vld [vmem:[%s12 + $0x1f4] sm:$0xf]
          %v1622 = vld [vmem:[%s12 + $0x1f8] sm:$0xf]
          %v1623 = vld [vmem:[%s12 + $0x1fc] sm:$0xf]
          %v1688 = vunpack.c.l.b16 %v1560
          %v1689 = vunpack.c.l.b16 %v1561
          %v1690 = vunpack.c.l.b16 %v1562
          %v1691 = vunpack.c.l.b16 %v1563
          %v1692 = vunpack.c.l.b16 %v1564
          %v1693 = vunpack.c.l.b16 %v1565
          %v1694 = vunpack.c.l.b16 %v1566
          %v1695 = vunpack.c.l.b16 %v1567
          %v1696 = vunpack.c.l.b16 %v1568
          %v1697 = vunpack.c.l.b16 %v1569
          %v1698 = vunpack.c.l.b16 %v1570
          %v1699 = vunpack.c.l.b16 %v1571
          %v1700 = vunpack.c.l.b16 %v1572
          %v1701 = vunpack.c.l.b16 %v1573
          %v1702 = vunpack.c.l.b16 %v1574
          %v1703 = vunpack.c.l.b16 %v1575
          %v1704 = vunpack.c.l.b16 %v1576
          %v1705 = vunpack.c.l.b16 %v1577
          %v1706 = vunpack.c.l.b16 %v1578
          %v1707 = vunpack.c.l.b16 %v1579
          %v1708 = vunpack.c.l.b16 %v1580
          %v1709 = vunpack.c.l.b16 %v1581
          %v1710 = vunpack.c.l.b16 %v1582
          %v1711 = vunpack.c.l.b16 %v1583
          %v1712 = vunpack.c.l.b16 %v1584
          %v1713 = vunpack.c.l.b16 %v1585
          %v1714 = vunpack.c.l.b16 %v1586
          %v1715 = vunpack.c.l.b16 %v1587
          %v1716 = vunpack.c.l.b16 %v1588
          %v1717 = vunpack.c.l.b16 %v1589
          %v1718 = vunpack.c.l.b16 %v1590
          %v1719 = vunpack.c.l.b16 %v1591
          %v1720 = vunpack.c.l.b16 %v1592
          %v1721 = vunpack.c.l.b16 %v1593
          %v1722 = vunpack.c.l.b16 %v1594
          %v1723 = vunpack.c.l.b16 %v1595
          %v1724 = vunpack.c.l.b16 %v1596
          %v1725 = vunpack.c.l.b16 %v1597
          %v1726 = vunpack.c.l.b16 %v1598
          %v1727 = vunpack.c.l.b16 %v1599
          %v1728 = vunpack.c.l.b16 %v1600
          %v1729 = vunpack.c.l.b16 %v1601
          %v1730 = vunpack.c.l.b16 %v1602
          %v1731 = vunpack.c.l.b16 %v1603
          %v1732 = vunpack.c.l.b16 %v1604
          %v1733 = vunpack.c.l.b16 %v1605
          %v1734 = vunpack.c.l.b16 %v1606
          %v1735 = vunpack.c.l.b16 %v1607
          %v1736 = vunpack.c.l.b16 %v1608
          %v1737 = vunpack.c.l.b16 %v1609
          %v1738 = vunpack.c.l.b16 %v1610
          %v1739 = vunpack.c.l.b16 %v1611
          %v1740 = vunpack.c.l.b16 %v1612
          %v1741 = vunpack.c.l.b16 %v1613
          %v1742 = vunpack.c.l.b16 %v1614
          %v1743 = vunpack.c.l.b16 %v1615
          %v1744 = vunpack.c.l.b16 %v1616
          %v1745 = vunpack.c.l.b16 %v1617
          %v1746 = vunpack.c.l.b16 %v1618
          %v1747 = vunpack.c.l.b16 %v1619
          %v1748 = vunpack.c.l.b16 %v1620
          %v1749 = vunpack.c.l.b16 %v1621
          %v1750 = vunpack.c.l.b16 %v1622
          %v1751 = vunpack.c.l.b16 %v1623
          %v1752 = vpack.c.b16 %v1689, %v1688
          %v1753 = vpack.c.b16 %v1691, %v1690
          %v1754 = vpack.c.b16 %v1693, %v1692
          %v1755 = vpack.c.b16 %v1695, %v1694
          %v1756 = vpack.c.b16 %v1697, %v1696
          %v1757 = vpack.c.b16 %v1699, %v1698
          %v1758 = vpack.c.b16 %v1701, %v1700
          %v1759 = vpack.c.b16 %v1703, %v1702
          %v1760 = vpack.c.b16 %v1705, %v1704
          %v1761 = vpack.c.b16 %v1707, %v1706
          %v1762 = vpack.c.b16 %v1709, %v1708
          %v1763 = vpack.c.b16 %v1711, %v1710
          %v1764 = vpack.c.b16 %v1713, %v1712
          %v1765 = vpack.c.b16 %v1715, %v1714
          %v1766 = vpack.c.b16 %v1717, %v1716
          %v1767 = vpack.c.b16 %v1719, %v1718
          %v1768 = vpack.c.b16 %v1721, %v1720
          %v1769 = vpack.c.b16 %v1723, %v1722
          %v1770 = vpack.c.b16 %v1725, %v1724
          %v1771 = vpack.c.b16 %v1727, %v1726
          %v1772 = vpack.c.b16 %v1729, %v1728
          %v1773 = vpack.c.b16 %v1731, %v1730
          %v1774 = vpack.c.b16 %v1733, %v1732
          %v1775 = vpack.c.b16 %v1735, %v1734
          %v1776 = vpack.c.b16 %v1737, %v1736
          %v1777 = vpack.c.b16 %v1739, %v1738
          %v1778 = vpack.c.b16 %v1741, %v1740
          %v1779 = vpack.c.b16 %v1743, %v1742
          %v1780 = vpack.c.b16 %v1745, %v1744
          %v1781 = vpack.c.b16 %v1747, %v1746
          %v1782 = vpack.c.b16 %v1749, %v1748
          %v1783 = vpack.c.b16 %v1751, %v1750
          %1816 = vmatprep.subr.bf16.mxu0 0
          %1817 = vmatpush1.bf16.msra.mxu0 %v1759
          %1818 = vmatprep.subr.bf16.mxu0 0
          %1819 = vmatpush1.bf16.msra.mxu0 %v1758
          %1820 = vmatprep.subr.bf16.mxu0 0
          %1821 = vmatpush1.bf16.msra.mxu0 %v1757
          %1822 = vmatprep.subr.bf16.mxu0 0
          %1823 = vmatpush1.bf16.msra.mxu0 %v1756
          %1824 = vmatprep.subr.bf16.mxu0 0
          %1825 = vmatpush1.bf16.msra.mxu0 %v1755
          %1826 = vmatprep.subr.bf16.mxu0 0
          %1827 = vmatpush1.bf16.msra.mxu0 %v1754
          %1828 = vmatprep.subr.bf16.mxu0 0
          %1829 = vmatpush1.bf16.msra.mxu0 %v1753
          %1830 = vmatprep.subr.bf16.mxu0 0
          %1831 = vmatpush1.bf16.msra.mxu0 %v1752
          %1832 = vmatprep.subr.bf16.mxu0 0
          %1833 = vmatpush2.bf16.msra.mxu0 %v1767
          %1834 = vmatprep.subr.bf16.mxu0 0
          %1835 = vmatpush2.bf16.msra.mxu0 %v1766
          %1836 = vmatprep.subr.bf16.mxu0 0
          %1837 = vmatpush2.bf16.msra.mxu0 %v1765
          %1838 = vmatprep.subr.bf16.mxu0 0
          %1839 = vmatpush2.bf16.msra.mxu0 %v1764
          %1840 = vmatprep.subr.bf16.mxu0 0
          %1841 = vmatpush2.bf16.msra.mxu0 %v1763
          %1842 = vmatprep.subr.bf16.mxu0 0
          %1843 = vmatpush2.bf16.msra.mxu0 %v1762
          %1844 = vmatprep.subr.bf16.mxu0 0
          %1845 = vmatpush2.bf16.msra.mxu0 %v1761
          %1846 = vmatprep.subr.bf16.mxu0 0
          %1847 = vmatpush2.bf16.msra.mxu0 %v1760
          %1848 = vmatprep.mubr.bf16.mxu0 %v1557
          %1849 = vmatmul.mubr.bf16.gmra.mxu0 %v1556
          %v1850 = vpop.f32.mrf.mxu0
          %v1851 = vadd.f32 0.0, %v1850
          %v1852 = vpop.f32.mrf.mxu0
          %v1853 = vpop.f32.mrf.mxu0
          %v1854 = vpop.f32.mrf.mxu0
          %1855 = vdwg.mxu0
          %1856 = vmatprep.subr.bf16.mxu0 0
          %1857 = vmatpush1.bf16.msra.mxu0 %v1775
          %1858 = vmatprep.subr.bf16.mxu0 0
          %1859 = vmatpush1.bf16.msra.mxu0 %v1774
          %1860 = vmatprep.subr.bf16.mxu0 0
          %1861 = vmatpush1.bf16.msra.mxu0 %v1773
          %1862 = vmatprep.subr.bf16.mxu0 0
          %1863 = vmatpush1.bf16.msra.mxu0 %v1772
          %1864 = vmatprep.subr.bf16.mxu0 0
          %1865 = vmatpush1.bf16.msra.mxu0 %v1771
          %1866 = vmatprep.subr.bf16.mxu0 0
          %1867 = vmatpush1.bf16.msra.mxu0 %v1770
          %1868 = vmatprep.subr.bf16.mxu0 0
          %1869 = vmatpush1.bf16.msra.mxu0 %v1769
          %1870 = vmatprep.subr.bf16.mxu0 0
          %1871 = vmatpush1.bf16.msra.mxu0 %v1768
          %1872 = vmatprep.subr.bf16.mxu0 0
          %1873 = vmatpush2.bf16.msra.mxu0 %v1783
          %1874 = vmatprep.subr.bf16.mxu0 0
          %1875 = vmatpush2.bf16.msra.mxu0 %v1782
          %1876 = vmatprep.subr.bf16.mxu0 0
          %1877 = vmatpush2.bf16.msra.mxu0 %v1781
          %1878 = vmatprep.subr.bf16.mxu0 0
          %1879 = vmatpush2.bf16.msra.mxu0 %v1780
          %1880 = vmatprep.subr.bf16.mxu0 0
          %1881 = vmatpush2.bf16.msra.mxu0 %v1779
          %1882 = vmatprep.subr.bf16.mxu0 0
          %1883 = vmatpush2.bf16.msra.mxu0 %v1778
          %1884 = vmatprep.subr.bf16.mxu0 0
          %1885 = vmatpush2.bf16.msra.mxu0 %v1777
          %1886 = vmatprep.subr.bf16.mxu0 0
          %1887 = vmatpush2.bf16.msra.mxu0 %v1776
          %1888 = vmatprep.mubr.bf16.mxu0 %v1559
          %1889 = vmatmul.mubr.bf16.gmra.mxu0 %v1558
          %v1890 = vpop.f32.mrf.mxu0
          %v1891 = vadd.f32 %v1851, %v1890
          %v1892 = vpop.f32.mrf.mxu0
          %v1893 = vpop.f32.mrf.mxu0
          %v1894 = vpop.f32.mrf.mxu0
          %1895 = vdwg.mxu0
          %v1960 = vunpack.c.l.b16 %v1336
          %v1961 = vunpack.c.l.b16 %v1337
          %v1962 = vunpack.c.l.b16 %v1338
          %v1963 = vunpack.c.l.b16 %v1339
          %v1964 = vunpack.c.l.b16 %v1340
          %v1965 = vunpack.c.l.b16 %v1341
          %v1966 = vunpack.c.l.b16 %v1342
          %v1967 = vunpack.c.l.b16 %v1343
          %v1968 = vunpack.c.l.b16 %v1344
          %v1969 = vunpack.c.l.b16 %v1345
          %v1970 = vunpack.c.l.b16 %v1346
          %v1971 = vunpack.c.l.b16 %v1347
          %v1972 = vunpack.c.l.b16 %v1348
          %v1973 = vunpack.c.l.b16 %v1349
          %v1974 = vunpack.c.l.b16 %v1350
          %v1975 = vunpack.c.l.b16 %v1351
          %v1976 = vunpack.c.l.b16 %v1352
          %v1977 = vunpack.c.l.b16 %v1353
          %v1978 = vunpack.c.l.b16 %v1354
          %v1979 = vunpack.c.l.b16 %v1355
          %v1980 = vunpack.c.l.b16 %v1356
          %v1981 = vunpack.c.l.b16 %v1357
          %v1982 = vunpack.c.l.b16 %v1358
          %v1983 = vunpack.c.l.b16 %v1359
          %v1984 = vunpack.c.l.b16 %v1360
          %v1985 = vunpack.c.l.b16 %v1361
          %v1986 = vunpack.c.l.b16 %v1362
          %v1987 = vunpack.c.l.b16 %v1363
          %v1988 = vunpack.c.l.b16 %v1364
          %v1989 = vunpack.c.l.b16 %v1365
          %v1990 = vunpack.c.l.b16 %v1366
          %v1991 = vunpack.c.l.b16 %v1367
          %v1992 = vunpack.c.l.b16 %v1368
          %v1993 = vunpack.c.l.b16 %v1369
          %v1994 = vunpack.c.l.b16 %v1370
          %v1995 = vunpack.c.l.b16 %v1371
          %v1996 = vunpack.c.l.b16 %v1372
          %v1997 = vunpack.c.l.b16 %v1373
          %v1998 = vunpack.c.l.b16 %v1374
          %v1999 = vunpack.c.l.b16 %v1375
          %v2000 = vunpack.c.l.b16 %v1376
          %v2001 = vunpack.c.l.b16 %v1377
          %v2002 = vunpack.c.l.b16 %v1378
          %v2003 = vunpack.c.l.b16 %v1379
          %v2004 = vunpack.c.l.b16 %v1380
          %v2005 = vunpack.c.l.b16 %v1381
          %v2006 = vunpack.c.l.b16 %v1382
          %v2007 = vunpack.c.l.b16 %v1383
          %v2008 = vunpack.c.l.b16 %v1384
          %v2009 = vunpack.c.l.b16 %v1385
          %v2010 = vunpack.c.l.b16 %v1386
          %v2011 = vunpack.c.l.b16 %v1387
          %v2012 = vunpack.c.l.b16 %v1388
          %v2013 = vunpack.c.l.b16 %v1389
          %v2014 = vunpack.c.l.b16 %v1390
          %v2015 = vunpack.c.l.b16 %v1391
          %v2016 = vunpack.c.l.b16 %v1392
          %v2017 = vunpack.c.l.b16 %v1393
          %v2018 = vunpack.c.l.b16 %v1394
          %v2019 = vunpack.c.l.b16 %v1395
          %v2020 = vunpack.c.l.b16 %v1396
          %v2021 = vunpack.c.l.b16 %v1397
          %v2022 = vunpack.c.l.b16 %v1398
          %v2023 = vunpack.c.l.b16 %v1399
          %v2024 = vpack.c.b16 %v1961, %v1960
          %v2025 = vpack.c.b16 %v1963, %v1962
          %v2026 = vpack.c.b16 %v1965, %v1964
          %v2027 = vpack.c.b16 %v1967, %v1966
          %v2028 = vpack.c.b16 %v1969, %v1968
          %v2029 = vpack.c.b16 %v1971, %v1970
          %v2030 = vpack.c.b16 %v1973, %v1972
          %v2031 = vpack.c.b16 %v1975, %v1974
          %v2032 = vpack.c.b16 %v1977, %v1976
          %v2033 = vpack.c.b16 %v1979, %v1978
          %v2034 = vpack.c.b16 %v1981, %v1980
          %v2035 = vpack.c.b16 %v1983, %v1982
          %v2036 = vpack.c.b16 %v1985, %v1984
          %v2037 = vpack.c.b16 %v1987, %v1986
          %v2038 = vpack.c.b16 %v1989, %v1988
          %v2039 = vpack.c.b16 %v1991, %v1990
          %v2040 = vpack.c.b16 %v1993, %v1992
          %v2041 = vpack.c.b16 %v1995, %v1994
          %v2042 = vpack.c.b16 %v1997, %v1996
          %v2043 = vpack.c.b16 %v1999, %v1998
          %v2044 = vpack.c.b16 %v2001, %v2000
          %v2045 = vpack.c.b16 %v2003, %v2002
          %v2046 = vpack.c.b16 %v2005, %v2004
          %v2047 = vpack.c.b16 %v2007, %v2006
          %v2048 = vpack.c.b16 %v2009, %v2008
          %v2049 = vpack.c.b16 %v2011, %v2010
          %v2050 = vpack.c.b16 %v2013, %v2012
          %v2051 = vpack.c.b16 %v2015, %v2014
          %v2052 = vpack.c.b16 %v2017, %v2016
          %v2053 = vpack.c.b16 %v2019, %v2018
          %v2054 = vpack.c.b16 %v2021, %v2020
          %v2055 = vpack.c.b16 %v2023, %v2022
          %2088 = vmatprep.subr.bf16.mxu0 0
          %2089 = vmatpush1.bf16.msra.mxu0 %v2031
          %2090 = vmatprep.subr.bf16.mxu0 0
          %2091 = vmatpush1.bf16.msra.mxu0 %v2030
          %2092 = vmatprep.subr.bf16.mxu0 0
          %2093 = vmatpush1.bf16.msra.mxu0 %v2029
          %2094 = vmatprep.subr.bf16.mxu0 0
          %2095 = vmatpush1.bf16.msra.mxu0 %v2028
          %2096 = vmatprep.subr.bf16.mxu0 0
          %2097 = vmatpush1.bf16.msra.mxu0 %v2027
          %2098 = vmatprep.subr.bf16.mxu0 0
          %2099 = vmatpush1.bf16.msra.mxu0 %v2026
          %2100 = vmatprep.subr.bf16.mxu0 0
          %2101 = vmatpush1.bf16.msra.mxu0 %v2025
          %2102 = vmatprep.subr.bf16.mxu0 0
          %2103 = vmatpush1.bf16.msra.mxu0 %v2024
          %2104 = vmatprep.subr.bf16.mxu0 0
          %2105 = vmatpush2.bf16.msra.mxu0 %v2039
          %2106 = vmatprep.subr.bf16.mxu0 0
          %2107 = vmatpush2.bf16.msra.mxu0 %v2038
          %2108 = vmatprep.subr.bf16.mxu0 0
          %2109 = vmatpush2.bf16.msra.mxu0 %v2037
          %2110 = vmatprep.subr.bf16.mxu0 0
          %2111 = vmatpush2.bf16.msra.mxu0 %v2036
          %2112 = vmatprep.subr.bf16.mxu0 0
          %2113 = vmatpush2.bf16.msra.mxu0 %v2035
          %2114 = vmatprep.subr.bf16.mxu0 0
          %2115 = vmatpush2.bf16.msra.mxu0 %v2034
          %2116 = vmatprep.subr.bf16.mxu0 0
          %2117 = vmatpush2.bf16.msra.mxu0 %v2033
          %2118 = vmatprep.subr.bf16.mxu0 0
          %2119 = vmatpush2.bf16.msra.mxu0 %v2032
          %2120 = vmatprep.mubr.bf16.mxu0 %v1333
          %2121 = vmatmul.mubr.bf16.gmra.mxu0 %v1332
          %v2122 = vpop.f32.mrf.mxu0
          %v2123 = vadd.f32 %v1891, %v2122
          %v2124 = vpop.f32.mrf.mxu0
          %v2125 = vpop.f32.mrf.mxu0
          %v2126 = vpop.f32.mrf.mxu0
          %2127 = vdwg.mxu0
          %2128 = vmatprep.subr.bf16.mxu0 0
          %2129 = vmatpush1.bf16.msra.mxu0 %v2047
          %2130 = vmatprep.subr.bf16.mxu0 0
          %2131 = vmatpush1.bf16.msra.mxu0 %v2046
          %2132 = vmatprep.subr.bf16.mxu0 0
          %2133 = vmatpush1.bf16.msra.mxu0 %v2045
          %2134 = vmatprep.subr.bf16.mxu0 0
          %2135 = vmatpush1.bf16.msra.mxu0 %v2044
          %2136 = vmatprep.subr.bf16.mxu0 0
          %2137 = vmatpush1.bf16.msra.mxu0 %v2043
          %2138 = vmatprep.subr.bf16.mxu0 0
          %2139 = vmatpush1.bf16.msra.mxu0 %v2042
          %2140 = vmatprep.subr.bf16.mxu0 0
          %2141 = vmatpush1.bf16.msra.mxu0 %v2041
          %2142 = vmatprep.subr.bf16.mxu0 0
          %2143 = vmatpush1.bf16.msra.mxu0 %v2040
          %2144 = vmatprep.subr.bf16.mxu0 0
          %2145 = vmatpush2.bf16.msra.mxu0 %v2055
          %2146 = vmatprep.subr.bf16.mxu0 0
          %2147 = vmatpush2.bf16.msra.mxu0 %v2054
          %2148 = vmatprep.subr.bf16.mxu0 0
          %2149 = vmatpush2.bf16.msra.mxu0 %v2053
          %2150 = vmatprep.subr.bf16.mxu0 0
          %2151 = vmatpush2.bf16.msra.mxu0 %v2052
          %2152 = vmatprep.subr.bf16.mxu0 0
          %2153 = vmatpush2.bf16.msra.mxu0 %v2051
          %2154 = vmatprep.subr.bf16.mxu0 0
          %2155 = vmatpush2.bf16.msra.mxu0 %v2050
          %2156 = vmatprep.subr.bf16.mxu0 0
          %2157 = vmatpush2.bf16.msra.mxu0 %v2049
          %2158 = vmatprep.subr.bf16.mxu0 0
          %2159 = vmatpush2.bf16.msra.mxu0 %v2048
          %2160 = vmatprep.mubr.bf16.mxu0 %v1335
          %2161 = vmatmul.mubr.bf16.gmra.mxu0 %v1334
          %v2162 = vpop.f32.mrf.mxu0
          %v2163 = vadd.f32 %v2123, %v2162
          %v2164 = vpop.f32.mrf.mxu0
          %v2165 = vpop.f32.mrf.mxu0
          %v2166 = vpop.f32.mrf.mxu0
          %2167 = vdwg.mxu0
          %v2168 = vld [vmem:[%s10 + $0x20] sm:$0xff]
          %v2169 = vld [vmem:[%s10 + $0x28] sm:$0xff]
          %v2170 = vld [vmem:[%s10 + $0x60] sm:$0xff]
          %v2171 = vld [vmem:[%s10 + $0x68] sm:$0xff]
          %v2172 = vld [vmem:[%s10 + $0xa0] sm:$0xff]
          %v2173 = vld [vmem:[%s10 + $0xa8] sm:$0xff]
          %v2174 = vld [vmem:[%s10 + $0xe0] sm:$0xff]
          %v2175 = vld [vmem:[%s10 + $0xe8] sm:$0xff]
          %v2176 = vld [vmem:[%s11 + $0x8] sm:$0xf]
          %v2178 = vlaneseq
          %v2179 = vshrl.u32 %v2178, 7
          %v2180 = vsub.s32 0, %v2179
          %v2181 = vrot.slane %v2176, %v2180
          %v2182 = vlaneseq
          %v2183 = vshrl.u32 %v2182, 7
          %v2184 = vsub.s32 1, %v2183
          %v2185 = vrot.slane %v2176, %v2184
          %v2186 = vlaneseq
          %v2187 = vshrl.u32 %v2186, 7
          %v2188 = vsub.s32 2, %v2187
          %v2189 = vrot.slane %v2176, %v2188
          %v2190 = vlaneseq
          %v2191 = vshrl.u32 %v2190, 7
          %v2192 = vsub.s32 3, %v2191
          %v2193 = vrot.slane %v2176, %v2192
          %v2206 = vunpack.c.l.b16 %v2168
          %v2207 = vunpack.c.h.b16 %v2168
          %v2208 = vunpack.c.l.b16 %v2169
          %v2209 = vunpack.c.h.b16 %v2169
          %v2210 = vunpack.c.l.b16 %v2170
          %v2211 = vunpack.c.h.b16 %v2170
          %v2212 = vunpack.c.l.b16 %v2171
          %v2213 = vunpack.c.h.b16 %v2171
          %v2214 = vunpack.c.l.b16 %v2172
          %v2215 = vunpack.c.h.b16 %v2172
          %v2216 = vunpack.c.l.b16 %v2173
          %v2217 = vunpack.c.h.b16 %v2173
          %v2218 = vunpack.c.l.b16 %v2174
          %v2219 = vunpack.c.h.b16 %v2174
          %v2220 = vunpack.c.l.b16 %v2175
          %v2221 = vunpack.c.h.b16 %v2175
          %v2222 = vpack.c.b16 %v2210, %v2206
          %v2223 = vpack.c.b16 %v2211, %v2207
          %v2224 = vpack.c.b16 %v2212, %v2208
          %v2225 = vpack.c.b16 %v2213, %v2209
          %v2226 = vpack.c.b16 %v2218, %v2214
          %v2227 = vpack.c.b16 %v2219, %v2215
          %v2228 = vpack.c.b16 %v2220, %v2216
          %v2229 = vpack.c.b16 %v2221, %v2217
          %2238 = vmatprep.subr.bf16.mxu0 0
          %2239 = vmatpush1.bf16.msra.mxu0 0
          %2240 = vmatprep.subr.bf16.mxu0 0
          %2241 = vmatpush1.bf16.msra.mxu0 0
          %2242 = vmatprep.subr.bf16.mxu0 0
          %2243 = vmatpush1.bf16.msra.mxu0 0
          %2244 = vmatprep.subr.bf16.mxu0 0
          %2245 = vmatpush1.bf16.msra.mxu0 0
          %2246 = vmatprep.subr.bf16.mxu0 0
          %2247 = vmatpush1.bf16.msra.mxu0 0
          %2248 = vmatprep.subr.bf16.mxu0 0
          %2249 = vmatpush1.bf16.msra.mxu0 0
          %2250 = vmatprep.subr.bf16.mxu0 %v2227
          %2251 = vmatpush1.bf16.msra.mxu0 %v2226
          %2252 = vmatprep.subr.bf16.mxu0 %v2223
          %2253 = vmatpush1.bf16.msra.mxu0 %v2222
          %2254 = vmatprep.subr.bf16.mxu0 0
          %2255 = vmatpush2.bf16.msra.mxu0 0
          %2256 = vmatprep.subr.bf16.mxu0 0
          %2257 = vmatpush2.bf16.msra.mxu0 0
          %2258 = vmatprep.subr.bf16.mxu0 0
          %2259 = vmatpush2.bf16.msra.mxu0 0
          %2260 = vmatprep.subr.bf16.mxu0 0
          %2261 = vmatpush2.bf16.msra.mxu0 0
          %2262 = vmatprep.subr.bf16.mxu0 0
          %2263 = vmatpush2.bf16.msra.mxu0 0
          %2264 = vmatprep.subr.bf16.mxu0 0
          %2265 = vmatpush2.bf16.msra.mxu0 0
          %2266 = vmatprep.subr.bf16.mxu0 0
          %2267 = vmatpush2.bf16.msra.mxu0 0
          %2268 = vmatprep.subr.bf16.mxu0 0
          %2269 = vmatpush2.bf16.msra.mxu0 0
          %2270 = vmatprep.mubr.bf16.mxu0 0
          %2271 = vmatmul.mubr.bf16.gmra.mxu0 %v1244
          %v2272 = vpop.f32.mrf.mxu0
          %v2273 = vadd.f32 %v2181, %v2272
          %v2274 = vpop.f32.mrf.mxu0
          %v2275 = vadd.f32 %v2185, %v2274
          %v2276 = vpop.f32.mrf.mxu0
          %v2277 = vpop.f32.mrf.mxu0
          %2278 = vdwg.mxu0
          %2279 = vmatprep.subr.bf16.mxu0 0
          %2280 = vmatpush1.bf16.msra.mxu0 0
          %2281 = vmatprep.subr.bf16.mxu0 0
          %2282 = vmatpush1.bf16.msra.mxu0 0
          %2283 = vmatprep.subr.bf16.mxu0 0
          %2284 = vmatpush1.bf16.msra.mxu0 0
          %2285 = vmatprep.subr.bf16.mxu0 0
          %2286 = vmatpush1.bf16.msra.mxu0 0
          %2287 = vmatprep.subr.bf16.mxu0 0
          %2288 = vmatpush1.bf16.msra.mxu0 0
          %2289 = vmatprep.subr.bf16.mxu0 0
          %2290 = vmatpush1.bf16.msra.mxu0 0
          %2291 = vmatprep.subr.bf16.mxu0 %v2229
          %2292 = vmatpush1.bf16.msra.mxu0 %v2228
          %2293 = vmatprep.subr.bf16.mxu0 %v2225
          %2294 = vmatpush1.bf16.msra.mxu0 %v2224
          %2295 = vmatprep.subr.bf16.mxu0 0
          %2296 = vmatpush2.bf16.msra.mxu0 0
          %2297 = vmatprep.subr.bf16.mxu0 0
          %2298 = vmatpush2.bf16.msra.mxu0 0
          %2299 = vmatprep.subr.bf16.mxu0 0
          %2300 = vmatpush2.bf16.msra.mxu0 0
          %2301 = vmatprep.subr.bf16.mxu0 0
          %2302 = vmatpush2.bf16.msra.mxu0 0
          %2303 = vmatprep.subr.bf16.mxu0 0
          %2304 = vmatpush2.bf16.msra.mxu0 0
          %2305 = vmatprep.subr.bf16.mxu0 0
          %2306 = vmatpush2.bf16.msra.mxu0 0
          %2307 = vmatprep.subr.bf16.mxu0 0
          %2308 = vmatpush2.bf16.msra.mxu0 0
          %2309 = vmatprep.subr.bf16.mxu0 0
          %2310 = vmatpush2.bf16.msra.mxu0 0
          %2311 = vmatprep.mubr.bf16.mxu0 0
          %2312 = vmatmul.mubr.bf16.gmra.mxu0 %v1244
          %v2313 = vpop.f32.mrf.mxu0
          %v2314 = vadd.f32 %v2189, %v2313
          %v2315 = vpop.f32.mrf.mxu0
          %v2316 = vadd.f32 %v2193, %v2315
          %v2317 = vpop.f32.mrf.mxu0
          %v2318 = vpop.f32.mrf.mxu0
          %2319 = vdwg.mxu0
          %v2320 = vmax.f32 %v2273, 0.0
          %v2321 = vmax.f32 %v2275, 0.0
          %v2322 = vmax.f32 %v2314, 0.0
          %v2323 = vmax.f32 %v2316, 0.0
          %v2324 = vpack.c.bf16 %v2320, %v2320
          %v2325 = vpack.c.bf16 %v2321, %v2321
          %v2326 = vpack.c.bf16 %v2322, %v2322
          %v2327 = vpack.c.bf16 %v2323, %v2323
          %v2328 = vld [vmem:[%s12 + $0x200] sm:$0xf]
          %v2329 = vld [vmem:[%s12 + $0x204] sm:$0xf]
          %v2330 = vld [vmem:[%s12 + $0x208] sm:$0xf]
          %v2331 = vld [vmem:[%s12 + $0x20c] sm:$0xf]
          %v2332 = vld [vmem:[%s12 + $0x210] sm:$0xf]
          %v2333 = vld [vmem:[%s12 + $0x214] sm:$0xf]
          %v2334 = vld [vmem:[%s12 + $0x218] sm:$0xf]
          %v2335 = vld [vmem:[%s12 + $0x21c] sm:$0xf]
          %v2336 = vld [vmem:[%s12 + $0x220] sm:$0xf]
          %v2337 = vld [vmem:[%s12 + $0x224] sm:$0xf]
          %v2338 = vld [vmem:[%s12 + $0x228] sm:$0xf]
          %v2339 = vld [vmem:[%s12 + $0x22c] sm:$0xf]
          %v2340 = vld [vmem:[%s12 + $0x230] sm:$0xf]
          %v2341 = vld [vmem:[%s12 + $0x234] sm:$0xf]
          %v2342 = vld [vmem:[%s12 + $0x238] sm:$0xf]
          %v2343 = vld [vmem:[%s12 + $0x23c] sm:$0xf]
          %v2344 = vld [vmem:[%s12 + $0x240] sm:$0xf]
          %v2345 = vld [vmem:[%s12 + $0x244] sm:$0xf]
          %v2346 = vld [vmem:[%s12 + $0x248] sm:$0xf]
          %v2347 = vld [vmem:[%s12 + $0x24c] sm:$0xf]
          %v2348 = vld [vmem:[%s12 + $0x250] sm:$0xf]
          %v2349 = vld [vmem:[%s12 + $0x254] sm:$0xf]
          %v2350 = vld [vmem:[%s12 + $0x258] sm:$0xf]
          %v2351 = vld [vmem:[%s12 + $0x25c] sm:$0xf]
          %v2352 = vld [vmem:[%s12 + $0x260] sm:$0xf]
          %v2353 = vld [vmem:[%s12 + $0x264] sm:$0xf]
          %v2354 = vld [vmem:[%s12 + $0x268] sm:$0xf]
          %v2355 = vld [vmem:[%s12 + $0x26c] sm:$0xf]
          %v2356 = vld [vmem:[%s12 + $0x270] sm:$0xf]
          %v2357 = vld [vmem:[%s12 + $0x274] sm:$0xf]
          %v2358 = vld [vmem:[%s12 + $0x278] sm:$0xf]
          %v2359 = vld [vmem:[%s12 + $0x27c] sm:$0xf]
          %v2360 = vld [vmem:[%s12 + $0x280] sm:$0xf]
          %v2361 = vld [vmem:[%s12 + $0x284] sm:$0xf]
          %v2362 = vld [vmem:[%s12 + $0x288] sm:$0xf]
          %v2363 = vld [vmem:[%s12 + $0x28c] sm:$0xf]
          %v2364 = vld [vmem:[%s12 + $0x290] sm:$0xf]
          %v2365 = vld [vmem:[%s12 + $0x294] sm:$0xf]
          %v2366 = vld [vmem:[%s12 + $0x298] sm:$0xf]
          %v2367 = vld [vmem:[%s12 + $0x29c] sm:$0xf]
          %v2368 = vld [vmem:[%s12 + $0x2a0] sm:$0xf]
          %v2369 = vld [vmem:[%s12 + $0x2a4] sm:$0xf]
          %v2370 = vld [vmem:[%s12 + $0x2a8] sm:$0xf]
          %v2371 = vld [vmem:[%s12 + $0x2ac] sm:$0xf]
          %v2372 = vld [vmem:[%s12 + $0x2b0] sm:$0xf]
          %v2373 = vld [vmem:[%s12 + $0x2b4] sm:$0xf]
          %v2374 = vld [vmem:[%s12 + $0x2b8] sm:$0xf]
          %v2375 = vld [vmem:[%s12 + $0x2bc] sm:$0xf]
          %v2376 = vld [vmem:[%s12 + $0x2c0] sm:$0xf]
          %v2377 = vld [vmem:[%s12 + $0x2c4] sm:$0xf]
          %v2378 = vld [vmem:[%s12 + $0x2c8] sm:$0xf]
          %v2379 = vld [vmem:[%s12 + $0x2cc] sm:$0xf]
          %v2380 = vld [vmem:[%s12 + $0x2d0] sm:$0xf]
          %v2381 = vld [vmem:[%s12 + $0x2d4] sm:$0xf]
          %v2382 = vld [vmem:[%s12 + $0x2d8] sm:$0xf]
          %v2383 = vld [vmem:[%s12 + $0x2dc] sm:$0xf]
          %v2384 = vld [vmem:[%s12 + $0x2e0] sm:$0xf]
          %v2385 = vld [vmem:[%s12 + $0x2e4] sm:$0xf]
          %v2386 = vld [vmem:[%s12 + $0x2e8] sm:$0xf]
          %v2387 = vld [vmem:[%s12 + $0x2ec] sm:$0xf]
          %v2388 = vld [vmem:[%s12 + $0x2f0] sm:$0xf]
          %v2389 = vld [vmem:[%s12 + $0x2f4] sm:$0xf]
          %v2390 = vld [vmem:[%s12 + $0x2f8] sm:$0xf]
          %v2391 = vld [vmem:[%s12 + $0x2fc] sm:$0xf]
          %v2456 = vunpack.c.l.b16 %v2328
          %v2457 = vunpack.c.l.b16 %v2329
          %v2458 = vunpack.c.l.b16 %v2330
          %v2459 = vunpack.c.l.b16 %v2331
          %v2460 = vunpack.c.l.b16 %v2332
          %v2461 = vunpack.c.l.b16 %v2333
          %v2462 = vunpack.c.l.b16 %v2334
          %v2463 = vunpack.c.l.b16 %v2335
          %v2464 = vunpack.c.l.b16 %v2336
          %v2465 = vunpack.c.l.b16 %v2337
          %v2466 = vunpack.c.l.b16 %v2338
          %v2467 = vunpack.c.l.b16 %v2339
          %v2468 = vunpack.c.l.b16 %v2340
          %v2469 = vunpack.c.l.b16 %v2341
          %v2470 = vunpack.c.l.b16 %v2342
          %v2471 = vunpack.c.l.b16 %v2343
          %v2472 = vunpack.c.l.b16 %v2344
          %v2473 = vunpack.c.l.b16 %v2345
          %v2474 = vunpack.c.l.b16 %v2346
          %v2475 = vunpack.c.l.b16 %v2347
          %v2476 = vunpack.c.l.b16 %v2348
          %v2477 = vunpack.c.l.b16 %v2349
          %v2478 = vunpack.c.l.b16 %v2350
          %v2479 = vunpack.c.l.b16 %v2351
          %v2480 = vunpack.c.l.b16 %v2352
          %v2481 = vunpack.c.l.b16 %v2353
          %v2482 = vunpack.c.l.b16 %v2354
          %v2483 = vunpack.c.l.b16 %v2355
          %v2484 = vunpack.c.l.b16 %v2356
          %v2485 = vunpack.c.l.b16 %v2357
          %v2486 = vunpack.c.l.b16 %v2358
          %v2487 = vunpack.c.l.b16 %v2359
          %v2488 = vunpack.c.l.b16 %v2360
          %v2489 = vunpack.c.l.b16 %v2361
          %v2490 = vunpack.c.l.b16 %v2362
          %v2491 = vunpack.c.l.b16 %v2363
          %v2492 = vunpack.c.l.b16 %v2364
          %v2493 = vunpack.c.l.b16 %v2365
          %v2494 = vunpack.c.l.b16 %v2366
          %v2495 = vunpack.c.l.b16 %v2367
          %v2496 = vunpack.c.l.b16 %v2368
          %v2497 = vunpack.c.l.b16 %v2369
          %v2498 = vunpack.c.l.b16 %v2370
          %v2499 = vunpack.c.l.b16 %v2371
          %v2500 = vunpack.c.l.b16 %v2372
          %v2501 = vunpack.c.l.b16 %v2373
          %v2502 = vunpack.c.l.b16 %v2374
          %v2503 = vunpack.c.l.b16 %v2375
          %v2504 = vunpack.c.l.b16 %v2376
          %v2505 = vunpack.c.l.b16 %v2377
          %v2506 = vunpack.c.l.b16 %v2378
          %v2507 = vunpack.c.l.b16 %v2379
          %v2508 = vunpack.c.l.b16 %v2380
          %v2509 = vunpack.c.l.b16 %v2381
          %v2510 = vunpack.c.l.b16 %v2382
          %v2511 = vunpack.c.l.b16 %v2383
          %v2512 = vunpack.c.l.b16 %v2384
          %v2513 = vunpack.c.l.b16 %v2385
          %v2514 = vunpack.c.l.b16 %v2386
          %v2515 = vunpack.c.l.b16 %v2387
          %v2516 = vunpack.c.l.b16 %v2388
          %v2517 = vunpack.c.l.b16 %v2389
          %v2518 = vunpack.c.l.b16 %v2390
          %v2519 = vunpack.c.l.b16 %v2391
          %v2520 = vpack.c.b16 %v2457, %v2456
          %v2521 = vpack.c.b16 %v2459, %v2458
          %v2522 = vpack.c.b16 %v2461, %v2460
          %v2523 = vpack.c.b16 %v2463, %v2462
          %v2524 = vpack.c.b16 %v2465, %v2464
          %v2525 = vpack.c.b16 %v2467, %v2466
          %v2526 = vpack.c.b16 %v2469, %v2468
          %v2527 = vpack.c.b16 %v2471, %v2470
          %v2528 = vpack.c.b16 %v2473, %v2472
          %v2529 = vpack.c.b16 %v2475, %v2474
          %v2530 = vpack.c.b16 %v2477, %v2476
          %v2531 = vpack.c.b16 %v2479, %v2478
          %v2532 = vpack.c.b16 %v2481, %v2480
          %v2533 = vpack.c.b16 %v2483, %v2482
          %v2534 = vpack.c.b16 %v2485, %v2484
          %v2535 = vpack.c.b16 %v2487, %v2486
          %v2536 = vpack.c.b16 %v2489, %v2488
          %v2537 = vpack.c.b16 %v2491, %v2490
          %v2538 = vpack.c.b16 %v2493, %v2492
          %v2539 = vpack.c.b16 %v2495, %v2494
          %v2540 = vpack.c.b16 %v2497, %v2496
          %v2541 = vpack.c.b16 %v2499, %v2498
          %v2542 = vpack.c.b16 %v2501, %v2500
          %v2543 = vpack.c.b16 %v2503, %v2502
          %v2544 = vpack.c.b16 %v2505, %v2504
          %v2545 = vpack.c.b16 %v2507, %v2506
          %v2546 = vpack.c.b16 %v2509, %v2508
          %v2547 = vpack.c.b16 %v2511, %v2510
          %v2548 = vpack.c.b16 %v2513, %v2512
          %v2549 = vpack.c.b16 %v2515, %v2514
          %v2550 = vpack.c.b16 %v2517, %v2516
          %v2551 = vpack.c.b16 %v2519, %v2518
          %2584 = vmatprep.subr.bf16.mxu0 0
          %2585 = vmatpush1.bf16.msra.mxu0 %v2527
          %2586 = vmatprep.subr.bf16.mxu0 0
          %2587 = vmatpush1.bf16.msra.mxu0 %v2526
          %2588 = vmatprep.subr.bf16.mxu0 0
          %2589 = vmatpush1.bf16.msra.mxu0 %v2525
          %2590 = vmatprep.subr.bf16.mxu0 0
          %2591 = vmatpush1.bf16.msra.mxu0 %v2524
          %2592 = vmatprep.subr.bf16.mxu0 0
          %2593 = vmatpush1.bf16.msra.mxu0 %v2523
          %2594 = vmatprep.subr.bf16.mxu0 0
          %2595 = vmatpush1.bf16.msra.mxu0 %v2522
          %2596 = vmatprep.subr.bf16.mxu0 0
          %2597 = vmatpush1.bf16.msra.mxu0 %v2521
          %2598 = vmatprep.subr.bf16.mxu0 0
          %2599 = vmatpush1.bf16.msra.mxu0 %v2520
          %2600 = vmatprep.subr.bf16.mxu0 0
          %2601 = vmatpush2.bf16.msra.mxu0 %v2535
          %2602 = vmatprep.subr.bf16.mxu0 0
          %2603 = vmatpush2.bf16.msra.mxu0 %v2534
          %2604 = vmatprep.subr.bf16.mxu0 0
          %2605 = vmatpush2.bf16.msra.mxu0 %v2533
          %2606 = vmatprep.subr.bf16.mxu0 0
          %2607 = vmatpush2.bf16.msra.mxu0 %v2532
          %2608 = vmatprep.subr.bf16.mxu0 0
          %2609 = vmatpush2.bf16.msra.mxu0 %v2531
          %2610 = vmatprep.subr.bf16.mxu0 0
          %2611 = vmatpush2.bf16.msra.mxu0 %v2530
          %2612 = vmatprep.subr.bf16.mxu0 0
          %2613 = vmatpush2.bf16.msra.mxu0 %v2529
          %2614 = vmatprep.subr.bf16.mxu0 0
          %2615 = vmatpush2.bf16.msra.mxu0 %v2528
          %2616 = vmatprep.mubr.bf16.mxu0 %v2325
          %2617 = vmatmul.mubr.bf16.gmra.mxu0 %v2324
          %v2618 = vpop.f32.mrf.mxu0
          %v2619 = vadd.f32 0.0, %v2618
          %v2620 = vpop.f32.mrf.mxu0
          %v2621 = vpop.f32.mrf.mxu0
          %v2622 = vpop.f32.mrf.mxu0
          %2623 = vdwg.mxu0
          %2624 = vmatprep.subr.bf16.mxu0 0
          %2625 = vmatpush1.bf16.msra.mxu0 %v2543
          %2626 = vmatprep.subr.bf16.mxu0 0
          %2627 = vmatpush1.bf16.msra.mxu0 %v2542
          %2628 = vmatprep.subr.bf16.mxu0 0
          %2629 = vmatpush1.bf16.msra.mxu0 %v2541
          %2630 = vmatprep.subr.bf16.mxu0 0
          %2631 = vmatpush1.bf16.msra.mxu0 %v2540
          %2632 = vmatprep.subr.bf16.mxu0 0
          %2633 = vmatpush1.bf16.msra.mxu0 %v2539
          %2634 = vmatprep.subr.bf16.mxu0 0
          %2635 = vmatpush1.bf16.msra.mxu0 %v2538
          %2636 = vmatprep.subr.bf16.mxu0 0
          %2637 = vmatpush1.bf16.msra.mxu0 %v2537
          %2638 = vmatprep.subr.bf16.mxu0 0
          %2639 = vmatpush1.bf16.msra.mxu0 %v2536
          %2640 = vmatprep.subr.bf16.mxu0 0
          %2641 = vmatpush2.bf16.msra.mxu0 %v2551
          %2642 = vmatprep.subr.bf16.mxu0 0
          %2643 = vmatpush2.bf16.msra.mxu0 %v2550
          %2644 = vmatprep.subr.bf16.mxu0 0
          %2645 = vmatpush2.bf16.msra.mxu0 %v2549
          %2646 = vmatprep.subr.bf16.mxu0 0
          %2647 = vmatpush2.bf16.msra.mxu0 %v2548
          %2648 = vmatprep.subr.bf16.mxu0 0
          %2649 = vmatpush2.bf16.msra.mxu0 %v2547
          %2650 = vmatprep.subr.bf16.mxu0 0
          %2651 = vmatpush2.bf16.msra.mxu0 %v2546
          %2652 = vmatprep.subr.bf16.mxu0 0
          %2653 = vmatpush2.bf16.msra.mxu0 %v2545
          %2654 = vmatprep.subr.bf16.mxu0 0
          %2655 = vmatpush2.bf16.msra.mxu0 %v2544
          %2656 = vmatprep.mubr.bf16.mxu0 %v2327
          %2657 = vmatmul.mubr.bf16.gmra.mxu0 %v2326
          %v2658 = vpop.f32.mrf.mxu0
          %v2659 = vadd.f32 %v2619, %v2658
          %v2660 = vpop.f32.mrf.mxu0
          %v2661 = vpop.f32.mrf.mxu0
          %v2662 = vpop.f32.mrf.mxu0
          %2663 = vdwg.mxu0
          %v2664 = vadd.f32 %v2163, %v2659
          %v2665 = vld [vmem:[%s10 + $0x30] sm:$0xff]
          %v2666 = vld [vmem:[%s10 + $0x38] sm:$0xff]
          %v2667 = vld [vmem:[%s10 + $0x70] sm:$0xff]
          %v2668 = vld [vmem:[%s10 + $0x78] sm:$0xff]
          %v2669 = vld [vmem:[%s10 + $0xb0] sm:$0xff]
          %v2670 = vld [vmem:[%s10 + $0xb8] sm:$0xff]
          %v2671 = vld [vmem:[%s10 + $0xf0] sm:$0xff]
          %v2672 = vld [vmem:[%s10 + $0xf8] sm:$0xff]
          %v2673 = vld [vmem:[%s11 + $0xc] sm:$0xf]
          %v2675 = vlaneseq
          %v2676 = vshrl.u32 %v2675, 7
          %v2677 = vsub.s32 0, %v2676
          %v2678 = vrot.slane %v2673, %v2677
          %v2679 = vlaneseq
          %v2680 = vshrl.u32 %v2679, 7
          %v2681 = vsub.s32 1, %v2680
          %v2682 = vrot.slane %v2673, %v2681
          %v2683 = vlaneseq
          %v2684 = vshrl.u32 %v2683, 7
          %v2685 = vsub.s32 2, %v2684
          %v2686 = vrot.slane %v2673, %v2685
          %v2687 = vlaneseq
          %v2688 = vshrl.u32 %v2687, 7
          %v2689 = vsub.s32 3, %v2688
          %v2690 = vrot.slane %v2673, %v2689
          %v2703 = vunpack.c.l.b16 %v2665
          %v2704 = vunpack.c.h.b16 %v2665
          %v2705 = vunpack.c.l.b16 %v2666
          %v2706 = vunpack.c.h.b16 %v2666
          %v2707 = vunpack.c.l.b16 %v2667
          %v2708 = vunpack.c.h.b16 %v2667
          %v2709 = vunpack.c.l.b16 %v2668
          %v2710 = vunpack.c.h.b16 %v2668
          %v2711 = vunpack.c.l.b16 %v2669
          %v2712 = vunpack.c.h.b16 %v2669
          %v2713 = vunpack.c.l.b16 %v2670
          %v2714 = vunpack.c.h.b16 %v2670
          %v2715 = vunpack.c.l.b16 %v2671
          %v2716 = vunpack.c.h.b16 %v2671
          %v2717 = vunpack.c.l.b16 %v2672
          %v2718 = vunpack.c.h.b16 %v2672
          %v2719 = vpack.c.b16 %v2707, %v2703
          %v2720 = vpack.c.b16 %v2708, %v2704
          %v2721 = vpack.c.b16 %v2709, %v2705
          %v2722 = vpack.c.b16 %v2710, %v2706
          %v2723 = vpack.c.b16 %v2715, %v2711
          %v2724 = vpack.c.b16 %v2716, %v2712
          %v2725 = vpack.c.b16 %v2717, %v2713
          %v2726 = vpack.c.b16 %v2718, %v2714
          %2735 = vmatprep.subr.bf16.mxu0 0
          %2736 = vmatpush1.bf16.msra.mxu0 0
          %2737 = vmatprep.subr.bf16.mxu0 0
          %2738 = vmatpush1.bf16.msra.mxu0 0
          %2739 = vmatprep.subr.bf16.mxu0 0
          %2740 = vmatpush1.bf16.msra.mxu0 0
          %2741 = vmatprep.subr.bf16.mxu0 0
          %2742 = vmatpush1.bf16.msra.mxu0 0
          %2743 = vmatprep.subr.bf16.mxu0 0
          %2744 = vmatpush1.bf16.msra.mxu0 0
          %2745 = vmatprep.subr.bf16.mxu0 0
          %2746 = vmatpush1.bf16.msra.mxu0 0
          %2747 = vmatprep.subr.bf16.mxu0 %v2724
          %2748 = vmatpush1.bf16.msra.mxu0 %v2723
          %2749 = vmatprep.subr.bf16.mxu0 %v2720
          %2750 = vmatpush1.bf16.msra.mxu0 %v2719
          %2751 = vmatprep.subr.bf16.mxu0 0
          %2752 = vmatpush2.bf16.msra.mxu0 0
          %2753 = vmatprep.subr.bf16.mxu0 0
          %2754 = vmatpush2.bf16.msra.mxu0 0
          %2755 = vmatprep.subr.bf16.mxu0 0
          %2756 = vmatpush2.bf16.msra.mxu0 0
          %2757 = vmatprep.subr.bf16.mxu0 0
          %2758 = vmatpush2.bf16.msra.mxu0 0
          %2759 = vmatprep.subr.bf16.mxu0 0
          %2760 = vmatpush2.bf16.msra.mxu0 0
          %2761 = vmatprep.subr.bf16.mxu0 0
          %2762 = vmatpush2.bf16.msra.mxu0 0
          %2763 = vmatprep.subr.bf16.mxu0 0
          %2764 = vmatpush2.bf16.msra.mxu0 0
          %2765 = vmatprep.subr.bf16.mxu0 0
          %2766 = vmatpush2.bf16.msra.mxu0 0
          %2767 = vmatprep.mubr.bf16.mxu0 0
          %2768 = vmatmul.mubr.bf16.gmra.mxu0 %v1244
          %v2769 = vpop.f32.mrf.mxu0
          %v2770 = vadd.f32 %v2678, %v2769
          %v2771 = vpop.f32.mrf.mxu0
          %v2772 = vadd.f32 %v2682, %v2771
          %v2773 = vpop.f32.mrf.mxu0
          %v2774 = vpop.f32.mrf.mxu0
          %2775 = vdwg.mxu0
          %2776 = vmatprep.subr.bf16.mxu0 0
          %2777 = vmatpush1.bf16.msra.mxu0 0
          %2778 = vmatprep.subr.bf16.mxu0 0
          %2779 = vmatpush1.bf16.msra.mxu0 0
          %2780 = vmatprep.subr.bf16.mxu0 0
          %2781 = vmatpush1.bf16.msra.mxu0 0
          %2782 = vmatprep.subr.bf16.mxu0 0
          %2783 = vmatpush1.bf16.msra.mxu0 0
          %2784 = vmatprep.subr.bf16.mxu0 0
          %2785 = vmatpush1.bf16.msra.mxu0 0
          %2786 = vmatprep.subr.bf16.mxu0 0
          %2787 = vmatpush1.bf16.msra.mxu0 0
          %2788 = vmatprep.subr.bf16.mxu0 %v2726
          %2789 = vmatpush1.bf16.msra.mxu0 %v2725
          %2790 = vmatprep.subr.bf16.mxu0 %v2722
          %2791 = vmatpush1.bf16.msra.mxu0 %v2721
          %2792 = vmatprep.subr.bf16.mxu0 0
          %2793 = vmatpush2.bf16.msra.mxu0 0
          %2794 = vmatprep.subr.bf16.mxu0 0
          %2795 = vmatpush2.bf16.msra.mxu0 0
          %2796 = vmatprep.subr.bf16.mxu0 0
          %2797 = vmatpush2.bf16.msra.mxu0 0
          %2798 = vmatprep.subr.bf16.mxu0 0
          %2799 = vmatpush2.bf16.msra.mxu0 0
          %2800 = vmatprep.subr.bf16.mxu0 0
          %2801 = vmatpush2.bf16.msra.mxu0 0
          %2802 = vmatprep.subr.bf16.mxu0 0
          %2803 = vmatpush2.bf16.msra.mxu0 0
          %2804 = vmatprep.subr.bf16.mxu0 0
          %2805 = vmatpush2.bf16.msra.mxu0 0
          %2806 = vmatprep.subr.bf16.mxu0 0
          %2807 = vmatpush2.bf16.msra.mxu0 0
          %2808 = vmatprep.mubr.bf16.mxu0 0
          %2809 = vmatmul.mubr.bf16.gmra.mxu0 %v1244
          %v2810 = vpop.f32.mrf.mxu0
          %v2811 = vadd.f32 %v2686, %v2810
          %v2812 = vpop.f32.mrf.mxu0
          %v2813 = vadd.f32 %v2690, %v2812
          %v2814 = vpop.f32.mrf.mxu0
          %v2815 = vpop.f32.mrf.mxu0
          %2816 = vdwg.mxu0
          %v2817 = vmax.f32 %v2770, 0.0
          %v2818 = vmax.f32 %v2772, 0.0
          %v2819 = vmax.f32 %v2811, 0.0
          %v2820 = vmax.f32 %v2813, 0.0
          %v2821 = vpack.c.bf16 %v2817, %v2817
          %v2822 = vpack.c.bf16 %v2818, %v2818
          %v2823 = vpack.c.bf16 %v2819, %v2819
          %v2824 = vpack.c.bf16 %v2820, %v2820
          %v2825 = vld [vmem:[%s12 + $0x300] sm:$0xf]
          %v2826 = vld [vmem:[%s12 + $0x304] sm:$0xf]
          %v2827 = vld [vmem:[%s12 + $0x308] sm:$0xf]
          %v2828 = vld [vmem:[%s12 + $0x30c] sm:$0xf]
          %v2829 = vld [vmem:[%s12 + $0x310] sm:$0xf]
          %v2830 = vld [vmem:[%s12 + $0x314] sm:$0xf]
          %v2831 = vld [vmem:[%s12 + $0x318] sm:$0xf]
          %v2832 = vld [vmem:[%s12 + $0x31c] sm:$0xf]
          %v2833 = vld [vmem:[%s12 + $0x320] sm:$0xf]
          %v2834 = vld [vmem:[%s12 + $0x324] sm:$0xf]
          %v2835 = vld [vmem:[%s12 + $0x328] sm:$0xf]
          %v2836 = vld [vmem:[%s12 + $0x32c] sm:$0xf]
          %v2837 = vld [vmem:[%s12 + $0x330] sm:$0xf]
          %v2838 = vld [vmem:[%s12 + $0x334] sm:$0xf]
          %v2839 = vld [vmem:[%s12 + $0x338] sm:$0xf]
          %v2840 = vld [vmem:[%s12 + $0x33c] sm:$0xf]
          %v2841 = vld [vmem:[%s12 + $0x340] sm:$0xf]
          %v2842 = vld [vmem:[%s12 + $0x344] sm:$0xf]
          %v2843 = vld [vmem:[%s12 + $0x348] sm:$0xf]
          %v2844 = vld [vmem:[%s12 + $0x34c] sm:$0xf]
          %v2845 = vld [vmem:[%s12 + $0x350] sm:$0xf]
          %v2846 = vld [vmem:[%s12 + $0x354] sm:$0xf]
          %v2847 = vld [vmem:[%s12 + $0x358] sm:$0xf]
          %v2848 = vld [vmem:[%s12 + $0x35c] sm:$0xf]
          %v2849 = vld [vmem:[%s12 + $0x360] sm:$0xf]
          %v2850 = vld [vmem:[%s12 + $0x364] sm:$0xf]
          %v2851 = vld [vmem:[%s12 + $0x368] sm:$0xf]
          %v2852 = vld [vmem:[%s12 + $0x36c] sm:$0xf]
          %v2853 = vld [vmem:[%s12 + $0x370] sm:$0xf]
          %v2854 = vld [vmem:[%s12 + $0x374] sm:$0xf]
          %v2855 = vld [vmem:[%s12 + $0x378] sm:$0xf]
          %v2856 = vld [vmem:[%s12 + $0x37c] sm:$0xf]
          %v2857 = vld [vmem:[%s12 + $0x380] sm:$0xf]
          %v2858 = vld [vmem:[%s12 + $0x384] sm:$0xf]
          %v2859 = vld [vmem:[%s12 + $0x388] sm:$0xf]
          %v2860 = vld [vmem:[%s12 + $0x38c] sm:$0xf]
          %v2861 = vld [vmem:[%s12 + $0x390] sm:$0xf]
          %v2862 = vld [vmem:[%s12 + $0x394] sm:$0xf]
          %v2863 = vld [vmem:[%s12 + $0x398] sm:$0xf]
          %v2864 = vld [vmem:[%s12 + $0x39c] sm:$0xf]
          %v2865 = vld [vmem:[%s12 + $0x3a0] sm:$0xf]
          %v2866 = vld [vmem:[%s12 + $0x3a4] sm:$0xf]
          %v2867 = vld [vmem:[%s12 + $0x3a8] sm:$0xf]
          %v2868 = vld [vmem:[%s12 + $0x3ac] sm:$0xf]
          %v2869 = vld [vmem:[%s12 + $0x3b0] sm:$0xf]
          %v2870 = vld [vmem:[%s12 + $0x3b4] sm:$0xf]
          %v2871 = vld [vmem:[%s12 + $0x3b8] sm:$0xf]
          %v2872 = vld [vmem:[%s12 + $0x3bc] sm:$0xf]
          %v2873 = vld [vmem:[%s12 + $0x3c0] sm:$0xf]
          %v2874 = vld [vmem:[%s12 + $0x3c4] sm:$0xf]
          %v2875 = vld [vmem:[%s12 + $0x3c8] sm:$0xf]
          %v2876 = vld [vmem:[%s12 + $0x3cc] sm:$0xf]
          %v2877 = vld [vmem:[%s12 + $0x3d0] sm:$0xf]
          %v2878 = vld [vmem:[%s12 + $0x3d4] sm:$0xf]
          %v2879 = vld [vmem:[%s12 + $0x3d8] sm:$0xf]
          %v2880 = vld [vmem:[%s12 + $0x3dc] sm:$0xf]
          %v2881 = vld [vmem:[%s12 + $0x3e0] sm:$0xf]
          %v2882 = vld [vmem:[%s12 + $0x3e4] sm:$0xf]
          %v2883 = vld [vmem:[%s12 + $0x3e8] sm:$0xf]
          %v2884 = vld [vmem:[%s12 + $0x3ec] sm:$0xf]
          %v2885 = vld [vmem:[%s12 + $0x3f0] sm:$0xf]
          %v2886 = vld [vmem:[%s12 + $0x3f4] sm:$0xf]
          %v2887 = vld [vmem:[%s12 + $0x3f8] sm:$0xf]
          %v2888 = vld [vmem:[%s12 + $0x3fc] sm:$0xf]
          %v2953 = vunpack.c.l.b16 %v2825
          %v2954 = vunpack.c.l.b16 %v2826
          %v2955 = vunpack.c.l.b16 %v2827
          %v2956 = vunpack.c.l.b16 %v2828
          %v2957 = vunpack.c.l.b16 %v2829
          %v2958 = vunpack.c.l.b16 %v2830
          %v2959 = vunpack.c.l.b16 %v2831
          %v2960 = vunpack.c.l.b16 %v2832
          %v2961 = vunpack.c.l.b16 %v2833
          %v2962 = vunpack.c.l.b16 %v2834
          %v2963 = vunpack.c.l.b16 %v2835
          %v2964 = vunpack.c.l.b16 %v2836
          %v2965 = vunpack.c.l.b16 %v2837
          %v2966 = vunpack.c.l.b16 %v2838
          %v2967 = vunpack.c.l.b16 %v2839
          %v2968 = vunpack.c.l.b16 %v2840
          %v2969 = vunpack.c.l.b16 %v2841
          %v2970 = vunpack.c.l.b16 %v2842
          %v2971 = vunpack.c.l.b16 %v2843
          %v2972 = vunpack.c.l.b16 %v2844
          %v2973 = vunpack.c.l.b16 %v2845
          %v2974 = vunpack.c.l.b16 %v2846
          %v2975 = vunpack.c.l.b16 %v2847
          %v2976 = vunpack.c.l.b16 %v2848
          %v2977 = vunpack.c.l.b16 %v2849
          %v2978 = vunpack.c.l.b16 %v2850
          %v2979 = vunpack.c.l.b16 %v2851
          %v2980 = vunpack.c.l.b16 %v2852
          %v2981 = vunpack.c.l.b16 %v2853
          %v2982 = vunpack.c.l.b16 %v2854
          %v2983 = vunpack.c.l.b16 %v2855
          %v2984 = vunpack.c.l.b16 %v2856
          %v2985 = vunpack.c.l.b16 %v2857
          %v2986 = vunpack.c.l.b16 %v2858
          %v2987 = vunpack.c.l.b16 %v2859
          %v2988 = vunpack.c.l.b16 %v2860
          %v2989 = vunpack.c.l.b16 %v2861
          %v2990 = vunpack.c.l.b16 %v2862
          %v2991 = vunpack.c.l.b16 %v2863
          %v2992 = vunpack.c.l.b16 %v2864
          %v2993 = vunpack.c.l.b16 %v2865
          %v2994 = vunpack.c.l.b16 %v2866
          %v2995 = vunpack.c.l.b16 %v2867
          %v2996 = vunpack.c.l.b16 %v2868
          %v2997 = vunpack.c.l.b16 %v2869
          %v2998 = vunpack.c.l.b16 %v2870
          %v2999 = vunpack.c.l.b16 %v2871
          %v3000 = vunpack.c.l.b16 %v2872
          %v3001 = vunpack.c.l.b16 %v2873
          %v3002 = vunpack.c.l.b16 %v2874
          %v3003 = vunpack.c.l.b16 %v2875
          %v3004 = vunpack.c.l.b16 %v2876
          %v3005 = vunpack.c.l.b16 %v2877
          %v3006 = vunpack.c.l.b16 %v2878
          %v3007 = vunpack.c.l.b16 %v2879
          %v3008 = vunpack.c.l.b16 %v2880
          %v3009 = vunpack.c.l.b16 %v2881
          %v3010 = vunpack.c.l.b16 %v2882
          %v3011 = vunpack.c.l.b16 %v2883
          %v3012 = vunpack.c.l.b16 %v2884
          %v3013 = vunpack.c.l.b16 %v2885
          %v3014 = vunpack.c.l.b16 %v2886
          %v3015 = vunpack.c.l.b16 %v2887
          %v3016 = vunpack.c.l.b16 %v2888
          %v3017 = vpack.c.b16 %v2954, %v2953
          %v3018 = vpack.c.b16 %v2956, %v2955
          %v3019 = vpack.c.b16 %v2958, %v2957
          %v3020 = vpack.c.b16 %v2960, %v2959
          %v3021 = vpack.c.b16 %v2962, %v2961
          %v3022 = vpack.c.b16 %v2964, %v2963
          %v3023 = vpack.c.b16 %v2966, %v2965
          %v3024 = vpack.c.b16 %v2968, %v2967
          %v3025 = vpack.c.b16 %v2970, %v2969
          %v3026 = vpack.c.b16 %v2972, %v2971
          %v3027 = vpack.c.b16 %v2974, %v2973
          %v3028 = vpack.c.b16 %v2976, %v2975
          %v3029 = vpack.c.b16 %v2978, %v2977
          %v3030 = vpack.c.b16 %v2980, %v2979
          %v3031 = vpack.c.b16 %v2982, %v2981
          %v3032 = vpack.c.b16 %v2984, %v2983
          %v3033 = vpack.c.b16 %v2986, %v2985
          %v3034 = vpack.c.b16 %v2988, %v2987
          %v3035 = vpack.c.b16 %v2990, %v2989
          %v3036 = vpack.c.b16 %v2992, %v2991
          %v3037 = vpack.c.b16 %v2994, %v2993
          %v3038 = vpack.c.b16 %v2996, %v2995
          %v3039 = vpack.c.b16 %v2998, %v2997
          %v3040 = vpack.c.b16 %v3000, %v2999
          %v3041 = vpack.c.b16 %v3002, %v3001
          %v3042 = vpack.c.b16 %v3004, %v3003
          %v3043 = vpack.c.b16 %v3006, %v3005
          %v3044 = vpack.c.b16 %v3008, %v3007
          %v3045 = vpack.c.b16 %v3010, %v3009
          %v3046 = vpack.c.b16 %v3012, %v3011
          %v3047 = vpack.c.b16 %v3014, %v3013
          %v3048 = vpack.c.b16 %v3016, %v3015
          %3081 = vmatprep.subr.bf16.mxu0 0
          %3082 = vmatpush1.bf16.msra.mxu0 %v3024
          %3083 = vmatprep.subr.bf16.mxu0 0
          %3084 = vmatpush1.bf16.msra.mxu0 %v3023
          %3085 = vmatprep.subr.bf16.mxu0 0
          %3086 = vmatpush1.bf16.msra.mxu0 %v3022
          %3087 = vmatprep.subr.bf16.mxu0 0
          %3088 = vmatpush1.bf16.msra.mxu0 %v3021
          %3089 = vmatprep.subr.bf16.mxu0 0
          %3090 = vmatpush1.bf16.msra.mxu0 %v3020
          %3091 = vmatprep.subr.bf16.mxu0 0
          %3092 = vmatpush1.bf16.msra.mxu0 %v3019
          %3093 = vmatprep.subr.bf16.mxu0 0
          %3094 = vmatpush1.bf16.msra.mxu0 %v3018
          %3095 = vmatprep.subr.bf16.mxu0 0
          %3096 = vmatpush1.bf16.msra.mxu0 %v3017
          %3097 = vmatprep.subr.bf16.mxu0 0
          %3098 = vmatpush2.bf16.msra.mxu0 %v3032
          %3099 = vmatprep.subr.bf16.mxu0 0
          %3100 = vmatpush2.bf16.msra.mxu0 %v3031
          %3101 = vmatprep.subr.bf16.mxu0 0
          %3102 = vmatpush2.bf16.msra.mxu0 %v3030
          %3103 = vmatprep.subr.bf16.mxu0 0
          %3104 = vmatpush2.bf16.msra.mxu0 %v3029
          %3105 = vmatprep.subr.bf16.mxu0 0
          %3106 = vmatpush2.bf16.msra.mxu0 %v3028
          %3107 = vmatprep.subr.bf16.mxu0 0
          %3108 = vmatpush2.bf16.msra.mxu0 %v3027
          %3109 = vmatprep.subr.bf16.mxu0 0
          %3110 = vmatpush2.bf16.msra.mxu0 %v3026
          %3111 = vmatprep.subr.bf16.mxu0 0
          %3112 = vmatpush2.bf16.msra.mxu0 %v3025
          %3113 = vmatprep.mubr.bf16.mxu0 %v2822
          %3114 = vmatmul.mubr.bf16.gmra.mxu0 %v2821
          %v3115 = vpop.f32.mrf.mxu0
          %v3116 = vadd.f32 0.0, %v3115
          %v3117 = vpop.f32.mrf.mxu0
          %v3118 = vpop.f32.mrf.mxu0
          %v3119 = vpop.f32.mrf.mxu0
          %3120 = vdwg.mxu0
          %3121 = vmatprep.subr.bf16.mxu0 0
          %3122 = vmatpush1.bf16.msra.mxu0 %v3040
          %3123 = vmatprep.subr.bf16.mxu0 0
          %3124 = vmatpush1.bf16.msra.mxu0 %v3039
          %3125 = vmatprep.subr.bf16.mxu0 0
          %3126 = vmatpush1.bf16.msra.mxu0 %v3038
          %3127 = vmatprep.subr.bf16.mxu0 0
          %3128 = vmatpush1.bf16.msra.mxu0 %v3037
          %3129 = vmatprep.subr.bf16.mxu0 0
          %3130 = vmatpush1.bf16.msra.mxu0 %v3036
          %3131 = vmatprep.subr.bf16.mxu0 0
          %3132 = vmatpush1.bf16.msra.mxu0 %v3035
          %3133 = vmatprep.subr.bf16.mxu0 0
          %3134 = vmatpush1.bf16.msra.mxu0 %v3034
          %3135 = vmatprep.subr.bf16.mxu0 0
          %3136 = vmatpush1.bf16.msra.mxu0 %v3033
          %3137 = vmatprep.subr.bf16.mxu0 0
          %3138 = vmatpush2.bf16.msra.mxu0 %v3048
          %3139 = vmatprep.subr.bf16.mxu0 0
          %3140 = vmatpush2.bf16.msra.mxu0 %v3047
          %3141 = vmatprep.subr.bf16.mxu0 0
          %3142 = vmatpush2.bf16.msra.mxu0 %v3046
          %3143 = vmatprep.subr.bf16.mxu0 0
          %3144 = vmatpush2.bf16.msra.mxu0 %v3045
          %3145 = vmatprep.subr.bf16.mxu0 0
          %3146 = vmatpush2.bf16.msra.mxu0 %v3044
          %3147 = vmatprep.subr.bf16.mxu0 0
          %3148 = vmatpush2.bf16.msra.mxu0 %v3043
          %3149 = vmatprep.subr.bf16.mxu0 0
          %3150 = vmatpush2.bf16.msra.mxu0 %v3042
          %3151 = vmatprep.subr.bf16.mxu0 0
          %3152 = vmatpush2.bf16.msra.mxu0 %v3041
          %3153 = vmatprep.mubr.bf16.mxu0 %v2824
          %3154 = vmatmul.mubr.bf16.gmra.mxu0 %v2823
          %v3155 = vpop.f32.mrf.mxu0
          %v3156 = vadd.f32 %v3116, %v3155
          %v3157 = vpop.f32.mrf.mxu0
          %v3158 = vpop.f32.mrf.mxu0
          %v3159 = vpop.f32.mrf.mxu0
          %3160 = vdwg.mxu0
          %v3161 = vadd.f32 %v2664, %v3156
          %v3162 = vld [vmem:[%s9 + $0x9] sm:$0x1]
          %v3163 = vlaneseq
          %v3164 = vshrl.u32 %v3163, 7
          %v3165 = vsub.s32 0, %v3164
          %v3166 = vrot.slane %v3162, %v3165
          %v3167 = vadd.f32 %v3161, %v3166
          %v3168 = vadd.f32 %v1171, %v3167
          %v3169 = vld [vmem:[%s9 + $0x7] sm:$0x1]
          %v3170 = vld [vmem:[%s9 + $0x8] sm:$0x1]
          %v3171 = vsel %vm583, %v3168, 0.0
          %3172 = vadd.xlane.f32.xlu0 %v3171
          %v3173 = vpop.xlane.xlu0 %3172
          %v3174 = vmul.f32 %v3173, %v818
          %v3175 = vsub.f32 %v3168, %v3174
          %v3176 = vmul.f32 %v3175, %v3175
          %v3177 = vsel %vm583, %v3176, 0.0
          %3178 = vadd.xlane.f32.xlu0 %v3177
          %v3179 = vpop.xlane.xlu0 %3178
          %v3180 = vmul.f32 %v3179, %v818
          %v3181 = vadd.f32 %v3180, 1e-05
          %v3182 = vrsqrt.pop %v3181
          %v3183 = vmul.f32 %v3175, %v3182
          %v3184 = vlaneseq
          %v3185 = vshrl.u32 %v3184, 7
          %v3186 = vsub.s32 0, %v3185
          %v3187 = vrot.slane %v3169, %v3186
          %v3188 = vmul.f32 %v3183, %v3187
          %v3189 = vlaneseq
          %v3190 = vshrl.u32 %v3189, 7
          %v3191 = vsub.s32 0, %v3190
          %v3192 = vrot.slane %v3170, %v3191
          %v3193 = vadd.f32 %v3188, %v3192
          %v3194 = vpack.c.bf16 %v3193, %v3193
          %vm3195 = vcmask 257024
          %3196 = vst.msk [vmem:[#allocation2] sm:$0xf] %vm3195, %v3194
        $region84: #{tpu_custom_call.1} parent=79 // pred_fallthru
          _
        %v3197 = vld [vmem:[#allocation2] sm:$0xf]
        %v3198 = vld [vmem:[%s548] sm:$0xf]
        %v3199 = vld [vmem:[%s548 + $0x4] sm:$0xf]
        %v3200 = vld [vmem:[%s548 + $0x8] sm:$0xf]
        %v3201 = vld [vmem:[%s548 + $0xc] sm:$0xf]
        %v3202 = vld [vmem:[%s551] sm:$0x1]
        %v3204 = vlaneseq
        %v3205 = vshrl.u32 %v3204, 7
        %v3206 = vsub.s32 0, %v3205
        %v3207 = vrot.slane %v3202, %v3206
        %v3213 = vunpack.c.l.b16 %v3198
        %v3214 = vunpack.c.l.b16 %v3199
        %v3215 = vunpack.c.l.b16 %v3200
        %v3216 = vunpack.c.l.b16 %v3201
        %v3217 = vpack.c.b16 %v3214, %v3213
        %v3218 = vpack.c.b16 %v3216, %v3215
        %vm3221 = vcmask 261120
        %v3223 = vsel %vm3221, %v3197, 0
        %3225 = vmatprep.subr.bf16.mxu0 0
        %3226 = vmatpush1.bf16.msra.mxu0 0
        %3227 = vmatprep.subr.bf16.mxu0 0
        %3228 = vmatpush1.bf16.msra.mxu0 0
        %3229 = vmatprep.subr.bf16.mxu0 0
        %3230 = vmatpush1.bf16.msra.mxu0 0
        %3231 = vmatprep.subr.bf16.mxu0 0
        %3232 = vmatpush1.bf16.msra.mxu0 0
        %3233 = vmatprep.subr.bf16.mxu0 0
        %3234 = vmatpush1.bf16.msra.mxu0 0
        %3235 = vmatprep.subr.bf16.mxu0 0
        %3236 = vmatpush1.bf16.msra.mxu0 0
        %3237 = vmatprep.subr.bf16.mxu0 0
        %3238 = vmatpush1.bf16.msra.mxu0 %v3218
        %3239 = vmatprep.subr.bf16.mxu0 0
        %3240 = vmatpush1.bf16.msra.mxu0 %v3217
        %3241 = vmatprep.subr.bf16.mxu0 0
        %3242 = vmatpush2.bf16.msra.mxu0 0
        %3243 = vmatprep.subr.bf16.mxu0 0
        %3244 = vmatpush2.bf16.msra.mxu0 0
        %3245 = vmatprep.subr.bf16.mxu0 0
        %3246 = vmatpush2.bf16.msra.mxu0 0
        %3247 = vmatprep.subr.bf16.mxu0 0
        %3248 = vmatpush2.bf16.msra.mxu0 0
        %3249 = vmatprep.subr.bf16.mxu0 0
        %3250 = vmatpush2.bf16.msra.mxu0 0
        %3251 = vmatprep.subr.bf16.mxu0 0
        %3252 = vmatpush2.bf16.msra.mxu0 0
        %3253 = vmatprep.subr.bf16.mxu0 0
        %3254 = vmatpush2.bf16.msra.mxu0 0
        %3255 = vmatprep.subr.bf16.mxu0 0
        %3256 = vmatpush2.bf16.msra.mxu0 0
        %3257 = vmatprep.mubr.bf16.mxu0 0
        %3258 = vmatmul.mubr.bf16.gmra.mxu0 %v3223
        %v3259 = vpop.f32.mrf.mxu0
        %v3260 = vadd.f32 %v3207, %v3259
        %v3261 = vpop.f32.mrf.mxu0
        %v3262 = vpop.f32.mrf.mxu0
        %v3263 = vpop.f32.mrf.mxu0
        %3264 = vdwg.mxu0
        %3265 = vst [vmem:[%s536] sm:$0xff] %v3260
        %s3266 = sand.u32 %s386, 1
        %s3267 = scalar_lea.sflag [#allocation4], %s3266
        %s3268 = sand.u32 %s386, 1
        %s3269 = smul.addr %s3268, 8
        %s3270 = scalar_lea.vmem [#allocation3], %s3269
        // Predicated region
        $region85: #{tpu_custom_call.1} parent=79 // pred_check
          %p3271 = pneg %p396
        $region86: #{tpu_custom_call.1} parent=79 // pred_check_branch
          %3273 = sbr.rel (%p3271) target = $region88
        $region87: #{tpu_custom_call.1} parent=79 // pred_region
          %s3275 = ssub.s32 128, 128
          %3276 = vsyncadd %s3267, %s3275
          %s3277 = sadd.s32 %s34, %s33
          %s3278 = smul.addr %s3277, 128
          %s3279 = scalar_lea.hbm %s15, %s3278
          %s3281 = sshll.u32 %s3270, 4
          %s3282 = int_to_ptr.vmem [resolvable:$true] %s3281
          %3284 = dma.vmem_to_hbm [thread:$0]  %s3282, 128, %s3279, %s3267
        $region88: #{tpu_custom_call.1} parent=79 // pred_fallthru
          _
      $region80: #{tpu_custom_call.1} parent=5 // pred_fallthru
        _
      %p3285 = scmp.le.s32.totalorder 2, %s24
      // Predicated region
      $region89: #{tpu_custom_call.1} parent=5 // pred_check
        %p3286 = pneg %p3285
      $region90: #{tpu_custom_call.1} parent=5 // pred_check_branch
        %3288 = sbr.rel (%p3286) target = $region92
      $region91: #{tpu_custom_call.1} parent=5 // pred_region
        %s3289 = ssub.s32 %s24, 2
        // Predicated region
        $region93: #{tpu_custom_call.1} parent=91 // pred_check
          %p3290 = pneg %p402
        $region94: #{tpu_custom_call.1} parent=91 // pred_check_branch
          %3292 = sbr.rel (%p3290) target = $region96
        $region95: #{tpu_custom_call.1} parent=91 // pred_region
          %s3293 = sand.u32 %s387, 1
          %s3294 = scalar_lea.sflag [#allocation4], %s3293
          %s3295 = sand.u32 %s387, 1
          %s3296 = smul.addr %s3295, 8
          %s3297 = scalar_lea.vmem [#allocation3], %s3296
          %3298 = dma.done %s3294, 128
        $region96: #{tpu_custom_call.1} parent=91 // pred_fallthru
          _
      $region92: #{tpu_custom_call.1} parent=5 // pred_fallthru
        _
    $region6: #{tpu_custom_call.1} parent=1 // loop_footer
      %s28 = sadd.s32 1, %s24
    $region7: #{tpu_custom_call.1} parent=1 // loop_footer_branch
      %23 = sbr.rel target = $region3
    $region8: #{tpu_custom_call.1} parent=1 // loop_exit
      _
    %3299 = vsyncpa [#allocation4], 1
    %s3300 = scalar_lea.sflag [#allocation4], 1
    %3301 = vsyncpa %s3300, 1

</llo_original>
